<compile_context>
chip_gen: v7x
topology: tpu7x:2x2x1
jax: 0.10.0
libtpu: 0.0.40
codegen_flags: <defaults>
</compile_context>

<pallas_src>
import math

import numpy as np
import jax
import jax.numpy as jnp
from jax.experimental import pallas as pl
from jax.experimental.pallas import tpu as pltpu

# ----------------------------- hyper-parameters ------------------------------
FUTURE_LENGTH = 8                       # T (fixed by the module)
CONTEXT_DIM = 16                        # context_dim
TF_LAYERS = 2                           # tf_layer
NHEAD = 4
BA = 4                                  # agents per scene (= attention tokens)
D_MODEL2 = 2 * CONTEXT_DIM              # 32  (concat1 output / pos-emb d_model)
D_TRANS = D_MODEL2 * FUTURE_LENGTH      # 256 (transformer d_model)
HEAD_DIM = D_TRANS // NHEAD             # 64
D_FF = 4 * CONTEXT_DIM                  # 64  (dim_feedforward)
D_CTX = CONTEXT_DIM + 3                 # 19  (ctx_emb feature size)
LN_EPS = 1e-5

# scene batching: SCENES_PER_BLOCK scenes (4 agents each) per grid step
SCENES_PER_BLOCK = 8
M_BLOCK = SCENES_PER_BLOCK * BA         # 32 rows / grid step
NM = NHEAD * M_BLOCK                    # 128 packed score columns (1 lane vreg)
LOG2_M = int(math.log2(M_BLOCK))        # 5
LOG2_BA = int(math.log2(BA))            # 2
LOG2_HD = int(math.log2(HEAD_DIM))      # 6

# widths of the 4 ConcatSquashLinear stages in time-flattened ("wide") form
CS_WIDTHS = (FUTURE_LENGTH * D_MODEL2,            # concat1: 256
             FUTURE_LENGTH * CONTEXT_DIM,         # concat3: 128
             FUTURE_LENGTH * (CONTEXT_DIM // 2),  # concat4: 64
             FUTURE_LENGTH * 2)                   # linear : 16
HYP_W = 2 * sum(CS_WIDTHS)              # 928 (gate|bias per stage)
LVEC_W = 3 * D_TRANS                    # 768 (widest per-layer vector: b_in)


# ------------------------------ the fused kernel ------------------------------
def fused_forward_kernel(ctx_ref, xw_ref, gvec_ref, whyp_ref,
                         w1k_ref, w3k_ref, w4k_ref, w5k_ref,
                         win_ref, wo_ref, wf1_ref, wf2_ref, lvec_ref,
                         o_ref):
    f32, bf16 = jnp.float32, jnp.bfloat16

    def mm(a, b):
        # bf16 operands, f32 accumulation (single-pass MXU everywhere).
        return jnp.dot(a.astype(bf16), b.astype(bf16),
                       preferred_element_type=f32)

    ctx = ctx_ref[...]                    # (M, 19)  f32
    xw = xw_ref[...]                      # (M, 16)  f32

    # packed global bias vectors (one DMA instead of six)
    gv = gvec_ref[...]                    # (8, HYP_W) f32
    bl1 = gv[0:1, :CS_WIDTHS[0]]
    bhyp = gv[1:2, :HYP_W]
    bl3 = gv[2:3, :CS_WIDTHS[1]]
    bl4 = gv[3:4, :CS_WIDTHS[2]]
    bl5 = gv[4:5, :CS_WIDTHS[3]]
    pe = gv[5:6, :D_TRANS]

    # ---- hoisted ConcatSquash hyper-nets: one matmul for all four stages ----
    hyp = mm(ctx, whyp_ref[...]) + bhyp   # (M, 928)
    gates, hbiases = [], []
    off = 0
    for w in CS_WIDTHS:
        gates.append(jax.nn.sigmoid(hyp[:, off:off + w]))
        hbiases.append(hyp[:, off + w:off + 2 * w])
        off += 2 * w
    g1, g3, g4, g5 = gates
    hb1, hb3, hb4, hb5 = hbiases

    # ---- concat1 + positional encoding, lane-dense (M, T*2C) ----
    h = (mm(xw, w1k_ref[...]) + bl1) * g1 + hb1 + pe

    # ---- attention constants built in-kernel (no HBM inputs, loop-invariant) ----
    r_nm = jax.lax.broadcasted_iota(jnp.int32, (NM, D_TRANS), 0)
    c_d = jax.lax.broadcasted_iota(jnp.int32, (NM, D_TRANS), 1)
    mhd = jnp.where((r_nm >> LOG2_M) == (c_d >> LOG2_HD), 1.0, 0.0)   # head mask
    rr = jax.lax.broadcasted_iota(jnp.int32, (NM, NM), 0)
    cc = jax.lax.broadcasted_iota(jnp.int32, (NM, NM), 1)
    mgs_bf = jnp.where((rr >> LOG2_M) == (cc >> LOG2_M),
                       1.0, 0.0).astype(bf16)                          # head group-sum
    qr = jax.lax.broadcasted_iota(jnp.int32, (M_BLOCK, NM), 0)
    qc = jax.lax.broadcasted_iota(jnp.int32, (M_BLOCK, NM), 1)
    same_scene = (qr >> LOG2_BA) == ((qc & (M_BLOCK - 1)) >> LOG2_BA)
    scene_neg = jnp.where(same_scene, 0.0, -1e9)                       # block-diag
    scale = 1.0 / math.sqrt(HEAD_DIM)

    def layer_norm(xv, w, b):
        # one-pass stats: E[x] and E[x^2] issued from the same input
        s1 = jnp.mean(xv, axis=-1, keepdims=True)
        s2 = jnp.mean(xv * xv, axis=-1, keepdims=True)
        inv = jax.lax.rsqrt(s2 - s1 * s1 + LN_EPS)
        return (xv - s1) * inv * w + b

    # ---- transformer encoder (post-norm), heads packed along lanes ----
    for l in range(TF_LAYERS):
        lv = lvec_ref[l]                  # (8, 768) f32, packed per-layer vectors
        b_in = lv[0:1, :]
        b_o = lv[1:2, :D_TRANS]
        ln1w, ln1b = lv[2:3, :D_TRANS], lv[3:4, :D_TRANS]
        b_f1 = lv[4:5, :D_FF]
        b_f2 = lv[5:6, :D_TRANS]
        ln2w, ln2b = lv[6:7, :D_TRANS], lv[7:8, :D_TRANS]

        qkv = mm(h, win_ref[l]) + b_in    # (M, 3*D_TRANS)
        q = qkv[:, :D_TRANS]
        k = qkv[:, D_TRANS:2 * D_TRANS]
        v = qkv[:, 2 * D_TRANS:]

        # sublane-replicate K/V per head (copy path, off the MXU critical
        # chain) and zero everything outside the head's 64-lane block.
        ks = jnp.concatenate([k] * NHEAD, axis=0) * mhd     # (NM, D_TRANS)
        vs = jnp.concatenate([v] * NHEAD, axis=0) * mhd

        # all heads' + all scenes' scores in one lane-dense matmul q @ ks^T
        s = jax.lax.dot_general(q.astype(bf16), ks.astype(bf16),
                                (((1,), (1,)), ((), ())),
                                preferred_element_type=f32) * scale + scene_neg
        m = jnp.max(s, axis=-1, keepdims=True)   # row-wide shift (constant per
        e = jnp.exp(s - m)                       #  head group, hence exact)
        denom = jnp.dot(e.astype(bf16), mgs_bf, preferred_element_type=f32)
        # clamp: a fully-underflowed head group yields 0 output, never NaN/Inf
        a = e * pl.reciprocal(jnp.maximum(denom, 1e-30), approx=True)
        attn = jnp.dot(a.astype(bf16), vs.astype(bf16),
                       preferred_element_type=f32)           # (M, D_TRANS)
        attn = mm(attn, wo_ref[l]) + b_o

        h1 = layer_norm(h + attn, ln1w, ln1b)
        ff = jnp.maximum(mm(h1, wf1_ref[l]) + b_f1, 0.0)
        ff = mm(ff, wf2_ref[l]) + b_f2
        h = layer_norm(h1 + ff, ln2w, ln2b)

    # ---- decoder: concat3 -> concat4 -> linear (block-diagonal weights) ----
    h = (mm(h, w3k_ref[...]) + bl3) * g3 + hb3    # (M, T*C)
    h = (mm(h, w4k_ref[...]) + bl4) * g4 + hb4    # (M, T*C/2)
    o_ref[...] = (mm(h, w5k_ref[...]) + bl5) * g5 + hb5   # (M, T*2)


# ------------------------------ model wrapper --------------------------------
def model_forward(x, context, beta, kp):
    # TODO(synk): mlp1/mlp2 of the original module use an MLP class that is not
    # defined in the provided spec; they are treated as identity here.
    NS, nba, T, _ = x.shape
    assert nba == BA and T == FUTURE_LENGTH
    assert NS % SCENES_PER_BLOCK == 0
    N = NS * BA
    beta_ = beta.reshape(N, 1)
    ctx_emb = jnp.concatenate(
        [beta_, jnp.sin(beta_), jnp.cos(beta_), context.reshape(N, -1)],
        axis=-1).astype(jnp.float32)                     # (N, 19)
    xw = x.reshape(N, T * 2).astype(jnp.float32)         # (N, 16), lane-dense

    n_blocks = NS // SCENES_PER_BLOCK

    def act_spec(w):
        return pl.BlockSpec((M_BLOCK, w), lambda i: (i, 0))

    def const2(a):
        return pl.BlockSpec(a.shape, lambda i: (0, 0))

    def const3(a):
        return pl.BlockSpec(a.shape, lambda i: (0, 0, 0))

    args = (ctx_emb, xw, kp["gvec"], kp["whyp"], kp["w1k"], kp["w3k"],
            kp["w4k"], kp["w5k"], kp["win"], kp["wo"], kp["wf1"], kp["wf2"],
            kp["lvec"])
    in_specs = [act_spec(D_CTX), act_spec(T * 2),
                const2(kp["gvec"]), const2(kp["whyp"]), const2(kp["w1k"]),
                const2(kp["w3k"]), const2(kp["w4k"]), const2(kp["w5k"]),
                const3(kp["win"]), const3(kp["wo"]), const3(kp["wf1"]),
                const3(kp["wf2"]), const3(kp["lvec"])]

    out = pl.pallas_call(
        fused_forward_kernel,
        out_shape=jax.ShapeDtypeStruct((N, T * 2), jnp.float32),
        grid=(n_blocks,),
        in_specs=in_specs,
        out_specs=pl.BlockSpec((M_BLOCK, T * 2), lambda i: (i, 0)),
        compiler_params=pltpu.CompilerParams(
            dimension_semantics=("parallel",)),     # v7x: shard across 2 TCs
    )(*args)
    return out.reshape(NS, BA, T, 2)


# ----------------------------- parameter setup -------------------------------
def positional_encoding(max_len, d_model):
    pos = np.arange(max_len, dtype=np.float32)[:, None]
    div = np.exp(np.arange(0, d_model, 2, dtype=np.float32)
                 * (-np.log(10000.0) / d_model))
    pe = np.zeros((max_len, d_model), dtype=np.float32)
    pe[:, 0::2] = np.sin(pos * div)
    pe[:, 1::2] = np.cos(pos * div)
    return jnp.asarray(pe)


def init_params(key):
    keys = iter(jax.random.split(key, 64))

    def w(shape, scale=0.05):
        return scale * jax.random.normal(next(keys), shape, dtype=jnp.float32)

    def cs_params(din, dout):
        # weights stored pre-transposed: (in, out)
        return dict(wl_t=w((din, dout)), bl=w((1, dout), 0.02),
                    wg_t=w((D_CTX, dout)), bg=w((1, dout), 0.02),
                    wb_t=w((D_CTX, dout)))

    params = dict(
        concat1=cs_params(2, D_MODEL2),
        concat3=cs_params(D_MODEL2, CONTEXT_DIM),
        concat4=cs_params(CONTEXT_DIM, CONTEXT_DIM // 2),
        linear=cs_params(CONTEXT_DIM // 2, 2),
        pe=positional_encoding(24, D_MODEL2),
    )
    layers = []
    for _ in range(TF_LAYERS):
        layers.append(dict(
            w_in_t=w((D_TRANS, 3 * D_TRANS)), b_in=w((1, 3 * D_TRANS), 0.02),
            wo_t=w((D_TRANS, D_TRANS)), bo=w((1, D_TRANS), 0.02),
            ln1_w=jnp.ones((1, D_TRANS), jnp.float32),
            ln1_b=jnp.zeros((1, D_TRANS), jnp.float32),
            w1_t=w((D_TRANS, D_FF)), b1=w((1, D_FF), 0.02),
            w2_t=w((D_FF, D_TRANS)), b2=w((1, D_TRANS), 0.02),
            ln2_w=jnp.ones((1, D_TRANS), jnp.float32),
            ln2_b=jnp.zeros((1, D_TRANS), jnp.float32),
        ))
    params["tf_layers"] = layers
    return params


def prepare_kernel_params(params):
    """Pure layout plumbing (done once): kron/tiled weights, packed vectors."""
    T = FUTURE_LENGTH
    eye_t = jnp.eye(T, dtype=jnp.float32)

    def kron_linear(p):
        # per-time-step Linear folded into a block-diagonal (T*din, T*dout)
        return jnp.kron(eye_t, p["wl_t"]), jnp.tile(p["bl"], (1, T))

    w1k, bl1w = kron_linear(params["concat1"])
    w3k, bl3w = kron_linear(params["concat3"])
    w4k, bl4w = kron_linear(params["concat4"])
    w5k, bl5w = kron_linear(params["linear"])

    # one combined hyper-net matrix: [gate | bias] per stage, time-tiled
    whyp_cols, bhyp_cols = [], []
    for p in (params["concat1"], params["concat3"], params["concat4"],
              params["linear"]):
        wg = jnp.tile(p["wg_t"], (1, T))
        bg = jnp.tile(p["bg"], (1, T))
        wb = jnp.tile(p["wb_t"], (1, T))
        whyp_cols += [wg, wb]
        bhyp_cols += [bg, jnp.zeros_like(bg)]
    whyp = jnp.concatenate(whyp_cols, axis=1)          # (D_CTX, 928)
    bhyp = jnp.concatenate(bhyp_cols, axis=1)          # (1, 928)

    pe_w = params["pe"][:T].reshape(1, T * D_MODEL2)   # (1, 256)

    # packed global bias slab (8, HYP_W): one DMA, no 8-sublane padding waste
    gvec = np.zeros((8, HYP_W), np.float32)
    gvec[0, :CS_WIDTHS[0]] = np.asarray(bl1w)[0]
    gvec[1, :HYP_W] = np.asarray(bhyp)[0]
    gvec[2, :CS_WIDTHS[1]] = np.asarray(bl3w)[0]
    gvec[3, :CS_WIDTHS[2]] = np.asarray(bl4w)[0]
    gvec[4, :CS_WIDTHS[3]] = np.asarray(bl5w)[0]
    gvec[5, :D_TRANS] = np.asarray(pe_w)[0]

    # packed per-layer bias/LN slab (TF_LAYERS, 8, 768)
    lvec = np.zeros((TF_LAYERS, 8, LVEC_W), np.float32)
    for l, p in enumerate(params["tf_layers"]):
        lvec[l, 0, :3 * D_TRANS] = np.asarray(p["b_in"])[0]
        lvec[l, 1, :D_TRANS] = np.asarray(p["bo"])[0]
        lvec[l, 2, :D_TRANS] = np.asarray(p["ln1_w"])[0]
        lvec[l, 3, :D_TRANS] = np.asarray(p["ln1_b"])[0]
        lvec[l, 4, :D_FF] = np.asarray(p["b1"])[0]
        lvec[l, 5, :D_TRANS] = np.asarray(p["b2"])[0]
        lvec[l, 6, :D_TRANS] = np.asarray(p["ln2_w"])[0]
        lvec[l, 7, :D_TRANS] = np.asarray(p["ln2_b"])[0]

    bf = lambda a: a.astype(jnp.bfloat16)
    stack = lambda name: jnp.stack([lp[name] for lp in params["tf_layers"]])
    return dict(
        gvec=jnp.asarray(gvec), lvec=jnp.asarray(lvec),
        whyp=bf(whyp), w1k=bf(w1k), w3k=bf(w3k), w4k=bf(w4k), w5k=bf(w5k),
        win=bf(stack("w_in_t")), wo=bf(stack("wo_t")),
        wf1=bf(stack("w1_t")), wf2=bf(stack("w2_t")))


# ------------------------- pure-JAX reference (checking) ---------------------
def ref_forward(x, context, beta, params):
    def scene_fwd(xs, cs, bs):
        Bn, T, _ = xs.shape
        beta_ = bs.reshape(Bn, 1, 1)
        ctx = cs.reshape(Bn, 1, -1)
        time_emb = jnp.concatenate([beta_, jnp.sin(beta_), jnp.cos(beta_)],
                                   axis=-1)
        ctx_emb = jnp.concatenate([time_emb, ctx], axis=-1)

        def cs_layer(p, c, h):
            gate = jax.nn.sigmoid(c @ p["wg_t"] + p["bg"])
            bias = c @ p["wb_t"]
            return (h @ p["wl_t"] + p["bl"]) * gate + bias

        def ln(xv, w, b):
            mu = jnp.mean(xv, axis=-1, keepdims=True)
            var = jnp.mean((xv - mu) ** 2, axis=-1, keepdims=True)
            return (xv - mu) * jax.lax.rsqrt(var + LN_EPS) * w + b

        h = cs_layer(params["concat1"], ctx_emb, xs)                      # (B,T,2C)
        fe = jnp.transpose(h, (1, 0, 2)) + params["pe"][:T][:, None, :]   # (T,B,2C)
        hcur = jnp.transpose(fe, (1, 0, 2)).reshape(Bn, T * D_MODEL2)     # (B,D)

        for p in params["tf_layers"]:
            qkv = hcur @ p["w_in_t"] + p["b_in"]
            q = qkv[:, :D_TRANS]
            k = qkv[:, D_TRANS:2 * D_TRANS]
            v = qkv[:, 2 * D_TRANS:]
            qh = q.reshape(Bn, NHEAD, HEAD_DIM)
            kh = k.reshape(Bn, NHEAD, HEAD_DIM)
            vh = v.reshape(Bn, NHEAD, HEAD_DIM)
            s = jnp.einsum("qhd,khd->hqk", qh, kh) / math.sqrt(HEAD_DIM)
            a = jax.nn.softmax(s, axis=-1)
            o = jnp.einsum("hqk,khd->qhd", a, vh).reshape(Bn, D_TRANS)
            attn = o @ p["wo_t"] + p["bo"]
            h1 = ln(hcur + attn, p["ln1_w"], p["ln1_b"])
            ff = jax.nn.relu(h1 @ p["w1_t"] + p["b1"]) @ p["w2_t"] + p["b2"]
            hcur = ln(h1 + ff, p["ln2_w"], p["ln2_b"])

        trans = hcur.reshape(Bn, T, D_MODEL2)
        trans = cs_layer(params["concat3"], ctx_emb, trans)
        trans = cs_layer(params["concat4"], ctx_emb, trans)
        return cs_layer(params["linear"], ctx_emb, trans)

    return jax.vmap(scene_fwd)(x, context, beta)


# ------------------------------------ main ------------------------------------
if __name__ == "__main__":
    key = jax.random.PRNGKey(0)
    k0, kx, kc, kb = jax.random.split(key, 4)
    params = init_params(k0)
    kparams = prepare_kernel_params(params)

    NS = 32                     # scenes (4 agents each) -> 4 grid blocks of 32 rows
    x = jax.random.normal(kx, (NS, BA, FUTURE_LENGTH, 2), dtype=jnp.float32)
    context = jax.random.normal(kc, (NS, BA, CONTEXT_DIM), dtype=jnp.float32)
    beta = jax.random.uniform(kb, (NS, BA), dtype=jnp.float32,
                              minval=0.01, maxval=0.99)

    fwd = jax.jit(model_forward)
    out = jax.block_until_ready(fwd(x, context, beta, kparams))

    # reference in full f32 ("highest" scoped locally, not process-globally)
    with jax.default_matmul_precision("highest"):
        ref = jax.block_until_ready(ref_forward(x, context, beta, params))

    assert out.shape == (NS, BA, FUTURE_LENGTH, 2), out.shape
    max_diff = float(jnp.max(jnp.abs(out - ref)))
    if not bool(jnp.allclose(out, ref, atol=5e-2, rtol=5e-2)):
        raise AssertionError(f"mismatch vs reference, max abs diff={max_diff}")
    print("KERNEL_OK")
</pallas_src>

<mosaic_0001>
module attributes {stable_mosaic.version = 11 : i64} {
  func.func @fused_forward_kernel(%arg0: i32, %arg1: memref<32x19xf32, #tpu.memory_space<vmem>>, %arg2: memref<32x16xf32, #tpu.memory_space<vmem>>, %arg3: memref<8x928xf32, #tpu.memory_space<vmem>>, %arg4: memref<19x928xbf16, #tpu.memory_space<vmem>>, %arg5: memref<16x256xbf16, #tpu.memory_space<vmem>>, %arg6: memref<256x128xbf16, #tpu.memory_space<vmem>>, %arg7: memref<128x64xbf16, #tpu.memory_space<vmem>>, %arg8: memref<64x16xbf16, #tpu.memory_space<vmem>>, %arg9: memref<2x256x768xbf16, #tpu.memory_space<vmem>>, %arg10: memref<2x256x256xbf16, #tpu.memory_space<vmem>>, %arg11: memref<2x256x64xbf16, #tpu.memory_space<vmem>>, %arg12: memref<2x64x256xbf16, #tpu.memory_space<vmem>>, %arg13: memref<2x8x768xf32, #tpu.memory_space<vmem>>, %arg14: memref<32x16xf32, #tpu.memory_space<vmem>>) attributes {dimension_semantics = [#tpu.dimension_semantics<parallel>], iteration_bounds = array<i64: 4>, scalar_prefetch = 0 : i64, scratch_operands = 0 : i64, tpu.core_type = #tpu.core_type<tc>, window_params = [{transform_indices = @transform_0, window_bounds = array<i64: 32, 19>}, {transform_indices = @transform_1, window_bounds = array<i64: 32, 16>}, {pipeline_mode = #tpu.pipeline_mode<synchronous>, transform_indices = @transform_2, window_bounds = array<i64: 8, 928>}, {pipeline_mode = #tpu.pipeline_mode<synchronous>, transform_indices = @transform_3, window_bounds = array<i64: 19, 928>}, {pipeline_mode = #tpu.pipeline_mode<synchronous>, transform_indices = @transform_4, window_bounds = array<i64: 16, 256>}, {pipeline_mode = #tpu.pipeline_mode<synchronous>, transform_indices = @transform_5, window_bounds = array<i64: 256, 128>}, {pipeline_mode = #tpu.pipeline_mode<synchronous>, transform_indices = @transform_6, window_bounds = array<i64: 128, 64>}, {pipeline_mode = #tpu.pipeline_mode<synchronous>, transform_indices = @transform_7, window_bounds = array<i64: 64, 16>}, {pipeline_mode = #tpu.pipeline_mode<synchronous>, transform_indices = @transform_8, window_bounds = array<i64: 2, 256, 768>}, {pipeline_mode = #tpu.pipeline_mode<synchronous>, transform_indices = @transform_9, window_bounds = array<i64: 2, 256, 256>}, {pipeline_mode = #tpu.pipeline_mode<synchronous>, transform_indices = @transform_10, window_bounds = array<i64: 2, 256, 64>}, {pipeline_mode = #tpu.pipeline_mode<synchronous>, transform_indices = @transform_11, window_bounds = array<i64: 2, 64, 256>}, {pipeline_mode = #tpu.pipeline_mode<synchronous>, transform_indices = @transform_12, window_bounds = array<i64: 2, 8, 768>}, {transform_indices = @transform_13, window_bounds = array<i64: 32, 16>}]} {
    %c0 = arith.constant 0 : index
    %c0_0 = arith.constant 0 : index
    %0 = vector.load %arg1[%c0, %c0_0] : memref<32x19xf32, #tpu.memory_space<vmem>>, vector<32x19xf32>
    %c0_1 = arith.constant 0 : index
    %c0_2 = arith.constant 0 : index
    %1 = vector.load %arg2[%c0_1, %c0_2] : memref<32x16xf32, #tpu.memory_space<vmem>>, vector<32x16xf32>
    %c0_3 = arith.constant 0 : index
    %c0_4 = arith.constant 0 : index
    %2 = vector.load %arg3[%c0_3, %c0_4] : memref<8x928xf32, #tpu.memory_space<vmem>>, vector<8x928xf32>
    %3 = vector.extract_strided_slice %2 {offsets = [0, 0], sizes = [1, 256], strides = [1, 1]} : vector<8x928xf32> to vector<1x256xf32>
    %4 = vector.extract_strided_slice %2 {offsets = [1, 0], sizes = [1, 928], strides = [1, 1]} : vector<8x928xf32> to vector<1x928xf32>
    %5 = vector.extract_strided_slice %2 {offsets = [2, 0], sizes = [1, 128], strides = [1, 1]} : vector<8x928xf32> to vector<1x128xf32>
    %6 = vector.extract_strided_slice %2 {offsets = [3, 0], sizes = [1, 64], strides = [1, 1]} : vector<8x928xf32> to vector<1x64xf32>
    %7 = vector.extract_strided_slice %2 {offsets = [4, 0], sizes = [1, 16], strides = [1, 1]} : vector<8x928xf32> to vector<1x16xf32>
    %8 = vector.extract_strided_slice %2 {offsets = [5, 0], sizes = [1, 256], strides = [1, 1]} : vector<8x928xf32> to vector<1x256xf32>
    %c0_5 = arith.constant 0 : index
    %c0_6 = arith.constant 0 : index
    %9 = vector.load %arg4[%c0_5, %c0_6] : memref<19x928xbf16, #tpu.memory_space<vmem>>, vector<19x928xbf16>
    %10 = arith.truncf %0 : vector<32x19xf32> to vector<32x19xbf16>
    %cst = arith.constant dense<0.000000e+00> : vector<32x928xf32>
    %11 = tpu.matmul %10, %9, %cst {dimension_numbers = #tpu.dot_dimension_numbers<[1], [0], [0], [1], [0, 0, 1, 1], [], []>} : vector<32x19xbf16>, vector<19x928xbf16>, vector<32x928xf32> -> vector<32x928xf32>
    %12 = vector.broadcast %4 : vector<1x928xf32> to vector<32x928xf32>
    %13 = arith.addf %11, %12 : vector<32x928xf32>
    %14 = vector.extract_strided_slice %13 {offsets = [0, 0], sizes = [32, 256], strides = [1, 1]} : vector<32x928xf32> to vector<32x256xf32>
    %15 = arith.negf %14 : vector<32x256xf32>
    %16 = math.exp %15 : vector<32x256xf32>
    %cst_7 = arith.constant 1.000000e+00 : f32
    %17 = vector.broadcast %cst_7 : f32 to vector<32x256xf32>
    %18 = arith.addf %17, %16 : vector<32x256xf32>
    %19 = arith.divf %17, %18 : vector<32x256xf32>
    %20 = vector.extract_strided_slice %13 {offsets = [0, 256], sizes = [32, 256], strides = [1, 1]} : vector<32x928xf32> to vector<32x256xf32>
    %21 = vector.extract_strided_slice %13 {offsets = [0, 512], sizes = [32, 128], strides = [1, 1]} : vector<32x928xf32> to vector<32x128xf32>
    %22 = arith.negf %21 : vector<32x128xf32>
    %23 = math.exp %22 : vector<32x128xf32>
    %cst_8 = arith.constant 1.000000e+00 : f32
    %24 = vector.broadcast %cst_8 : f32 to vector<32x128xf32>
    %25 = arith.addf %24, %23 : vector<32x128xf32>
    %26 = arith.divf %24, %25 : vector<32x128xf32>
    %27 = vector.extract_strided_slice %13 {offsets = [0, 640], sizes = [32, 128], strides = [1, 1]} : vector<32x928xf32> to vector<32x128xf32>
    %28 = vector.extract_strided_slice %13 {offsets = [0, 768], sizes = [32, 64], strides = [1, 1]} : vector<32x928xf32> to vector<32x64xf32>
    %29 = arith.negf %28 : vector<32x64xf32>
    %30 = math.exp %29 : vector<32x64xf32>
    %cst_9 = arith.constant 1.000000e+00 : f32
    %31 = vector.broadcast %cst_9 : f32 to vector<32x64xf32>
    %32 = arith.addf %31, %30 : vector<32x64xf32>
    %33 = arith.divf %31, %32 : vector<32x64xf32>
    %34 = vector.extract_strided_slice %13 {offsets = [0, 832], sizes = [32, 64], strides = [1, 1]} : vector<32x928xf32> to vector<32x64xf32>
    %35 = vector.extract_strided_slice %13 {offsets = [0, 896], sizes = [32, 16], strides = [1, 1]} : vector<32x928xf32> to vector<32x16xf32>
    %36 = arith.negf %35 : vector<32x16xf32>
    %37 = math.exp %36 : vector<32x16xf32>
    %cst_10 = arith.constant 1.000000e+00 : f32
    %38 = vector.broadcast %cst_10 : f32 to vector<32x16xf32>
    %39 = arith.addf %38, %37 : vector<32x16xf32>
    %40 = arith.divf %38, %39 : vector<32x16xf32>
    %41 = vector.extract_strided_slice %13 {offsets = [0, 912], sizes = [32, 16], strides = [1, 1]} : vector<32x928xf32> to vector<32x16xf32>
    %c0_11 = arith.constant 0 : index
    %c0_12 = arith.constant 0 : index
    %42 = vector.load %arg5[%c0_11, %c0_12] : memref<16x256xbf16, #tpu.memory_space<vmem>>, vector<16x256xbf16>
    %43 = arith.truncf %1 : vector<32x16xf32> to vector<32x16xbf16>
    %cst_13 = arith.constant dense<0.000000e+00> : vector<32x256xf32>
    %44 = tpu.matmul %43, %42, %cst_13 {dimension_numbers = #tpu.dot_dimension_numbers<[1], [0], [0], [1], [0, 0, 1, 1], [], []>} : vector<32x16xbf16>, vector<16x256xbf16>, vector<32x256xf32> -> vector<32x256xf32>
    %45 = vector.broadcast %3 : vector<1x256xf32> to vector<32x256xf32>
    %46 = arith.addf %44, %45 : vector<32x256xf32>
    %47 = arith.mulf %46, %19 : vector<32x256xf32>
    %48 = arith.addf %47, %20 : vector<32x256xf32>
    %49 = vector.broadcast %8 : vector<1x256xf32> to vector<32x256xf32>
    %50 = arith.addf %48, %49 : vector<32x256xf32>
    %51 = tpu.iota {dimensions = array<i32: 0>} : vector<128x256xi32>
    %52 = tpu.iota {dimensions = array<i32: 1>} : vector<128x256xi32>
    %c5_i32 = arith.constant 5 : i32
    %53 = vector.broadcast %c5_i32 : i32 to vector<128x256xi32>
    %54 = arith.shrsi %51, %53 : vector<128x256xi32>
    %c6_i32 = arith.constant 6 : i32
    %55 = vector.broadcast %c6_i32 : i32 to vector<128x256xi32>
    %56 = arith.shrsi %52, %55 : vector<128x256xi32>
    %57 = arith.cmpi eq, %54, %56 : vector<128x256xi32>
    %cst_14 = arith.constant 1.000000e+00 : f32
    %cst_15 = arith.constant 0.000000e+00 : f32
    %58 = vector.broadcast %cst_14 : f32 to vector<128x256xf32>
    %59 = vector.broadcast %cst_15 : f32 to vector<128x256xf32>
    %60 = arith.select %57, %58, %59 : vector<128x256xi1>, vector<128x256xf32>
    %61 = tpu.iota {dimensions = array<i32: 0>} : vector<128x128xi32>
    %62 = tpu.iota {dimensions = array<i32: 1>} : vector<128x128xi32>
    %c5_i32_16 = arith.constant 5 : i32
    %63 = vector.broadcast %c5_i32_16 : i32 to vector<128x128xi32>
    %64 = arith.shrsi %61, %63 : vector<128x128xi32>
    %c5_i32_17 = arith.constant 5 : i32
    %65 = vector.broadcast %c5_i32_17 : i32 to vector<128x128xi32>
    %66 = arith.shrsi %62, %65 : vector<128x128xi32>
    %67 = arith.cmpi eq, %64, %66 : vector<128x128xi32>
    %cst_18 = arith.constant 1.000000e+00 : f32
    %cst_19 = arith.constant 0.000000e+00 : f32
    %68 = vector.broadcast %cst_18 : f32 to vector<128x128xf32>
    %69 = vector.broadcast %cst_19 : f32 to vector<128x128xf32>
    %70 = arith.select %67, %68, %69 : vector<128x128xi1>, vector<128x128xf32>
    %71 = arith.truncf %70 : vector<128x128xf32> to vector<128x128xbf16>
    %72 = tpu.iota {dimensions = array<i32: 0>} : vector<32x128xi32>
    %73 = tpu.iota {dimensions = array<i32: 1>} : vector<32x128xi32>
    %c2_i32 = arith.constant 2 : i32
    %74 = vector.broadcast %c2_i32 : i32 to vector<32x128xi32>
    %75 = arith.shrsi %72, %74 : vector<32x128xi32>
    %c31_i32 = arith.constant 31 : i32
    %76 = vector.broadcast %c31_i32 : i32 to vector<32x128xi32>
    %77 = arith.andi %73, %76 : vector<32x128xi32>
    %c2_i32_20 = arith.constant 2 : i32
    %78 = vector.broadcast %c2_i32_20 : i32 to vector<32x128xi32>
    %79 = arith.shrsi %77, %78 : vector<32x128xi32>
    %80 = arith.cmpi eq, %75, %79 : vector<32x128xi32>
    %cst_21 = arith.constant 0.000000e+00 : f32
    %cst_22 = arith.constant -1.000000e+09 : f32
    %81 = vector.broadcast %cst_21 : f32 to vector<32x128xf32>
    %82 = vector.broadcast %cst_22 : f32 to vector<32x128xf32>
    %83 = arith.select %80, %81, %82 : vector<32x128xi1>, vector<32x128xf32>
    %c0_23 = arith.constant 0 : index
    %c0_24 = arith.constant 0 : index
    %c0_25 = arith.constant 0 : index
    %84 = vector.load %arg13[%c0_23, %c0_24, %c0_25] : memref<2x8x768xf32, #tpu.memory_space<vmem>>, vector<1x8x768xf32>
    %85 = vector.shape_cast %84 : vector<1x8x768xf32> to vector<8x768xf32>
    %86 = vector.extract_strided_slice %85 {offsets = [0, 0], sizes = [1, 768], strides = [1, 1]} : vector<8x768xf32> to vector<1x768xf32>
    %87 = vector.extract_strided_slice %85 {offsets = [1, 0], sizes = [1, 256], strides = [1, 1]} : vector<8x768xf32> to vector<1x256xf32>
    %88 = vector.extract_strided_slice %85 {offsets = [2, 0], sizes = [1, 256], strides = [1, 1]} : vector<8x768xf32> to vector<1x256xf32>
    %89 = vector.extract_strided_slice %85 {offsets = [3, 0], sizes = [1, 256], strides = [1, 1]} : vector<8x768xf32> to vector<1x256xf32>
    %90 = vector.extract_strided_slice %85 {offsets = [4, 0], sizes = [1, 64], strides = [1, 1]} : vector<8x768xf32> to vector<1x64xf32>
    %91 = vector.extract_strided_slice %85 {offsets = [5, 0], sizes = [1, 256], strides = [1, 1]} : vector<8x768xf32> to vector<1x256xf32>
    %92 = vector.extract_strided_slice %85 {offsets = [6, 0], sizes = [1, 256], strides = [1, 1]} : vector<8x768xf32> to vector<1x256xf32>
    %93 = vector.extract_strided_slice %85 {offsets = [7, 0], sizes = [1, 256], strides = [1, 1]} : vector<8x768xf32> to vector<1x256xf32>
    %c0_26 = arith.constant 0 : index
    %c0_27 = arith.constant 0 : index
    %c0_28 = arith.constant 0 : index
    %94 = vector.load %arg9[%c0_26, %c0_27, %c0_28] : memref<2x256x768xbf16, #tpu.memory_space<vmem>>, vector<1x256x768xbf16>
    %95 = vector.shape_cast %94 : vector<1x256x768xbf16> to vector<256x768xbf16>
    %96 = arith.truncf %50 : vector<32x256xf32> to vector<32x256xbf16>
    %cst_29 = arith.constant dense<0.000000e+00> : vector<32x768xf32>
    %97 = tpu.matmul %96, %95, %cst_29 {dimension_numbers = #tpu.dot_dimension_numbers<[1], [0], [0], [1], [0, 0, 1, 1], [], []>} : vector<32x256xbf16>, vector<256x768xbf16>, vector<32x768xf32> -> vector<32x768xf32>
    %98 = vector.broadcast %86 : vector<1x768xf32> to vector<32x768xf32>
    %99 = arith.addf %97, %98 : vector<32x768xf32>
    %100 = vector.extract_strided_slice %99 {offsets = [0, 0], sizes = [32, 256], strides = [1, 1]} : vector<32x768xf32> to vector<32x256xf32>
    %101 = vector.extract_strided_slice %99 {offsets = [0, 256], sizes = [32, 256], strides = [1, 1]} : vector<32x768xf32> to vector<32x256xf32>
    %102 = vector.extract_strided_slice %99 {offsets = [0, 512], sizes = [32, 256], strides = [1, 1]} : vector<32x768xf32> to vector<32x256xf32>
    %103 = tpu.concatenate %101, %101, %101, %101 in 0 : vector<32x256xf32>, vector<32x256xf32>, vector<32x256xf32>, vector<32x256xf32> -> vector<128x256xf32>
    %104 = arith.mulf %103, %60 : vector<128x256xf32>
    %105 = tpu.concatenate %102, %102, %102, %102 in 0 : vector<32x256xf32>, vector<32x256xf32>, vector<32x256xf32>, vector<32x256xf32> -> vector<128x256xf32>
    %106 = arith.mulf %105, %60 : vector<128x256xf32>
    %107 = arith.truncf %100 : vector<32x256xf32> to vector<32x256xbf16>
    %108 = arith.truncf %104 : vector<128x256xf32> to vector<128x256xbf16>
    %cst_30 = arith.constant dense<0.000000e+00> : vector<32x128xf32>
    %109 = tpu.matmul %107, %108, %cst_30 {dimension_numbers = #tpu.dot_dimension_numbers<[1], [1], [0], [0], [0, 0, 1, 0], [], []>} : vector<32x256xbf16>, vector<128x256xbf16>, vector<32x128xf32> -> vector<32x128xf32>
    %cst_31 = arith.constant 1.250000e-01 : f32
    %110 = vector.broadcast %cst_31 : f32 to vector<32x128xf32>
    %111 = arith.mulf %109, %110 : vector<32x128xf32>
    %112 = arith.addf %111, %83 : vector<32x128xf32>
    %cst_32 = arith.constant dense<0xFF800000> : vector<32xf32>
    %113 = vector.multi_reduction <maximumf>, %112, %cst_32 [1] : vector<32x128xf32> to vector<32xf32>
    %114 = vector.shape_cast %113 : vector<32xf32> to vector<32x1xf32>
    %115 = vector.broadcast %114 : vector<32x1xf32> to vector<32x128xf32>
    %116 = arith.subf %112, %115 : vector<32x128xf32>
    %117 = math.exp %116 : vector<32x128xf32>
    %118 = arith.truncf %117 : vector<32x128xf32> to vector<32x128xbf16>
    %cst_33 = arith.constant dense<0.000000e+00> : vector<32x128xf32>
    %119 = tpu.matmul %118, %71, %cst_33 {dimension_numbers = #tpu.dot_dimension_numbers<[1], [0], [0], [1], [0, 0, 1, 1], [], []>} : vector<32x128xbf16>, vector<128x128xbf16>, vector<32x128xf32> -> vector<32x128xf32>
    %cst_34 = arith.constant 1.000000e-30 : f32
    %120 = vector.broadcast %cst_34 : f32 to vector<32x128xf32>
    %121 = arith.maximumf %119, %120 : vector<32x128xf32>
    %122 = tpu.reciprocal %121 {approx = true} : vector<32x128xf32> -> vector<32x128xf32>
    %123 = arith.mulf %117, %122 : vector<32x128xf32>
    %124 = arith.truncf %123 : vector<32x128xf32> to vector<32x128xbf16>
    %125 = arith.truncf %106 : vector<128x256xf32> to vector<128x256xbf16>
    %cst_35 = arith.constant dense<0.000000e+00> : vector<32x256xf32>
    %126 = tpu.matmul %124, %125, %cst_35 {dimension_numbers = #tpu.dot_dimension_numbers<[1], [0], [0], [1], [0, 0, 1, 1], [], []>} : vector<32x128xbf16>, vector<128x256xbf16>, vector<32x256xf32> -> vector<32x256xf32>
    %c0_36 = arith.constant 0 : index
    %c0_37 = arith.constant 0 : index
    %c0_38 = arith.constant 0 : index
    %127 = vector.load %arg10[%c0_36, %c0_37, %c0_38] : memref<2x256x256xbf16, #tpu.memory_space<vmem>>, vector<1x256x256xbf16>
    %128 = vector.shape_cast %127 : vector<1x256x256xbf16> to vector<256x256xbf16>
    %129 = arith.truncf %126 : vector<32x256xf32> to vector<32x256xbf16>
    %cst_39 = arith.constant dense<0.000000e+00> : vector<32x256xf32>
    %130 = tpu.matmul %129, %128, %cst_39 {dimension_numbers = #tpu.dot_dimension_numbers<[1], [0], [0], [1], [0, 0, 1, 1], [], []>} : vector<32x256xbf16>, vector<256x256xbf16>, vector<32x256xf32> -> vector<32x256xf32>
    %131 = vector.broadcast %87 : vector<1x256xf32> to vector<32x256xf32>
    %132 = arith.addf %130, %131 : vector<32x256xf32>
    %133 = arith.addf %50, %132 : vector<32x256xf32>
    %cst_40 = arith.constant dense<0.000000e+00> : vector<32xf32>
    %134 = vector.multi_reduction <add>, %133, %cst_40 [1] : vector<32x256xf32> to vector<32xf32>
    %135 = vector.shape_cast %134 : vector<32xf32> to vector<32x1xf32>
    %cst_41 = arith.constant 2.560000e+02 : f32
    %136 = vector.broadcast %cst_41 : f32 to vector<32x1xf32>
    %137 = arith.divf %135, %136 : vector<32x1xf32>
    %138 = arith.mulf %133, %133 : vector<32x256xf32>
    %cst_42 = arith.constant dense<0.000000e+00> : vector<32xf32>
    %139 = vector.multi_reduction <add>, %138, %cst_42 [1] : vector<32x256xf32> to vector<32xf32>
    %140 = vector.shape_cast %139 : vector<32xf32> to vector<32x1xf32>
    %cst_43 = arith.constant 2.560000e+02 : f32
    %141 = vector.broadcast %cst_43 : f32 to vector<32x1xf32>
    %142 = arith.divf %140, %141 : vector<32x1xf32>
    %143 = arith.mulf %137, %137 : vector<32x1xf32>
    %144 = arith.subf %142, %143 : vector<32x1xf32>
    %cst_44 = arith.constant 9.99999974E-6 : f32
    %145 = vector.broadcast %cst_44 : f32 to vector<32x1xf32>
    %146 = arith.addf %144, %145 : vector<32x1xf32>
    %147 = math.rsqrt %146 : vector<32x1xf32>
    %148 = vector.broadcast %137 : vector<32x1xf32> to vector<32x256xf32>
    %149 = arith.subf %133, %148 : vector<32x256xf32>
    %150 = vector.broadcast %147 : vector<32x1xf32> to vector<32x256xf32>
    %151 = arith.mulf %149, %150 : vector<32x256xf32>
    %152 = vector.broadcast %88 : vector<1x256xf32> to vector<32x256xf32>
    %153 = arith.mulf %151, %152 : vector<32x256xf32>
    %154 = vector.broadcast %89 : vector<1x256xf32> to vector<32x256xf32>
    %155 = arith.addf %153, %154 : vector<32x256xf32>
    %c0_45 = arith.constant 0 : index
    %c0_46 = arith.constant 0 : index
    %c0_47 = arith.constant 0 : index
    %156 = vector.load %arg11[%c0_45, %c0_46, %c0_47] : memref<2x256x64xbf16, #tpu.memory_space<vmem>>, vector<1x256x64xbf16>
    %157 = vector.shape_cast %156 : vector<1x256x64xbf16> to vector<256x64xbf16>
    %158 = arith.truncf %155 : vector<32x256xf32> to vector<32x256xbf16>
    %cst_48 = arith.constant dense<0.000000e+00> : vector<32x64xf32>
    %159 = tpu.matmul %158, %157, %cst_48 {dimension_numbers = #tpu.dot_dimension_numbers<[1], [0], [0], [1], [0, 0, 1, 1], [], []>} : vector<32x256xbf16>, vector<256x64xbf16>, vector<32x64xf32> -> vector<32x64xf32>
    %160 = vector.broadcast %90 : vector<1x64xf32> to vector<32x64xf32>
    %161 = arith.addf %159, %160 : vector<32x64xf32>
    %cst_49 = arith.constant 0.000000e+00 : f32
    %162 = vector.broadcast %cst_49 : f32 to vector<32x64xf32>
    %163 = arith.maximumf %161, %162 : vector<32x64xf32>
    %c0_50 = arith.constant 0 : index
    %c0_51 = arith.constant 0 : index
    %c0_52 = arith.constant 0 : index
    %164 = vector.load %arg12[%c0_50, %c0_51, %c0_52] : memref<2x64x256xbf16, #tpu.memory_space<vmem>>, vector<1x64x256xbf16>
    %165 = vector.shape_cast %164 : vector<1x64x256xbf16> to vector<64x256xbf16>
    %166 = arith.truncf %163 : vector<32x64xf32> to vector<32x64xbf16>
    %cst_53 = arith.constant dense<0.000000e+00> : vector<32x256xf32>
    %167 = tpu.matmul %166, %165, %cst_53 {dimension_numbers = #tpu.dot_dimension_numbers<[1], [0], [0], [1], [0, 0, 1, 1], [], []>} : vector<32x64xbf16>, vector<64x256xbf16>, vector<32x256xf32> -> vector<32x256xf32>
    %168 = vector.broadcast %91 : vector<1x256xf32> to vector<32x256xf32>
    %169 = arith.addf %167, %168 : vector<32x256xf32>
    %170 = arith.addf %155, %169 : vector<32x256xf32>
    %cst_54 = arith.constant dense<0.000000e+00> : vector<32xf32>
    %171 = vector.multi_reduction <add>, %170, %cst_54 [1] : vector<32x256xf32> to vector<32xf32>
    %172 = vector.shape_cast %171 : vector<32xf32> to vector<32x1xf32>
    %cst_55 = arith.constant 2.560000e+02 : f32
    %173 = vector.broadcast %cst_55 : f32 to vector<32x1xf32>
    %174 = arith.divf %172, %173 : vector<32x1xf32>
    %175 = arith.mulf %170, %170 : vector<32x256xf32>
    %cst_56 = arith.constant dense<0.000000e+00> : vector<32xf32>
    %176 = vector.multi_reduction <add>, %175, %cst_56 [1] : vector<32x256xf32> to vector<32xf32>
    %177 = vector.shape_cast %176 : vector<32xf32> to vector<32x1xf32>
    %cst_57 = arith.constant 2.560000e+02 : f32
    %178 = vector.broadcast %cst_57 : f32 to vector<32x1xf32>
    %179 = arith.divf %177, %178 : vector<32x1xf32>
    %180 = arith.mulf %174, %174 : vector<32x1xf32>
    %181 = arith.subf %179, %180 : vector<32x1xf32>
    %cst_58 = arith.constant 9.99999974E-6 : f32
    %182 = vector.broadcast %cst_58 : f32 to vector<32x1xf32>
    %183 = arith.addf %181, %182 : vector<32x1xf32>
    %184 = math.rsqrt %183 : vector<32x1xf32>
    %185 = vector.broadcast %174 : vector<32x1xf32> to vector<32x256xf32>
    %186 = arith.subf %170, %185 : vector<32x256xf32>
    %187 = vector.broadcast %184 : vector<32x1xf32> to vector<32x256xf32>
    %188 = arith.mulf %186, %187 : vector<32x256xf32>
    %189 = vector.broadcast %92 : vector<1x256xf32> to vector<32x256xf32>
    %190 = arith.mulf %188, %189 : vector<32x256xf32>
    %191 = vector.broadcast %93 : vector<1x256xf32> to vector<32x256xf32>
    %192 = arith.addf %190, %191 : vector<32x256xf32>
    %c1 = arith.constant 1 : index
    %c0_59 = arith.constant 0 : index
    %c0_60 = arith.constant 0 : index
    %193 = vector.load %arg13[%c1, %c0_59, %c0_60] : memref<2x8x768xf32, #tpu.memory_space<vmem>>, vector<1x8x768xf32>
    %194 = vector.shape_cast %193 : vector<1x8x768xf32> to vector<8x768xf32>
    %195 = vector.extract_strided_slice %194 {offsets = [0, 0], sizes = [1, 768], strides = [1, 1]} : vector<8x768xf32> to vector<1x768xf32>
    %196 = vector.extract_strided_slice %194 {offsets = [1, 0], sizes = [1, 256], strides = [1, 1]} : vector<8x768xf32> to vector<1x256xf32>
    %197 = vector.extract_strided_slice %194 {offsets = [2, 0], sizes = [1, 256], strides = [1, 1]} : vector<8x768xf32> to vector<1x256xf32>
    %198 = vector.extract_strided_slice %194 {offsets = [3, 0], sizes = [1, 256], strides = [1, 1]} : vector<8x768xf32> to vector<1x256xf32>
    %199 = vector.extract_strided_slice %194 {offsets = [4, 0], sizes = [1, 64], strides = [1, 1]} : vector<8x768xf32> to vector<1x64xf32>
    %200 = vector.extract_strided_slice %194 {offsets = [5, 0], sizes = [1, 256], strides = [1, 1]} : vector<8x768xf32> to vector<1x256xf32>
    %201 = vector.extract_strided_slice %194 {offsets = [6, 0], sizes = [1, 256], strides = [1, 1]} : vector<8x768xf32> to vector<1x256xf32>
    %202 = vector.extract_strided_slice %194 {offsets = [7, 0], sizes = [1, 256], strides = [1, 1]} : vector<8x768xf32> to vector<1x256xf32>
    %c1_61 = arith.constant 1 : index
    %c0_62 = arith.constant 0 : index
    %c0_63 = arith.constant 0 : index
    %203 = vector.load %arg9[%c1_61, %c0_62, %c0_63] : memref<2x256x768xbf16, #tpu.memory_space<vmem>>, vector<1x256x768xbf16>
    %204 = vector.shape_cast %203 : vector<1x256x768xbf16> to vector<256x768xbf16>
    %205 = arith.truncf %192 : vector<32x256xf32> to vector<32x256xbf16>
    %cst_64 = arith.constant dense<0.000000e+00> : vector<32x768xf32>
    %206 = tpu.matmul %205, %204, %cst_64 {dimension_numbers = #tpu.dot_dimension_numbers<[1], [0], [0], [1], [0, 0, 1, 1], [], []>} : vector<32x256xbf16>, vector<256x768xbf16>, vector<32x768xf32> -> vector<32x768xf32>
    %207 = vector.broadcast %195 : vector<1x768xf32> to vector<32x768xf32>
    %208 = arith.addf %206, %207 : vector<32x768xf32>
    %209 = vector.extract_strided_slice %208 {offsets = [0, 0], sizes = [32, 256], strides = [1, 1]} : vector<32x768xf32> to vector<32x256xf32>
    %210 = vector.extract_strided_slice %208 {offsets = [0, 256], sizes = [32, 256], strides = [1, 1]} : vector<32x768xf32> to vector<32x256xf32>
    %211 = vector.extract_strided_slice %208 {offsets = [0, 512], sizes = [32, 256], strides = [1, 1]} : vector<32x768xf32> to vector<32x256xf32>
    %212 = tpu.concatenate %210, %210, %210, %210 in 0 : vector<32x256xf32>, vector<32x256xf32>, vector<32x256xf32>, vector<32x256xf32> -> vector<128x256xf32>
    %213 = arith.mulf %212, %60 : vector<128x256xf32>
    %214 = tpu.concatenate %211, %211, %211, %211 in 0 : vector<32x256xf32>, vector<32x256xf32>, vector<32x256xf32>, vector<32x256xf32> -> vector<128x256xf32>
    %215 = arith.mulf %214, %60 : vector<128x256xf32>
    %216 = arith.truncf %209 : vector<32x256xf32> to vector<32x256xbf16>
    %217 = arith.truncf %213 : vector<128x256xf32> to vector<128x256xbf16>
    %cst_65 = arith.constant dense<0.000000e+00> : vector<32x128xf32>
    %218 = tpu.matmul %216, %217, %cst_65 {dimension_numbers = #tpu.dot_dimension_numbers<[1], [1], [0], [0], [0, 0, 1, 0], [], []>} : vector<32x256xbf16>, vector<128x256xbf16>, vector<32x128xf32> -> vector<32x128xf32>
    %cst_66 = arith.constant 1.250000e-01 : f32
    %219 = vector.broadcast %cst_66 : f32 to vector<32x128xf32>
    %220 = arith.mulf %218, %219 : vector<32x128xf32>
    %221 = arith.addf %220, %83 : vector<32x128xf32>
    %cst_67 = arith.constant dense<0xFF800000> : vector<32xf32>
    %222 = vector.multi_reduction <maximumf>, %221, %cst_67 [1] : vector<32x128xf32> to vector<32xf32>
    %223 = vector.shape_cast %222 : vector<32xf32> to vector<32x1xf32>
    %224 = vector.broadcast %223 : vector<32x1xf32> to vector<32x128xf32>
    %225 = arith.subf %221, %224 : vector<32x128xf32>
    %226 = math.exp %225 : vector<32x128xf32>
    %227 = arith.truncf %226 : vector<32x128xf32> to vector<32x128xbf16>
    %cst_68 = arith.constant dense<0.000000e+00> : vector<32x128xf32>
    %228 = tpu.matmul %227, %71, %cst_68 {dimension_numbers = #tpu.dot_dimension_numbers<[1], [0], [0], [1], [0, 0, 1, 1], [], []>} : vector<32x128xbf16>, vector<128x128xbf16>, vector<32x128xf32> -> vector<32x128xf32>
    %cst_69 = arith.constant 1.000000e-30 : f32
    %229 = vector.broadcast %cst_69 : f32 to vector<32x128xf32>
    %230 = arith.maximumf %228, %229 : vector<32x128xf32>
    %231 = tpu.reciprocal %230 {approx = true} : vector<32x128xf32> -> vector<32x128xf32>
    %232 = arith.mulf %226, %231 : vector<32x128xf32>
    %233 = arith.truncf %232 : vector<32x128xf32> to vector<32x128xbf16>
    %234 = arith.truncf %215 : vector<128x256xf32> to vector<128x256xbf16>
    %cst_70 = arith.constant dense<0.000000e+00> : vector<32x256xf32>
    %235 = tpu.matmul %233, %234, %cst_70 {dimension_numbers = #tpu.dot_dimension_numbers<[1], [0], [0], [1], [0, 0, 1, 1], [], []>} : vector<32x128xbf16>, vector<128x256xbf16>, vector<32x256xf32> -> vector<32x256xf32>
    %c1_71 = arith.constant 1 : index
    %c0_72 = arith.constant 0 : index
    %c0_73 = arith.constant 0 : index
    %236 = vector.load %arg10[%c1_71, %c0_72, %c0_73] : memref<2x256x256xbf16, #tpu.memory_space<vmem>>, vector<1x256x256xbf16>
    %237 = vector.shape_cast %236 : vector<1x256x256xbf16> to vector<256x256xbf16>
    %238 = arith.truncf %235 : vector<32x256xf32> to vector<32x256xbf16>
    %cst_74 = arith.constant dense<0.000000e+00> : vector<32x256xf32>
    %239 = tpu.matmul %238, %237, %cst_74 {dimension_numbers = #tpu.dot_dimension_numbers<[1], [0], [0], [1], [0, 0, 1, 1], [], []>} : vector<32x256xbf16>, vector<256x256xbf16>, vector<32x256xf32> -> vector<32x256xf32>
    %240 = vector.broadcast %196 : vector<1x256xf32> to vector<32x256xf32>
    %241 = arith.addf %239, %240 : vector<32x256xf32>
    %242 = arith.addf %192, %241 : vector<32x256xf32>
    %cst_75 = arith.constant dense<0.000000e+00> : vector<32xf32>
    %243 = vector.multi_reduction <add>, %242, %cst_75 [1] : vector<32x256xf32> to vector<32xf32>
    %244 = vector.shape_cast %243 : vector<32xf32> to vector<32x1xf32>
    %cst_76 = arith.constant 2.560000e+02 : f32
    %245 = vector.broadcast %cst_76 : f32 to vector<32x1xf32>
    %246 = arith.divf %244, %245 : vector<32x1xf32>
    %247 = arith.mulf %242, %242 : vector<32x256xf32>
    %cst_77 = arith.constant dense<0.000000e+00> : vector<32xf32>
    %248 = vector.multi_reduction <add>, %247, %cst_77 [1] : vector<32x256xf32> to vector<32xf32>
    %249 = vector.shape_cast %248 : vector<32xf32> to vector<32x1xf32>
    %cst_78 = arith.constant 2.560000e+02 : f32
    %250 = vector.broadcast %cst_78 : f32 to vector<32x1xf32>
    %251 = arith.divf %249, %250 : vector<32x1xf32>
    %252 = arith.mulf %246, %246 : vector<32x1xf32>
    %253 = arith.subf %251, %252 : vector<32x1xf32>
    %cst_79 = arith.constant 9.99999974E-6 : f32
    %254 = vector.broadcast %cst_79 : f32 to vector<32x1xf32>
    %255 = arith.addf %253, %254 : vector<32x1xf32>
    %256 = math.rsqrt %255 : vector<32x1xf32>
    %257 = vector.broadcast %246 : vector<32x1xf32> to vector<32x256xf32>
    %258 = arith.subf %242, %257 : vector<32x256xf32>
    %259 = vector.broadcast %256 : vector<32x1xf32> to vector<32x256xf32>
    %260 = arith.mulf %258, %259 : vector<32x256xf32>
    %261 = vector.broadcast %197 : vector<1x256xf32> to vector<32x256xf32>
    %262 = arith.mulf %260, %261 : vector<32x256xf32>
    %263 = vector.broadcast %198 : vector<1x256xf32> to vector<32x256xf32>
    %264 = arith.addf %262, %263 : vector<32x256xf32>
    %c1_80 = arith.constant 1 : index
    %c0_81 = arith.constant 0 : index
    %c0_82 = arith.constant 0 : index
    %265 = vector.load %arg11[%c1_80, %c0_81, %c0_82] : memref<2x256x64xbf16, #tpu.memory_space<vmem>>, vector<1x256x64xbf16>
    %266 = vector.shape_cast %265 : vector<1x256x64xbf16> to vector<256x64xbf16>
    %267 = arith.truncf %264 : vector<32x256xf32> to vector<32x256xbf16>
    %cst_83 = arith.constant dense<0.000000e+00> : vector<32x64xf32>
    %268 = tpu.matmul %267, %266, %cst_83 {dimension_numbers = #tpu.dot_dimension_numbers<[1], [0], [0], [1], [0, 0, 1, 1], [], []>} : vector<32x256xbf16>, vector<256x64xbf16>, vector<32x64xf32> -> vector<32x64xf32>
    %269 = vector.broadcast %199 : vector<1x64xf32> to vector<32x64xf32>
    %270 = arith.addf %268, %269 : vector<32x64xf32>
    %cst_84 = arith.constant 0.000000e+00 : f32
    %271 = vector.broadcast %cst_84 : f32 to vector<32x64xf32>
    %272 = arith.maximumf %270, %271 : vector<32x64xf32>
    %c1_85 = arith.constant 1 : index
    %c0_86 = arith.constant 0 : index
    %c0_87 = arith.constant 0 : index
    %273 = vector.load %arg12[%c1_85, %c0_86, %c0_87] : memref<2x64x256xbf16, #tpu.memory_space<vmem>>, vector<1x64x256xbf16>
    %274 = vector.shape_cast %273 : vector<1x64x256xbf16> to vector<64x256xbf16>
    %275 = arith.truncf %272 : vector<32x64xf32> to vector<32x64xbf16>
    %cst_88 = arith.constant dense<0.000000e+00> : vector<32x256xf32>
    %276 = tpu.matmul %275, %274, %cst_88 {dimension_numbers = #tpu.dot_dimension_numbers<[1], [0], [0], [1], [0, 0, 1, 1], [], []>} : vector<32x64xbf16>, vector<64x256xbf16>, vector<32x256xf32> -> vector<32x256xf32>
    %277 = vector.broadcast %200 : vector<1x256xf32> to vector<32x256xf32>
    %278 = arith.addf %276, %277 : vector<32x256xf32>
    %279 = arith.addf %264, %278 : vector<32x256xf32>
    %cst_89 = arith.constant dense<0.000000e+00> : vector<32xf32>
    %280 = vector.multi_reduction <add>, %279, %cst_89 [1] : vector<32x256xf32> to vector<32xf32>
    %281 = vector.shape_cast %280 : vector<32xf32> to vector<32x1xf32>
    %cst_90 = arith.constant 2.560000e+02 : f32
    %282 = vector.broadcast %cst_90 : f32 to vector<32x1xf32>
    %283 = arith.divf %281, %282 : vector<32x1xf32>
    %284 = arith.mulf %279, %279 : vector<32x256xf32>
    %cst_91 = arith.constant dense<0.000000e+00> : vector<32xf32>
    %285 = vector.multi_reduction <add>, %284, %cst_91 [1] : vector<32x256xf32> to vector<32xf32>
    %286 = vector.shape_cast %285 : vector<32xf32> to vector<32x1xf32>
    %cst_92 = arith.constant 2.560000e+02 : f32
    %287 = vector.broadcast %cst_92 : f32 to vector<32x1xf32>
    %288 = arith.divf %286, %287 : vector<32x1xf32>
    %289 = arith.mulf %283, %283 : vector<32x1xf32>
    %290 = arith.subf %288, %289 : vector<32x1xf32>
    %cst_93 = arith.constant 9.99999974E-6 : f32
    %291 = vector.broadcast %cst_93 : f32 to vector<32x1xf32>
    %292 = arith.addf %290, %291 : vector<32x1xf32>
    %293 = math.rsqrt %292 : vector<32x1xf32>
    %294 = vector.broadcast %283 : vector<32x1xf32> to vector<32x256xf32>
    %295 = arith.subf %279, %294 : vector<32x256xf32>
    %296 = vector.broadcast %293 : vector<32x1xf32> to vector<32x256xf32>
    %297 = arith.mulf %295, %296 : vector<32x256xf32>
    %298 = vector.broadcast %201 : vector<1x256xf32> to vector<32x256xf32>
    %299 = arith.mulf %297, %298 : vector<32x256xf32>
    %300 = vector.broadcast %202 : vector<1x256xf32> to vector<32x256xf32>
    %301 = arith.addf %299, %300 : vector<32x256xf32>
    %c0_94 = arith.constant 0 : index
    %c0_95 = arith.constant 0 : index
    %302 = vector.load %arg6[%c0_94, %c0_95] : memref<256x128xbf16, #tpu.memory_space<vmem>>, vector<256x128xbf16>
    %303 = arith.truncf %301 : vector<32x256xf32> to vector<32x256xbf16>
    %cst_96 = arith.constant dense<0.000000e+00> : vector<32x128xf32>
    %304 = tpu.matmul %303, %302, %cst_96 {dimension_numbers = #tpu.dot_dimension_numbers<[1], [0], [0], [1], [0, 0, 1, 1], [], []>} : vector<32x256xbf16>, vector<256x128xbf16>, vector<32x128xf32> -> vector<32x128xf32>
    %305 = vector.broadcast %5 : vector<1x128xf32> to vector<32x128xf32>
    %306 = arith.addf %304, %305 : vector<32x128xf32>
    %307 = arith.mulf %306, %26 : vector<32x128xf32>
    %308 = arith.addf %307, %27 : vector<32x128xf32>
    %c0_97 = arith.constant 0 : index
    %c0_98 = arith.constant 0 : index
    %309 = vector.load %arg7[%c0_97, %c0_98] : memref<128x64xbf16, #tpu.memory_space<vmem>>, vector<128x64xbf16>
    %310 = arith.truncf %308 : vector<32x128xf32> to vector<32x128xbf16>
    %cst_99 = arith.constant dense<0.000000e+00> : vector<32x64xf32>
    %311 = tpu.matmul %310, %309, %cst_99 {dimension_numbers = #tpu.dot_dimension_numbers<[1], [0], [0], [1], [0, 0, 1, 1], [], []>} : vector<32x128xbf16>, vector<128x64xbf16>, vector<32x64xf32> -> vector<32x64xf32>
    %312 = vector.broadcast %6 : vector<1x64xf32> to vector<32x64xf32>
    %313 = arith.addf %311, %312 : vector<32x64xf32>
    %314 = arith.mulf %313, %33 : vector<32x64xf32>
    %315 = arith.addf %314, %34 : vector<32x64xf32>
    %c0_100 = arith.constant 0 : index
    %c0_101 = arith.constant 0 : index
    %316 = vector.load %arg8[%c0_100, %c0_101] : memref<64x16xbf16, #tpu.memory_space<vmem>>, vector<64x16xbf16>
    %317 = arith.truncf %315 : vector<32x64xf32> to vector<32x64xbf16>
    %cst_102 = arith.constant dense<0.000000e+00> : vector<32x16xf32>
    %318 = tpu.matmul %317, %316, %cst_102 {dimension_numbers = #tpu.dot_dimension_numbers<[1], [0], [0], [1], [0, 0, 1, 1], [], []>} : vector<32x64xbf16>, vector<64x16xbf16>, vector<32x16xf32> -> vector<32x16xf32>
    %319 = vector.broadcast %7 : vector<1x16xf32> to vector<32x16xf32>
    %320 = arith.addf %318, %319 : vector<32x16xf32>
    %321 = arith.mulf %320, %40 : vector<32x16xf32>
    %322 = arith.addf %321, %41 : vector<32x16xf32>
    %c0_103 = arith.constant 0 : index
    %c0_104 = arith.constant 0 : index
    %323 = vector.load %arg14[%c0_103, %c0_104] : memref<32x16xf32, #tpu.memory_space<vmem>>, vector<32x16xf32>
    tpu.vector_store %arg14[%c0_103, %c0_104], %322 {strides = array<i32>} : memref<32x16xf32, #tpu.memory_space<vmem>>, vector<32x16xf32>,
    return
  }
  func.func @transform_0(%arg0: i32) -> (i32, i32) {
    %c0_i32 = arith.constant 0 : i32
    %c0_i32_0 = arith.constant 0 : i32
    return %arg0, %c0_i32 : i32, i32
  }
  func.func @transform_1(%arg0: i32) -> (i32, i32) {
    %c0_i32 = arith.constant 0 : i32
    %c0_i32_0 = arith.constant 0 : i32
    return %arg0, %c0_i32 : i32, i32
  }
  func.func @transform_2(%arg0: i32) -> (i32, i32) {
    %c0_i32 = arith.constant 0 : i32
    %c0_i32_0 = arith.constant 0 : i32
    %c0_i32_1 = arith.constant 0 : i32
    return %c0_i32, %c0_i32_0 : i32, i32
  }
  func.func @transform_3(%arg0: i32) -> (i32, i32) {
    %c0_i32 = arith.constant 0 : i32
    %c0_i32_0 = arith.constant 0 : i32
    %c0_i32_1 = arith.constant 0 : i32
    return %c0_i32, %c0_i32_0 : i32, i32
  }
  func.func @transform_4(%arg0: i32) -> (i32, i32) {
    %c0_i32 = arith.constant 0 : i32
    %c0_i32_0 = arith.constant 0 : i32
    %c0_i32_1 = arith.constant 0 : i32
    return %c0_i32, %c0_i32_0 : i32, i32
  }
  func.func @transform_5(%arg0: i32) -> (i32, i32) {
    %c0_i32 = arith.constant 0 : i32
    %c0_i32_0 = arith.constant 0 : i32
    %c0_i32_1 = arith.constant 0 : i32
    return %c0_i32, %c0_i32_0 : i32, i32
  }
  func.func @transform_6(%arg0: i32) -> (i32, i32) {
    %c0_i32 = arith.constant 0 : i32
    %c0_i32_0 = arith.constant 0 : i32
    %c0_i32_1 = arith.constant 0 : i32
    return %c0_i32, %c0_i32_0 : i32, i32
  }
  func.func @transform_7(%arg0: i32) -> (i32, i32) {
    %c0_i32 = arith.constant 0 : i32
    %c0_i32_0 = arith.constant 0 : i32
    %c0_i32_1 = arith.constant 0 : i32
    return %c0_i32, %c0_i32_0 : i32, i32
  }
  func.func @transform_8(%arg0: i32) -> (i32, i32, i32) {
    %c0_i32 = arith.constant 0 : i32
    %c0_i32_0 = arith.constant 0 : i32
    %c0_i32_1 = arith.constant 0 : i32
    %c0_i32_2 = arith.constant 0 : i32
    return %c0_i32, %c0_i32_0, %c0_i32_1 : i32, i32, i32
  }
  func.func @transform_9(%arg0: i32) -> (i32, i32, i32) {
    %c0_i32 = arith.constant 0 : i32
    %c0_i32_0 = arith.constant 0 : i32
    %c0_i32_1 = arith.constant 0 : i32
    %c0_i32_2 = arith.constant 0 : i32
    return %c0_i32, %c0_i32_0, %c0_i32_1 : i32, i32, i32
  }
  func.func @transform_10(%arg0: i32) -> (i32, i32, i32) {
    %c0_i32 = arith.constant 0 : i32
    %c0_i32_0 = arith.constant 0 : i32
    %c0_i32_1 = arith.constant 0 : i32
    %c0_i32_2 = arith.constant 0 : i32
    return %c0_i32, %c0_i32_0, %c0_i32_1 : i32, i32, i32
  }
  func.func @transform_11(%arg0: i32) -> (i32, i32, i32) {
    %c0_i32 = arith.constant 0 : i32
    %c0_i32_0 = arith.constant 0 : i32
    %c0_i32_1 = arith.constant 0 : i32
    %c0_i32_2 = arith.constant 0 : i32
    return %c0_i32, %c0_i32_0, %c0_i32_1 : i32, i32, i32
  }
  func.func @transform_12(%arg0: i32) -> (i32, i32, i32) {
    %c0_i32 = arith.constant 0 : i32
    %c0_i32_0 = arith.constant 0 : i32
    %c0_i32_1 = arith.constant 0 : i32
    %c0_i32_2 = arith.constant 0 : i32
    return %c0_i32, %c0_i32_0, %c0_i32_1 : i32, i32, i32
  }
  func.func @transform_13(%arg0: i32) -> (i32, i32) {
    %c0_i32 = arith.constant 0 : i32
    %c0_i32_0 = arith.constant 0 : i32
    return %arg0, %c0_i32 : i32, i32
  }
}

</mosaic_0001>

<llo_original>
// kernel: model_forward.1
$region0: #{model_forward.1}
  #allocation0 [shape = 'u32[]', space=smem, size = 0x4, offset = 0x4, fixed_abs, tag = 'smem constant byte address 0x4 - core index']
  #allocation1 [shape = 'u32[144,128]{1,0:T(1,128)}', space=vmem, size = 0x12000, scoped, tag = 'internal scratch']
  %s0 = inlined_call_operand.vmem [shape: f32[128,19], index: 0, kind: input, shape index: {}]
  %s1 = inlined_call_operand.vmem [shape: f32[128,16], index: 1, kind: input, shape index: {}]
  %s2 = inlined_call_operand.vmem [shape: f32[8,928], index: 2, kind: input, shape index: {}]
  %s3 = inlined_call_operand.vmem [shape: bf16[19,928], index: 3, kind: input, shape index: {}]
  %s4 = inlined_call_operand.vmem [shape: bf16[16,256], index: 4, kind: input, shape index: {}]
  %s5 = inlined_call_operand.vmem [shape: bf16[256,128], index: 5, kind: input, shape index: {}]
  %s6 = inlined_call_operand.vmem [shape: bf16[128,64], index: 6, kind: input, shape index: {}]
  %s7 = inlined_call_operand.vmem [shape: bf16[64,16], index: 7, kind: input, shape index: {}]
  %s8 = inlined_call_operand.vmem [shape: bf16[2,256,768], index: 8, kind: input, shape index: {}]
  %s9 = inlined_call_operand.vmem [shape: bf16[2,256,256], index: 9, kind: input, shape index: {}]
  %s10 = inlined_call_operand.vmem [shape: bf16[2,256,64], index: 10, kind: input, shape index: {}]
  %s11 = inlined_call_operand.vmem [shape: bf16[2,64,256], index: 11, kind: input, shape index: {}]
  %s12 = inlined_call_operand.vmem [shape: f32[2,8,768], index: 12, kind: input, shape index: {}]
  %s13 = inlined_call_operand.vmem [shape: f32[128,16], index: 13, kind: output, shape index: {}]
  %s14 = sld [smem:[#allocation0]]
  $region85: #{model_forward.1} parent=0
    _
  %s16 = ssub.s32 1, %s14
  %s17 = scalar_select 0, %s16, %s14
  loop: start=0, step=1, limit=6
  $region2: #{model_forward.1} parent=0 // loop_pre_header
    _
  $region3: #{model_forward.1} parent=0 // loop_header
    %s19 = sphi 0, %s23
    %p20 = scmp.ge.s32.totalorder %s19, 6
    %s29 = sphi 0, %s31
    %s32 = sphi 0, %s29
    %s33 = sphi 0, %s32
    %s49 = sphi 0, %s33
    %s55 = sphi 0, %s57
    %s58 = sphi 0, %s55
    %s59 = sphi 0, %s58
    %s75 = sphi 0, %s59
    %s79 = sphi 0, %s79
    %s81 = sphi 0, %s79
    %s82 = sphi 0, %s81
    %s96 = sphi 0, %s82
    %s100 = sphi 0, %s100
    %s102 = sphi 0, %s100
    %s103 = sphi 0, %s102
    %s117 = sphi 0, %s103
    %s121 = sphi 0, %s121
    %s123 = sphi 0, %s121
    %s124 = sphi 0, %s123
    %s138 = sphi 0, %s124
    %s142 = sphi 0, %s142
    %s144 = sphi 0, %s142
    %s145 = sphi 0, %s144
    %s159 = sphi 0, %s145
    %s163 = sphi 0, %s163
    %s165 = sphi 0, %s163
    %s166 = sphi 0, %s165
    %s180 = sphi 0, %s166
    %s184 = sphi 0, %s184
    %s186 = sphi 0, %s184
    %s187 = sphi 0, %s186
    %s201 = sphi 0, %s187
    %s205 = sphi 0, %s205
    %s207 = sphi 0, %s205
    %s208 = sphi 0, %s207
    %s222 = sphi 0, %s208
    %s226 = sphi 0, %s226
    %s228 = sphi 0, %s226
    %s229 = sphi 0, %s228
    %s243 = sphi 0, %s229
    %s247 = sphi 0, %s247
    %s249 = sphi 0, %s247
    %s250 = sphi 0, %s249
    %s264 = sphi 0, %s250
    %s268 = sphi 0, %s268
    %s270 = sphi 0, %s268
    %s271 = sphi 0, %s270
    %s285 = sphi 0, %s271
    %s289 = sphi 0, %s289
    %s291 = sphi 0, %s289
    %s292 = sphi 0, %s291
    %s306 = sphi 0, %s292
    %s312 = sphi 0, %s314
    %s315 = sphi 0, %s312
    %s316 = sphi 0, %s315
    %s332 = sphi 0, %s316
  $region4: #{model_forward.1} parent=0 // loop_header_branch
    %22 = sbr.rel (%p20) target = $region8
  $region5: #{model_forward.1} parent=0 // loop_body
    %s24 = ssub.s32 %s19, 1
    %s25 = ssub.s32 %s19, 2
    %s26 = sadd.s32 %s19, 1
    %s27 = ssub.s32 %s19, %s26
    %p28 = scmp.eq.s32.totalorder %s27, 0
    %s30 = sadd.s32 %s29, 1
    %s31 = scalar_select %p28, %s29, %s30
    %p34 = pneg %p28
    %p35 = scmp.eq.s32.totalorder %s19, 3
    %p36 = por %p34, %p35
    %p37 = scmp.ne.s32.totalorder %s29, %s32
    %p38 = scmp.eq.s32.totalorder %s19, 0
    %p39 = por %p37, %p38
    %p40 = scmp.ne.s32.totalorder %s29, %s32
    %p41 = scmp.eq.s32.totalorder %s24, 3
    %p42 = por %p40, %p41
    %p43 = scmp.ne.s32.totalorder %s32, %s33
    %p44 = scmp.eq.s32.totalorder %s24, 0
    %p45 = por %p43, %p44
    %p46 = scmp.ne.s32.totalorder %s32, %s33
    %p47 = scmp.eq.s32.totalorder %s25, 3
    %p48 = por %p46, %p47
    %p50 = scmp.ne.s32.totalorder %s33, %s49
    %p51 = scmp.eq.s32.totalorder %s25, 0
    %p52 = por %p50, %p51
    %s53 = ssub.s32 %s19, %s26
    %p54 = scmp.eq.s32.totalorder %s53, 0
    %s56 = sadd.s32 %s55, 1
    %s57 = scalar_select %p54, %s55, %s56
    %p60 = pneg %p54
    %p61 = scmp.eq.s32.totalorder %s19, 3
    %p62 = por %p60, %p61
    %p63 = scmp.ne.s32.totalorder %s55, %s58
    %p64 = scmp.eq.s32.totalorder %s19, 0
    %p65 = por %p63, %p64
    %p66 = scmp.ne.s32.totalorder %s55, %s58
    %p67 = scmp.eq.s32.totalorder %s24, 3
    %p68 = por %p66, %p67
    %p69 = scmp.ne.s32.totalorder %s58, %s59
    %p70 = scmp.eq.s32.totalorder %s24, 0
    %p71 = por %p69, %p70
    %p72 = scmp.ne.s32.totalorder %s58, %s59
    %p73 = scmp.eq.s32.totalorder %s25, 3
    %p74 = por %p72, %p73
    %p76 = scmp.ne.s32.totalorder %s59, %s75
    %p77 = scmp.eq.s32.totalorder %s25, 0
    %p78 = por %p76, %p77
    %s80 = sadd.s32 %s79, 1
    %p83 = scmp.eq.s32.totalorder %s19, 3
    %p84 = scmp.ne.s32.totalorder %s79, %s81
    %p85 = scmp.eq.s32.totalorder %s19, 0
    %p86 = por %p84, %p85
    %p87 = scmp.ne.s32.totalorder %s79, %s81
    %p88 = scmp.eq.s32.totalorder %s24, 3
    %p89 = por %p87, %p88
    %p90 = scmp.ne.s32.totalorder %s81, %s82
    %p91 = scmp.eq.s32.totalorder %s24, 0
    %p92 = por %p90, %p91
    %p93 = scmp.ne.s32.totalorder %s81, %s82
    %p94 = scmp.eq.s32.totalorder %s25, 3
    %p95 = por %p93, %p94
    %p97 = scmp.ne.s32.totalorder %s82, %s96
    %p98 = scmp.eq.s32.totalorder %s25, 0
    %p99 = por %p97, %p98
    %s101 = sadd.s32 %s100, 1
    %p104 = scmp.eq.s32.totalorder %s19, 3
    %p105 = scmp.ne.s32.totalorder %s100, %s102
    %p106 = scmp.eq.s32.totalorder %s19, 0
    %p107 = por %p105, %p106
    %p108 = scmp.ne.s32.totalorder %s100, %s102
    %p109 = scmp.eq.s32.totalorder %s24, 3
    %p110 = por %p108, %p109
    %p111 = scmp.ne.s32.totalorder %s102, %s103
    %p112 = scmp.eq.s32.totalorder %s24, 0
    %p113 = por %p111, %p112
    %p114 = scmp.ne.s32.totalorder %s102, %s103
    %p115 = scmp.eq.s32.totalorder %s25, 3
    %p116 = por %p114, %p115
    %p118 = scmp.ne.s32.totalorder %s103, %s117
    %p119 = scmp.eq.s32.totalorder %s25, 0
    %p120 = por %p118, %p119
    %s122 = sadd.s32 %s121, 1
    %p125 = scmp.eq.s32.totalorder %s19, 3
    %p126 = scmp.ne.s32.totalorder %s121, %s123
    %p127 = scmp.eq.s32.totalorder %s19, 0
    %p128 = por %p126, %p127
    %p129 = scmp.ne.s32.totalorder %s121, %s123
    %p130 = scmp.eq.s32.totalorder %s24, 3
    %p131 = por %p129, %p130
    %p132 = scmp.ne.s32.totalorder %s123, %s124
    %p133 = scmp.eq.s32.totalorder %s24, 0
    %p134 = por %p132, %p133
    %p135 = scmp.ne.s32.totalorder %s123, %s124
    %p136 = scmp.eq.s32.totalorder %s25, 3
    %p137 = por %p135, %p136
    %p139 = scmp.ne.s32.totalorder %s124, %s138
    %p140 = scmp.eq.s32.totalorder %s25, 0
    %p141 = por %p139, %p140
    %s143 = sadd.s32 %s142, 1
    %p146 = scmp.eq.s32.totalorder %s19, 3
    %p147 = scmp.ne.s32.totalorder %s142, %s144
    %p148 = scmp.eq.s32.totalorder %s19, 0
    %p149 = por %p147, %p148
    %p150 = scmp.ne.s32.totalorder %s142, %s144
    %p151 = scmp.eq.s32.totalorder %s24, 3
    %p152 = por %p150, %p151
    %p153 = scmp.ne.s32.totalorder %s144, %s145
    %p154 = scmp.eq.s32.totalorder %s24, 0
    %p155 = por %p153, %p154
    %p156 = scmp.ne.s32.totalorder %s144, %s145
    %p157 = scmp.eq.s32.totalorder %s25, 3
    %p158 = por %p156, %p157
    %p160 = scmp.ne.s32.totalorder %s145, %s159
    %p161 = scmp.eq.s32.totalorder %s25, 0
    %p162 = por %p160, %p161
    %s164 = sadd.s32 %s163, 1
    %p167 = scmp.eq.s32.totalorder %s19, 3
    %p168 = scmp.ne.s32.totalorder %s163, %s165
    %p169 = scmp.eq.s32.totalorder %s19, 0
    %p170 = por %p168, %p169
    %p171 = scmp.ne.s32.totalorder %s163, %s165
    %p172 = scmp.eq.s32.totalorder %s24, 3
    %p173 = por %p171, %p172
    %p174 = scmp.ne.s32.totalorder %s165, %s166
    %p175 = scmp.eq.s32.totalorder %s24, 0
    %p176 = por %p174, %p175
    %p177 = scmp.ne.s32.totalorder %s165, %s166
    %p178 = scmp.eq.s32.totalorder %s25, 3
    %p179 = por %p177, %p178
    %p181 = scmp.ne.s32.totalorder %s166, %s180
    %p182 = scmp.eq.s32.totalorder %s25, 0
    %p183 = por %p181, %p182
    %s185 = sadd.s32 %s184, 1
    %p188 = scmp.eq.s32.totalorder %s19, 3
    %p189 = scmp.ne.s32.totalorder %s184, %s186
    %p190 = scmp.eq.s32.totalorder %s19, 0
    %p191 = por %p189, %p190
    %p192 = scmp.ne.s32.totalorder %s184, %s186
    %p193 = scmp.eq.s32.totalorder %s24, 3
    %p194 = por %p192, %p193
    %p195 = scmp.ne.s32.totalorder %s186, %s187
    %p196 = scmp.eq.s32.totalorder %s24, 0
    %p197 = por %p195, %p196
    %p198 = scmp.ne.s32.totalorder %s186, %s187
    %p199 = scmp.eq.s32.totalorder %s25, 3
    %p200 = por %p198, %p199
    %p202 = scmp.ne.s32.totalorder %s187, %s201
    %p203 = scmp.eq.s32.totalorder %s25, 0
    %p204 = por %p202, %p203
    %s206 = sadd.s32 %s205, 1
    %p209 = scmp.eq.s32.totalorder %s19, 3
    %p210 = scmp.ne.s32.totalorder %s205, %s207
    %p211 = scmp.eq.s32.totalorder %s19, 0
    %p212 = por %p210, %p211
    %p213 = scmp.ne.s32.totalorder %s205, %s207
    %p214 = scmp.eq.s32.totalorder %s24, 3
    %p215 = por %p213, %p214
    %p216 = scmp.ne.s32.totalorder %s207, %s208
    %p217 = scmp.eq.s32.totalorder %s24, 0
    %p218 = por %p216, %p217
    %p219 = scmp.ne.s32.totalorder %s207, %s208
    %p220 = scmp.eq.s32.totalorder %s25, 3
    %p221 = por %p219, %p220
    %p223 = scmp.ne.s32.totalorder %s208, %s222
    %p224 = scmp.eq.s32.totalorder %s25, 0
    %p225 = por %p223, %p224
    %s227 = sadd.s32 %s226, 1
    %p230 = scmp.eq.s32.totalorder %s19, 3
    %p231 = scmp.ne.s32.totalorder %s226, %s228
    %p232 = scmp.eq.s32.totalorder %s19, 0
    %p233 = por %p231, %p232
    %p234 = scmp.ne.s32.totalorder %s226, %s228
    %p235 = scmp.eq.s32.totalorder %s24, 3
    %p236 = por %p234, %p235
    %p237 = scmp.ne.s32.totalorder %s228, %s229
    %p238 = scmp.eq.s32.totalorder %s24, 0
    %p239 = por %p237, %p238
    %p240 = scmp.ne.s32.totalorder %s228, %s229
    %p241 = scmp.eq.s32.totalorder %s25, 3
    %p242 = por %p240, %p241
    %p244 = scmp.ne.s32.totalorder %s229, %s243
    %p245 = scmp.eq.s32.totalorder %s25, 0
    %p246 = por %p244, %p245
    %s248 = sadd.s32 %s247, 1
    %p251 = scmp.eq.s32.totalorder %s19, 3
    %p252 = scmp.ne.s32.totalorder %s247, %s249
    %p253 = scmp.eq.s32.totalorder %s19, 0
    %p254 = por %p252, %p253
    %p255 = scmp.ne.s32.totalorder %s247, %s249
    %p256 = scmp.eq.s32.totalorder %s24, 3
    %p257 = por %p255, %p256
    %p258 = scmp.ne.s32.totalorder %s249, %s250
    %p259 = scmp.eq.s32.totalorder %s24, 0
    %p260 = por %p258, %p259
    %p261 = scmp.ne.s32.totalorder %s249, %s250
    %p262 = scmp.eq.s32.totalorder %s25, 3
    %p263 = por %p261, %p262
    %p265 = scmp.ne.s32.totalorder %s250, %s264
    %p266 = scmp.eq.s32.totalorder %s25, 0
    %p267 = por %p265, %p266
    %s269 = sadd.s32 %s268, 1
    %p272 = scmp.eq.s32.totalorder %s19, 3
    %p273 = scmp.ne.s32.totalorder %s268, %s270
    %p274 = scmp.eq.s32.totalorder %s19, 0
    %p275 = por %p273, %p274
    %p276 = scmp.ne.s32.totalorder %s268, %s270
    %p277 = scmp.eq.s32.totalorder %s24, 3
    %p278 = por %p276, %p277
    %p279 = scmp.ne.s32.totalorder %s270, %s271
    %p280 = scmp.eq.s32.totalorder %s24, 0
    %p281 = por %p279, %p280
    %p282 = scmp.ne.s32.totalorder %s270, %s271
    %p283 = scmp.eq.s32.totalorder %s25, 3
    %p284 = por %p282, %p283
    %p286 = scmp.ne.s32.totalorder %s271, %s285
    %p287 = scmp.eq.s32.totalorder %s25, 0
    %p288 = por %p286, %p287
    %s290 = sadd.s32 %s289, 1
    %p293 = scmp.eq.s32.totalorder %s19, 3
    %p294 = scmp.ne.s32.totalorder %s289, %s291
    %p295 = scmp.eq.s32.totalorder %s19, 0
    %p296 = por %p294, %p295
    %p297 = scmp.ne.s32.totalorder %s289, %s291
    %p298 = scmp.eq.s32.totalorder %s24, 3
    %p299 = por %p297, %p298
    %p300 = scmp.ne.s32.totalorder %s291, %s292
    %p301 = scmp.eq.s32.totalorder %s24, 0
    %p302 = por %p300, %p301
    %p303 = scmp.ne.s32.totalorder %s291, %s292
    %p304 = scmp.eq.s32.totalorder %s25, 3
    %p305 = por %p303, %p304
    %p307 = scmp.ne.s32.totalorder %s292, %s306
    %p308 = scmp.eq.s32.totalorder %s25, 0
    %p309 = por %p307, %p308
    %s310 = ssub.s32 %s19, %s26
    %p311 = scmp.eq.s32.totalorder %s310, 0
    %s313 = sadd.s32 %s312, 1
    %s314 = scalar_select %p311, %s312, %s313
    %p317 = pneg %p311
    %p318 = scmp.eq.s32.totalorder %s19, 3
    %p319 = por %p317, %p318
    %p320 = scmp.ne.s32.totalorder %s312, %s315
    %p321 = scmp.eq.s32.totalorder %s19, 0
    %p322 = por %p320, %p321
    %p323 = scmp.ne.s32.totalorder %s312, %s315
    %p324 = scmp.eq.s32.totalorder %s24, 3
    %p325 = por %p323, %p324
    %p326 = scmp.ne.s32.totalorder %s315, %s316
    %p327 = scmp.eq.s32.totalorder %s24, 0
    %p328 = por %p326, %p327
    %p329 = scmp.ne.s32.totalorder %s315, %s316
    %p330 = scmp.eq.s32.totalorder %s25, 3
    %p331 = por %p329, %p330
    %p333 = scmp.ne.s32.totalorder %s316, %s332
    %p334 = scmp.eq.s32.totalorder %s25, 0
    %p335 = por %p333, %p334
    %p336 = scmp.le.s32.totalorder 1, %s19
    %p337 = scmp.lt.s32.totalorder %s19, 5
    %p338 = pnand %p336, %p337
    %p339 = pneg %p338
    // Predicated region
    $region9: #{model_forward.1} parent=5 // pred_check
      _
    $region10: #{model_forward.1} parent=5 // pred_check_branch
      %341 = sbr.rel (%p338) target = $region12
    $region11: #{model_forward.1} parent=5 // pred_region
      %s342 = ssub.s32 %s19, 1
      // Predicated region
      $region13: #{model_forward.1} parent=11 // pred_check
        %p343 = pneg %p92
      $region14: #{model_forward.1} parent=11 // pred_check_branch
        %345 = sbr.rel (%p343) target = $region16
      $region15: #{model_forward.1} parent=11 // pred_region
        _
      $region16: #{model_forward.1} parent=11 // pred_fallthru
        _
      // Predicated region
      $region17: #{model_forward.1} parent=11 // pred_check
        %p346 = pneg %p113
      $region18: #{model_forward.1} parent=11 // pred_check_branch
        %348 = sbr.rel (%p346) target = $region20
      $region19: #{model_forward.1} parent=11 // pred_region
        _
      $region20: #{model_forward.1} parent=11 // pred_fallthru
        _
      // Predicated region
      $region21: #{model_forward.1} parent=11 // pred_check
        %p349 = pneg %p134
      $region22: #{model_forward.1} parent=11 // pred_check_branch
        %351 = sbr.rel (%p349) target = $region24
      $region23: #{model_forward.1} parent=11 // pred_region
        _
      $region24: #{model_forward.1} parent=11 // pred_fallthru
        _
      // Predicated region
      $region25: #{model_forward.1} parent=11 // pred_check
        %p352 = pneg %p155
      $region26: #{model_forward.1} parent=11 // pred_check_branch
        %354 = sbr.rel (%p352) target = $region28
      $region27: #{model_forward.1} parent=11 // pred_region
        _
      $region28: #{model_forward.1} parent=11 // pred_fallthru
        _
      // Predicated region
      $region29: #{model_forward.1} parent=11 // pred_check
        %p355 = pneg %p176
      $region30: #{model_forward.1} parent=11 // pred_check_branch
        %357 = sbr.rel (%p355) target = $region32
      $region31: #{model_forward.1} parent=11 // pred_region
        _
      $region32: #{model_forward.1} parent=11 // pred_fallthru
        _
      // Predicated region
      $region33: #{model_forward.1} parent=11 // pred_check
        %p358 = pneg %p197
      $region34: #{model_forward.1} parent=11 // pred_check_branch
        %360 = sbr.rel (%p358) target = $region36
      $region35: #{model_forward.1} parent=11 // pred_region
        _
      $region36: #{model_forward.1} parent=11 // pred_fallthru
        _
      // Predicated region
      $region37: #{model_forward.1} parent=11 // pred_check
        %p361 = pneg %p218
      $region38: #{model_forward.1} parent=11 // pred_check_branch
        %363 = sbr.rel (%p361) target = $region40
      $region39: #{model_forward.1} parent=11 // pred_region
        _
      $region40: #{model_forward.1} parent=11 // pred_fallthru
        _
      // Predicated region
      $region41: #{model_forward.1} parent=11 // pred_check
        %p364 = pneg %p239
      $region42: #{model_forward.1} parent=11 // pred_check_branch
        %366 = sbr.rel (%p364) target = $region44
      $region43: #{model_forward.1} parent=11 // pred_region
        _
      $region44: #{model_forward.1} parent=11 // pred_fallthru
        _
      // Predicated region
      $region45: #{model_forward.1} parent=11 // pred_check
        %p367 = pneg %p260
      $region46: #{model_forward.1} parent=11 // pred_check_branch
        %369 = sbr.rel (%p367) target = $region48
      $region47: #{model_forward.1} parent=11 // pred_region
        _
      $region48: #{model_forward.1} parent=11 // pred_fallthru
        _
      // Predicated region
      $region49: #{model_forward.1} parent=11 // pred_check
        %p370 = pneg %p281
      $region50: #{model_forward.1} parent=11 // pred_check_branch
        %372 = sbr.rel (%p370) target = $region52
      $region51: #{model_forward.1} parent=11 // pred_region
        _
      $region52: #{model_forward.1} parent=11 // pred_fallthru
        _
      // Predicated region
      $region53: #{model_forward.1} parent=11 // pred_check
        %p373 = pneg %p302
      $region54: #{model_forward.1} parent=11 // pred_check_branch
        %375 = sbr.rel (%p373) target = $region56
      $region55: #{model_forward.1} parent=11 // pred_region
        _
      $region56: #{model_forward.1} parent=11 // pred_fallthru
        _
    $region12: #{model_forward.1} parent=5 // pred_fallthru
      _
    %p376 = scmp.lt.s32.totalorder %s19, 4
    // Predicated region
    $region57: #{model_forward.1} parent=5 // pred_check
      %p377 = pneg %p376
    $region58: #{model_forward.1} parent=5 // pred_check_branch
      %379 = sbr.rel (%p377) target = $region60
    $region59: #{model_forward.1} parent=5 // pred_region
      // Predicated region
      $region61: #{model_forward.1} parent=59 // pred_check
        %p380 = pneg %p39
      $region62: #{model_forward.1} parent=59 // pred_check_branch
        %382 = sbr.rel (%p380) target = $region64
      $region63: #{model_forward.1} parent=59 // pred_region
        %s383 = smul.u32 4, %s19
        %p384 = scmp.lt.s32.totalorder %s383, 15
        %s385 = scalar_select %p384, %s383, 15
        %s386 = smul.addr %s385, 8
        %s387 = scalar_lea.vmem %s0, %s386
        %s388 = smul.u32 4, %s19
      $region64: #{model_forward.1} parent=59 // pred_fallthru
        _
      // Predicated region
      $region65: #{model_forward.1} parent=59 // pred_check
        %p389 = pneg %p65
      $region66: #{model_forward.1} parent=59 // pred_check_branch
        %391 = sbr.rel (%p389) target = $region68
      $region67: #{model_forward.1} parent=59 // pred_region
        %s392 = smul.u32 4, %s19
        %p393 = scmp.lt.s32.totalorder %s392, 15
        %s394 = scalar_select %p393, %s392, 15
        %s395 = smul.addr %s394, 8
        %s396 = scalar_lea.vmem %s1, %s395
        %s397 = smul.u32 4, %s19
      $region68: #{model_forward.1} parent=59 // pred_fallthru
        _
    $region60: #{model_forward.1} parent=5 // pred_fallthru
      _
    %p398 = scmp.le.s32.totalorder 1, %s19
    %p399 = scmp.lt.s32.totalorder %s19, 5
    %p400 = pnand %p398, %p399
    %p401 = pneg %p400
    // Predicated region
    $region69: #{model_forward.1} parent=5 // pred_check
      _
    $region70: #{model_forward.1} parent=5 // pred_check_branch
      %403 = sbr.rel (%p400) target = $region72
    $region71: #{model_forward.1} parent=5 // pred_region
      %s404 = ssub.s32 %s19, 1
      %s405 = smul.u32 4, %s24
      %p406 = scmp.lt.s32.totalorder %s405, 15
      %s407 = scalar_select %p406, %s405, 15
      %s408 = smul.addr %s407, 8
      %s409 = scalar_lea.vmem %s0, %s408
      %p410 = pneg %p45
      %p411 = pneg %p42
      %s412 = smul.u32 4, %s24
      %p413 = scmp.lt.s32.totalorder %s412, 15
      %s414 = scalar_select %p413, %s412, 15
      %s415 = smul.addr %s414, 8
      %s416 = scalar_lea.vmem %s1, %s415
      %p417 = pneg %p71
      %p418 = pneg %p68
      %p419 = pneg %p92
      %p420 = pneg %p89
      %p421 = pneg %p113
      %p422 = pneg %p110
      %p423 = pneg %p134
      %p424 = pneg %p131
      %p425 = pneg %p155
      %p426 = pneg %p152
      %p427 = pneg %p176
      %p428 = pneg %p173
      %p429 = pneg %p197
      %p430 = pneg %p194
      %p431 = pneg %p218
      %p432 = pneg %p215
      %p433 = pneg %p239
      %p434 = pneg %p236
      %p435 = pneg %p260
      %p436 = pneg %p257
      %p437 = pneg %p281
      %p438 = pneg %p278
      %p439 = pneg %p302
      %p440 = pneg %p299
      %p441 = pneg %p328
      %p442 = pneg %p325
      %s443 = smul.u32 4, %s24
      %p444 = scmp.lt.s32.totalorder %s443, 15
      %s445 = scalar_select %p444, %s443, 15
      %s446 = smul.addr %s445, 8
      %s447 = scalar_lea.vmem %s13, %s446
      %s448 = smul.u32 4, %s24
      %p449 = scmp.lt.s32.totalorder %s448, 15
      %s450 = scalar_select %p449, %s448, 15
      %s451 = smul.addr %s450, 8
      %s452 = scalar_lea.vmem %s0, %s451
      %s453 = smul.u32 4, %s24
      %s454 = smul.u32 4, %s24
      %p455 = scmp.lt.s32.totalorder %s454, 15
      %s456 = scalar_select %p455, %s454, 15
      %s457 = smul.addr %s456, 8
      %s458 = scalar_lea.vmem %s1, %s457
      %s459 = smul.u32 4, %s24
      %s460 = smul.u32 4, %s24
      %p461 = scmp.lt.s32.totalorder %s460, 15
      %s462 = scalar_select %p461, %s460, 15
      %s463 = smul.addr %s462, 8
      %s464 = scalar_lea.vmem %s13, %s463
      %s465 = smul.u32 4, %s24
      %v467 = vld [vmem:[%s452] sm:$0xff]
      %v468 = vld [vmem:[%s452 + $0x8] sm:$0xff]
      %v469 = vld [vmem:[%s452 + $0x10] sm:$0xff]
      %v470 = vld [vmem:[%s452 + $0x18] sm:$0xff]
      %v471 = vld [vmem:[%s458] sm:$0xff]
      %v472 = vld [vmem:[%s458 + $0x8] sm:$0xff]
      %v473 = vld [vmem:[%s458 + $0x10] sm:$0xff]
      %v474 = vld [vmem:[%s458 + $0x18] sm:$0xff]
      %v475 = vld [vmem:[%s2] sm:$0xff]
      %v476 = vld [vmem:[%s2 + $0x8] sm:$0xff]
      %v477 = vld [vmem:[%s2 + $0x10] sm:$0xff]
      %v478 = vld [vmem:[%s2 + $0x18] sm:$0xff]
      %v479 = vld [vmem:[%s2 + $0x20] sm:$0xff]
      %v480 = vld [vmem:[%s2 + $0x28] sm:$0xff]
      %v481 = vld [vmem:[%s2 + $0x30] sm:$0xff]
      %v482 = vld [vmem:[%s2 + $0x38] sm:$0xff]
      %v483 = vld [vmem:[%s3] sm:$0xff]
      %v484 = vld [vmem:[%s3 + $0x8] sm:$0xff]
      %v485 = vld [vmem:[%s3 + $0x10] sm:$0xff]
      %v486 = vld [vmem:[%s3 + $0x18] sm:$0xff]
      %v487 = vld [vmem:[%s3 + $0x20] sm:$0xff]
      %v488 = vld [vmem:[%s3 + $0x28] sm:$0xff]
      %v489 = vld [vmem:[%s3 + $0x30] sm:$0xff]
      %v490 = vld [vmem:[%s3 + $0x38] sm:$0xff]
      %v491 = vld [vmem:[%s3 + $0x40] sm:$0x33]
      %v492 = vld [vmem:[%s3 + $0x48] sm:$0x33]
      %v493 = vld [vmem:[%s3 + $0x50] sm:$0x33]
      %v494 = vld [vmem:[%s3 + $0x58] sm:$0x33]
      %v495 = vpack.c.bf16 %v468, %v467
      %v496 = vpack.c.bf16 %v470, %v469
      %v497 = vlaneseq
      %v498 = vshrl.u32 %v497, 7
      %v499 = vsub.s32 1, %v498
      %v500 = vrot.slane %v475, %v499
      %v501 = vlaneseq
      %v502 = vshrl.u32 %v501, 7
      %v503 = vsub.s32 1, %v502
      %v504 = vrot.slane %v476, %v503
      %v505 = vlaneseq
      %v506 = vshrl.u32 %v505, 7
      %v507 = vsub.s32 1, %v506
      %v508 = vrot.slane %v477, %v507
      %v509 = vlaneseq
      %v510 = vshrl.u32 %v509, 7
      %v511 = vsub.s32 1, %v510
      %v512 = vrot.slane %v478, %v511
      %v513 = vlaneseq
      %v514 = vshrl.u32 %v513, 7
      %v515 = vsub.s32 1, %v514
      %v516 = vrot.slane %v479, %v515
      %v517 = vlaneseq
      %v518 = vshrl.u32 %v517, 7
      %v519 = vsub.s32 1, %v518
      %v520 = vrot.slane %v480, %v519
      %v521 = vlaneseq
      %v522 = vshrl.u32 %v521, 7
      %v523 = vsub.s32 1, %v522
      %v524 = vrot.slane %v481, %v523
      %v525 = vlaneseq
      %v526 = vshrl.u32 %v525, 7
      %v527 = vsub.s32 1, %v526
      %v528 = vrot.slane %v482, %v527
      %v541 = vunpack.c.l.b16 %v483
      %v542 = vunpack.c.h.b16 %v483
      %v543 = vunpack.c.l.b16 %v484
      %v544 = vunpack.c.h.b16 %v484
      %v545 = vunpack.c.l.b16 %v485
      %v546 = vunpack.c.h.b16 %v485
      %v547 = vunpack.c.l.b16 %v486
      %v548 = vunpack.c.h.b16 %v486
      %v549 = vunpack.c.l.b16 %v487
      %v550 = vunpack.c.h.b16 %v487
      %v551 = vunpack.c.l.b16 %v488
      %v552 = vunpack.c.h.b16 %v488
      %v553 = vunpack.c.l.b16 %v489
      %v554 = vunpack.c.h.b16 %v489
      %v555 = vunpack.c.l.b16 %v490
      %v556 = vunpack.c.h.b16 %v490
      %v557 = vunpack.c.l.b16 %v491
      %v558 = vunpack.c.h.b16 %v491
      %v559 = vunpack.c.l.b16 %v492
      %v560 = vunpack.c.h.b16 %v492
      %v561 = vunpack.c.l.b16 %v493
      %v562 = vunpack.c.h.b16 %v493
      %v563 = vunpack.c.l.b16 %v494
      %v564 = vunpack.c.h.b16 %v494
      %v565 = vpack.c.b16 %v549, %v541
      %v566 = vpack.c.b16 %v550, %v542
      %v567 = vpack.c.b16 %v551, %v543
      %v568 = vpack.c.b16 %v552, %v544
      %v569 = vpack.c.b16 %v553, %v545
      %v570 = vpack.c.b16 %v554, %v546
      %v571 = vpack.c.b16 %v555, %v547
      %v572 = vpack.c.b16 %v556, %v548
      %v573 = vpack.c.b16 %v557, %v557
      %v574 = vpack.c.b16 %v558, %v558
      %v575 = vpack.c.b16 %v559, %v559
      %v576 = vpack.c.b16 %v560, %v560
      %v577 = vpack.c.b16 %v561, %v561
      %v578 = vpack.c.b16 %v562, %v562
      %v579 = vpack.c.b16 %v563, %v563
      %v580 = vpack.c.b16 %v564, %v564
      %vm589 = vcmask 154624
      %v591 = vsel %vm589, %v495, 0
      %v594 = vsel %vm589, %v496, 0
      %vm596 = vcmask 1040384
      %vm597 = vcmask 1041408
      %v598 = vsel %vm596, 4294967295, 65535
      %v599 = vsel %vm597, %v598, 0
      %v601 = vand.u32 %v573, %v599
      %v604 = vand.u32 %v574, %v599
      %v607 = vand.u32 %v575, %v599
      %v610 = vand.u32 %v576, %v599
      %v613 = vand.u32 %v577, %v599
      %v616 = vand.u32 %v578, %v599
      %v619 = vand.u32 %v579, %v599
      %v622 = vand.u32 %v580, %v599
      %624 = vmatprep.subr.bf16.mxu0 %v566
      %625 = vmatpush1.bf16.msra.mxu0 %v565
      %626 = vmatprep.subr.bf16.mxu0 %v604
      %627 = vmatpush1.bf16.msra.mxu0 %v601
      %628 = vmatprep.subr.bf16.mxu0 0
      %629 = vmatpush1.bf16.msra.mxu0 0
      %630 = vmatprep.subr.bf16.mxu0 0
      %631 = vmatpush1.bf16.msra.mxu0 0
      %632 = vmatprep.subr.bf16.mxu0 0
      %633 = vmatpush1.bf16.msra.mxu0 0
      %634 = vmatprep.subr.bf16.mxu0 0
      %635 = vmatpush1.bf16.msra.mxu0 0
      %636 = vmatprep.subr.bf16.mxu0 0
      %637 = vmatpush1.bf16.msra.mxu0 0
      %638 = vmatprep.subr.bf16.mxu0 0
      %639 = vmatpush1.bf16.msra.mxu0 0
      %640 = vmatprep.subr.bf16.mxu0 0
      %641 = vmatpush1.bf16.msra.mxu0 0
      %642 = vmatprep.subr.bf16.mxu0 0
      %643 = vmatpush1.bf16.msra.mxu0 0
      %644 = vmatprep.subr.bf16.mxu0 0
      %645 = vmatpush1.bf16.msra.mxu0 0
      %646 = vmatprep.subr.bf16.mxu0 0
      %647 = vmatpush1.bf16.msra.mxu0 0
      %648 = vmatprep.subr.bf16.mxu0 0
      %649 = vmatpush1.bf16.msra.mxu0 0
      %650 = vmatprep.subr.bf16.mxu0 0
      %651 = vmatpush1.bf16.msra.mxu0 0
      %652 = vmatprep.subr.bf16.mxu0 0
      %653 = vmatpush1.bf16.msra.mxu0 0
      %654 = vmatprep.subr.bf16.mxu0 0
      %655 = vmatpush1.bf16.msra.mxu0 0
      %656 = vmatprep.mubr.bf16.mxu0 0
      %657 = vmatmul.mubr.bf16.gmra.mrb[0].mxu0 %v591
      %v658 = vpop.f32.mrb[0].mxu0
      %v659 = vadd.f32 %v500, %v658
      %v660 = vpop.f32.mrb[0].mxu0
      %v661 = vadd.f32 %v504, %v660
      %v662 = vpop.f32.mrb[0].mxu0
      %v663 = vadd.f32 %v500, %v662
      %v664 = vpop.f32.mrb[0].mxu0
      %v665 = vadd.f32 %v504, %v664
      %666 = vmatprep.mubr.bf16.mxu0 0
      %667 = vmatmul.mubr.bf16.gmra.mrb[0].mxu0 %v594
      %v668 = vpop.f32.mrb[0].mxu0
      %v669 = vadd.f32 %v500, %v668
      %v670 = vpop.f32.mrb[0].mxu0
      %v671 = vadd.f32 %v504, %v670
      %v672 = vpop.f32.mrb[0].mxu0
      %v673 = vadd.f32 %v500, %v672
      %v674 = vpop.f32.mrb[0].mxu0
      %v675 = vadd.f32 %v504, %v674
      %676 = vdwg.mxu0
      %677 = vmatprep.subr.bf16.mxu0 %v568
      %678 = vmatpush1.bf16.msra.mxu0 %v567
      %679 = vmatprep.subr.bf16.mxu0 %v610
      %680 = vmatpush1.bf16.msra.mxu0 %v607
      %681 = vmatprep.subr.bf16.mxu0 0
      %682 = vmatpush1.bf16.msra.mxu0 0
      %683 = vmatprep.subr.bf16.mxu0 0
      %684 = vmatpush1.bf16.msra.mxu0 0
      %685 = vmatprep.subr.bf16.mxu0 0
      %686 = vmatpush1.bf16.msra.mxu0 0
      %687 = vmatprep.subr.bf16.mxu0 0
      %688 = vmatpush1.bf16.msra.mxu0 0
      %689 = vmatprep.subr.bf16.mxu0 0
      %690 = vmatpush1.bf16.msra.mxu0 0
      %691 = vmatprep.subr.bf16.mxu0 0
      %692 = vmatpush1.bf16.msra.mxu0 0
      %693 = vmatprep.subr.bf16.mxu0 0
      %694 = vmatpush1.bf16.msra.mxu0 0
      %695 = vmatprep.subr.bf16.mxu0 0
      %696 = vmatpush1.bf16.msra.mxu0 0
      %697 = vmatprep.subr.bf16.mxu0 0
      %698 = vmatpush1.bf16.msra.mxu0 0
      %699 = vmatprep.subr.bf16.mxu0 0
      %700 = vmatpush1.bf16.msra.mxu0 0
      %701 = vmatprep.subr.bf16.mxu0 0
      %702 = vmatpush1.bf16.msra.mxu0 0
      %703 = vmatprep.subr.bf16.mxu0 0
      %704 = vmatpush1.bf16.msra.mxu0 0
      %705 = vmatprep.subr.bf16.mxu0 0
      %706 = vmatpush1.bf16.msra.mxu0 0
      %707 = vmatprep.subr.bf16.mxu0 0
      %708 = vmatpush1.bf16.msra.mxu0 0
      %709 = vmatprep.mubr.bf16.mxu0 0
      %710 = vmatmul.mubr.bf16.gmra.mrb[0].mxu0 %v591
      %v711 = vpop.f32.mrb[0].mxu0
      %v712 = vadd.f32 %v508, %v711
      %v713 = vpop.f32.mrb[0].mxu0
      %v714 = vadd.f32 %v512, %v713
      %v715 = vpop.f32.mrb[0].mxu0
      %v716 = vadd.f32 %v508, %v715
      %v717 = vpop.f32.mrb[0].mxu0
      %v718 = vadd.f32 %v512, %v717
      %719 = vmatprep.mubr.bf16.mxu0 0
      %720 = vmatmul.mubr.bf16.gmra.mrb[0].mxu0 %v594
      %v721 = vpop.f32.mrb[0].mxu0
      %v722 = vadd.f32 %v508, %v721
      %v723 = vpop.f32.mrb[0].mxu0
      %v724 = vadd.f32 %v512, %v723
      %v725 = vpop.f32.mrb[0].mxu0
      %v726 = vadd.f32 %v508, %v725
      %v727 = vpop.f32.mrb[0].mxu0
      %v728 = vadd.f32 %v512, %v727
      %729 = vdwg.mxu0
      %730 = vmatprep.subr.bf16.mxu0 %v570
      %731 = vmatpush1.bf16.msra.mxu0 %v569
      %732 = vmatprep.subr.bf16.mxu0 %v616
      %733 = vmatpush1.bf16.msra.mxu0 %v613
      %734 = vmatprep.subr.bf16.mxu0 0
      %735 = vmatpush1.bf16.msra.mxu0 0
      %736 = vmatprep.subr.bf16.mxu0 0
      %737 = vmatpush1.bf16.msra.mxu0 0
      %738 = vmatprep.subr.bf16.mxu0 0
      %739 = vmatpush1.bf16.msra.mxu0 0
      %740 = vmatprep.subr.bf16.mxu0 0
      %741 = vmatpush1.bf16.msra.mxu0 0
      %742 = vmatprep.subr.bf16.mxu0 0
      %743 = vmatpush1.bf16.msra.mxu0 0
      %744 = vmatprep.subr.bf16.mxu0 0
      %745 = vmatpush1.bf16.msra.mxu0 0
      %746 = vmatprep.subr.bf16.mxu0 0
      %747 = vmatpush1.bf16.msra.mxu0 0
      %748 = vmatprep.subr.bf16.mxu0 0
      %749 = vmatpush1.bf16.msra.mxu0 0
      %750 = vmatprep.subr.bf16.mxu0 0
      %751 = vmatpush1.bf16.msra.mxu0 0
      %752 = vmatprep.subr.bf16.mxu0 0
      %753 = vmatpush1.bf16.msra.mxu0 0
      %754 = vmatprep.subr.bf16.mxu0 0
      %755 = vmatpush1.bf16.msra.mxu0 0
      %756 = vmatprep.subr.bf16.mxu0 0
      %757 = vmatpush1.bf16.msra.mxu0 0
      %758 = vmatprep.subr.bf16.mxu0 0
      %759 = vmatpush1.bf16.msra.mxu0 0
      %760 = vmatprep.subr.bf16.mxu0 0
      %761 = vmatpush1.bf16.msra.mxu0 0
      %762 = vmatprep.mubr.bf16.mxu0 0
      %763 = vmatmul.mubr.bf16.gmra.mrb[0].mxu0 %v591
      %v764 = vpop.f32.mrb[0].mxu0
      %v765 = vadd.f32 %v516, %v764
      %v766 = vpop.f32.mrb[0].mxu0
      %v767 = vadd.f32 %v520, %v766
      %v768 = vpop.f32.mrb[0].mxu0
      %v769 = vadd.f32 %v516, %v768
      %v770 = vpop.f32.mrb[0].mxu0
      %v771 = vadd.f32 %v520, %v770
      %772 = vmatprep.mubr.bf16.mxu0 0
      %773 = vmatmul.mubr.bf16.gmra.mrb[0].mxu0 %v594
      %v774 = vpop.f32.mrb[0].mxu0
      %v775 = vadd.f32 %v516, %v774
      %v776 = vpop.f32.mrb[0].mxu0
      %v777 = vadd.f32 %v520, %v776
      %v778 = vpop.f32.mrb[0].mxu0
      %v779 = vadd.f32 %v516, %v778
      %v780 = vpop.f32.mrb[0].mxu0
      %v781 = vadd.f32 %v520, %v780
      %782 = vdwg.mxu0
      %783 = vmatprep.subr.bf16.mxu0 %v572
      %784 = vmatpush1.bf16.msra.mxu0 %v571
      %785 = vmatprep.subr.bf16.mxu0 %v622
      %786 = vmatpush1.bf16.msra.mxu0 %v619
      %787 = vmatprep.subr.bf16.mxu0 0
      %788 = vmatpush1.bf16.msra.mxu0 0
      %789 = vmatprep.subr.bf16.mxu0 0
      %790 = vmatpush1.bf16.msra.mxu0 0
      %791 = vmatprep.subr.bf16.mxu0 0
      %792 = vmatpush1.bf16.msra.mxu0 0
      %793 = vmatprep.subr.bf16.mxu0 0
      %794 = vmatpush1.bf16.msra.mxu0 0
      %795 = vmatprep.subr.bf16.mxu0 0
      %796 = vmatpush1.bf16.msra.mxu0 0
      %797 = vmatprep.subr.bf16.mxu0 0
      %798 = vmatpush1.bf16.msra.mxu0 0
      %799 = vmatprep.subr.bf16.mxu0 0
      %800 = vmatpush1.bf16.msra.mxu0 0
      %801 = vmatprep.subr.bf16.mxu0 0
      %802 = vmatpush1.bf16.msra.mxu0 0
      %803 = vmatprep.subr.bf16.mxu0 0
      %804 = vmatpush1.bf16.msra.mxu0 0
      %805 = vmatprep.subr.bf16.mxu0 0
      %806 = vmatpush1.bf16.msra.mxu0 0
      %807 = vmatprep.subr.bf16.mxu0 0
      %808 = vmatpush1.bf16.msra.mxu0 0
      %809 = vmatprep.subr.bf16.mxu0 0
      %810 = vmatpush1.bf16.msra.mxu0 0
      %811 = vmatprep.subr.bf16.mxu0 0
      %812 = vmatpush1.bf16.msra.mxu0 0
      %813 = vmatprep.subr.bf16.mxu0 0
      %814 = vmatpush1.bf16.msra.mxu0 0
      %815 = vmatprep.mubr.bf16.mxu0 0
      %816 = vmatmul.mubr.bf16.gmra.mrb[0].mxu0 %v591
      %v817 = vpop.f32.mrb[0].mxu0
      %v818 = vadd.f32 %v524, %v817
      %v819 = vpop.f32.mrb[0].mxu0
      %v820 = vadd.f32 %v528, %v819
      %v821 = vpop.f32.mrb[0].mxu0
      %v822 = vadd.f32 %v524, %v821
      %v823 = vpop.f32.mrb[0].mxu0
      %v824 = vadd.f32 %v528, %v823
      %825 = vmatprep.mubr.bf16.mxu0 0
      %826 = vmatmul.mubr.bf16.gmra.mrb[0].mxu0 %v594
      %v827 = vpop.f32.mrb[0].mxu0
      %v828 = vadd.f32 %v524, %v827
      %v829 = vpop.f32.mrb[0].mxu0
      %v830 = vadd.f32 %v528, %v829
      %v831 = vpop.f32.mrb[0].mxu0
      %v832 = vadd.f32 %v524, %v831
      %v833 = vpop.f32.mrb[0].mxu0
      %v834 = vadd.f32 %v528, %v833
      %835 = vdwg.mxu0
      %v836 = vxor.u32 %v659, 2147483648
      %v837 = vxor.u32 %v661, 2147483648
      %v838 = vxor.u32 %v663, 2147483648
      %v839 = vxor.u32 %v665, 2147483648
      %v840 = vxor.u32 %v669, 2147483648
      %v841 = vxor.u32 %v671, 2147483648
      %v842 = vxor.u32 %v673, 2147483648
      %v843 = vxor.u32 %v675, 2147483648
      %v844 = vmul.f32 %v836, 1.442695
      %v845 = vpow.pop %v844
      %v846 = vmul.f32 %v837, 1.442695
      %v847 = vpow.pop %v846
      %v848 = vmul.f32 %v838, 1.442695
      %v849 = vpow.pop %v848
      %v850 = vmul.f32 %v839, 1.442695
      %v851 = vpow.pop %v850
      %v852 = vmul.f32 %v840, 1.442695
      %v853 = vpow.pop %v852
      %v854 = vmul.f32 %v841, 1.442695
      %v855 = vpow.pop %v854
      %v856 = vmul.f32 %v842, 1.442695
      %v857 = vpow.pop %v856
      %v858 = vmul.f32 %v843, 1.442695
      %v859 = vpow.pop %v858
      %v860 = vadd.f32 %v845, 1.0
      %v861 = vadd.f32 %v847, 1.0
      %v862 = vadd.f32 %v849, 1.0
      %v863 = vadd.f32 %v851, 1.0
      %v864 = vadd.f32 %v853, 1.0
      %v865 = vadd.f32 %v855, 1.0
      %v866 = vadd.f32 %v857, 1.0
      %v867 = vadd.f32 %v859, 1.0
      %v868 = vrcp.pop %v860
      %v869 = vmul.f32 1.0, %v868
      %v870 = vrcp.pop %v861
      %v871 = vmul.f32 1.0, %v870
      %v872 = vrcp.pop %v862
      %v873 = vmul.f32 1.0, %v872
      %v874 = vrcp.pop %v863
      %v875 = vmul.f32 1.0, %v874
      %v876 = vrcp.pop %v864
      %v877 = vmul.f32 1.0, %v876
      %v878 = vrcp.pop %v865
      %v879 = vmul.f32 1.0, %v878
      %v880 = vrcp.pop %v866
      %v881 = vmul.f32 1.0, %v880
      %v882 = vrcp.pop %v867
      %v883 = vmul.f32 1.0, %v882
      %v884 = vxor.u32 %v765, 2147483648
      %v885 = vxor.u32 %v769, 2147483648
      %v886 = vxor.u32 %v775, 2147483648
      %v887 = vxor.u32 %v779, 2147483648
      %v888 = vmul.f32 %v884, 1.442695
      %v889 = vpow.pop %v888
      %v890 = vmul.f32 %v885, 1.442695
      %v891 = vpow.pop %v890
      %v892 = vmul.f32 %v886, 1.442695
      %v893 = vpow.pop %v892
      %v894 = vmul.f32 %v887, 1.442695
      %v895 = vpow.pop %v894
      %v896 = vadd.f32 %v889, 1.0
      %v897 = vadd.f32 %v891, 1.0
      %v898 = vadd.f32 %v893, 1.0
      %v899 = vadd.f32 %v895, 1.0
      %v900 = vrcp.pop %v896
      %v901 = vmul.f32 1.0, %v900
      %v902 = vrcp.pop %v897
      %v903 = vmul.f32 1.0, %v902
      %v904 = vrcp.pop %v898
      %v905 = vmul.f32 1.0, %v904
      %v906 = vrcp.pop %v899
      %v907 = vmul.f32 1.0, %v906
      %v908 = vxor.u32 %v818, 2147483648
      %v909 = vxor.u32 %v822, 2147483648
      %v910 = vxor.u32 %v828, 2147483648
      %v911 = vxor.u32 %v832, 2147483648
      %v912 = vmul.f32 %v908, 1.442695
      %v913 = vpow.pop %v912
      %v914 = vmul.f32 %v909, 1.442695
      %v915 = vpow.pop %v914
      %v916 = vmul.f32 %v910, 1.442695
      %v917 = vpow.pop %v916
      %v918 = vmul.f32 %v911, 1.442695
      %v919 = vpow.pop %v918
      %v920 = vadd.f32 %v913, 1.0
      %v921 = vadd.f32 %v915, 1.0
      %v922 = vadd.f32 %v917, 1.0
      %v923 = vadd.f32 %v919, 1.0
      %v924 = vrcp.pop %v920
      %v925 = vmul.f32 1.0, %v924
      %v926 = vrcp.pop %v921
      %v927 = vmul.f32 1.0, %v926
      %v928 = vrcp.pop %v922
      %v929 = vmul.f32 1.0, %v928
      %v930 = vrcp.pop %v923
      %v931 = vmul.f32 1.0, %v930
      %v932 = vxor.u32 %v820, 2147483648
      %v933 = vxor.u32 %v824, 2147483648
      %v934 = vxor.u32 %v830, 2147483648
      %v935 = vxor.u32 %v834, 2147483648
      %v936 = vmul.f32 %v932, 1.442695
      %v937 = vpow.pop %v936
      %v938 = vmul.f32 %v933, 1.442695
      %v939 = vpow.pop %v938
      %v940 = vmul.f32 %v934, 1.442695
      %v941 = vpow.pop %v940
      %v942 = vmul.f32 %v935, 1.442695
      %v943 = vpow.pop %v942
      %v944 = vadd.f32 %v937, 1.0
      %v945 = vadd.f32 %v939, 1.0
      %v946 = vadd.f32 %v941, 1.0
      %v947 = vadd.f32 %v943, 1.0
      %v948 = vrcp.pop %v944
      %v949 = vmul.f32 1.0, %v948
      %v950 = vrcp.pop %v945
      %v951 = vmul.f32 1.0, %v950
      %v952 = vrcp.pop %v946
      %v953 = vmul.f32 1.0, %v952
      %v954 = vrcp.pop %v947
      %v955 = vmul.f32 1.0, %v954
      %v956 = vld [vmem:[%s4] sm:$0xff]
      %v957 = vld [vmem:[%s4 + $0x8] sm:$0xff]
      %v958 = vpack.c.bf16 %v472, %v471
      %v959 = vpack.c.bf16 %v474, %v473
      %v960 = vlaneseq
      %v961 = vshrl.u32 %v960, 7
      %v962 = vsub.s32 0, %v961
      %v963 = vrot.slane %v475, %v962
      %v964 = vlaneseq
      %v965 = vshrl.u32 %v964, 7
      %v966 = vsub.s32 0, %v965
      %v967 = vrot.slane %v476, %v966
      %v970 = vunpack.c.l.b16 %v956
      %v971 = vunpack.c.h.b16 %v956
      %v972 = vunpack.c.l.b16 %v957
      %v973 = vunpack.c.h.b16 %v957
      %v974 = vpack.c.b16 %v972, %v970
      %v975 = vpack.c.b16 %v973, %v971
      %vm978 = vcmask 130048
      %v980 = vsel %vm978, %v958, 0
      %v983 = vsel %vm978, %v959, 0
      %985 = vmatprep.subr.bf16.mxu0 %v975
      %986 = vmatpush1.bf16.msra.mxu0 %v974
      %987 = vmatprep.subr.bf16.mxu0 0
      %988 = vmatpush1.bf16.msra.mxu0 0
      %989 = vmatprep.subr.bf16.mxu0 0
      %990 = vmatpush1.bf16.msra.mxu0 0
      %991 = vmatprep.subr.bf16.mxu0 0
      %992 = vmatpush1.bf16.msra.mxu0 0
      %993 = vmatprep.subr.bf16.mxu0 0
      %994 = vmatpush1.bf16.msra.mxu0 0
      %995 = vmatprep.subr.bf16.mxu0 0
      %996 = vmatpush1.bf16.msra.mxu0 0
      %997 = vmatprep.subr.bf16.mxu0 0
      %998 = vmatpush1.bf16.msra.mxu0 0
      %999 = vmatprep.subr.bf16.mxu0 0
      %1000 = vmatpush1.bf16.msra.mxu0 0
      %1001 = vmatprep.subr.bf16.mxu0 0
      %1002 = vmatpush1.bf16.msra.mxu0 0
      %1003 = vmatprep.subr.bf16.mxu0 0
      %1004 = vmatpush1.bf16.msra.mxu0 0
      %1005 = vmatprep.subr.bf16.mxu0 0
      %1006 = vmatpush1.bf16.msra.mxu0 0
      %1007 = vmatprep.subr.bf16.mxu0 0
      %1008 = vmatpush1.bf16.msra.mxu0 0
      %1009 = vmatprep.subr.bf16.mxu0 0
      %1010 = vmatpush1.bf16.msra.mxu0 0
      %1011 = vmatprep.subr.bf16.mxu0 0
      %1012 = vmatpush1.bf16.msra.mxu0 0
      %1013 = vmatprep.subr.bf16.mxu0 0
      %1014 = vmatpush1.bf16.msra.mxu0 0
      %1015 = vmatprep.subr.bf16.mxu0 0
      %1016 = vmatpush1.bf16.msra.mxu0 0
      %1017 = vmatprep.mubr.bf16.mxu0 0
      %1018 = vmatmul.mubr.bf16.gmra.mrb[0].mxu0 %v980
      %v1019 = vpop.f32.mrb[0].mxu0
      %v1020 = vadd.f32 %v963, %v1019
      %v1021 = vpop.f32.mrb[0].mxu0
      %v1022 = vadd.f32 %v967, %v1021
      %v1023 = vpop.f32.mrb[0].mxu0
      %v1024 = vadd.f32 %v963, %v1023
      %v1025 = vpop.f32.mrb[0].mxu0
      %v1026 = vadd.f32 %v967, %v1025
      %1027 = vmatprep.mubr.bf16.mxu0 0
      %1028 = vmatmul.mubr.bf16.gmra.mrb[0].mxu0 %v983
      %v1029 = vpop.f32.mrb[0].mxu0
      %v1030 = vadd.f32 %v963, %v1029
      %v1031 = vpop.f32.mrb[0].mxu0
      %v1032 = vadd.f32 %v967, %v1031
      %v1033 = vpop.f32.mrb[0].mxu0
      %v1034 = vadd.f32 %v963, %v1033
      %v1035 = vpop.f32.mrb[0].mxu0
      %v1036 = vadd.f32 %v967, %v1035
      %1037 = vdwg.mxu0
      %v1038 = vmul.f32 %v1020, %v869
      %v1039 = vmul.f32 %v1022, %v871
      %v1040 = vmul.f32 %v1024, %v873
      %v1041 = vmul.f32 %v1026, %v875
      %v1042 = vmul.f32 %v1030, %v877
      %v1043 = vmul.f32 %v1032, %v879
      %v1044 = vmul.f32 %v1034, %v881
      %v1045 = vmul.f32 %v1036, %v883
      %v1046 = vadd.f32 %v1038, %v712
      %v1047 = vadd.f32 %v1039, %v714
      %v1048 = vadd.f32 %v1040, %v716
      %v1049 = vadd.f32 %v1041, %v718
      %v1050 = vadd.f32 %v1042, %v722
      %v1051 = vadd.f32 %v1043, %v724
      %v1052 = vadd.f32 %v1044, %v726
      %v1053 = vadd.f32 %v1045, %v728
      %v1054 = vlaneseq
      %v1055 = vshrl.u32 %v1054, 7
      %v1056 = vsub.s32 5, %v1055
      %v1057 = vrot.slane %v475, %v1056
      %v1058 = vlaneseq
      %v1059 = vshrl.u32 %v1058, 7
      %v1060 = vsub.s32 5, %v1059
      %v1061 = vrot.slane %v476, %v1060
      %v1062 = vadd.f32 %v1046, %v1057
      %v1063 = vadd.f32 %v1047, %v1061
      %v1064 = vadd.f32 %v1048, %v1057
      %v1065 = vadd.f32 %v1049, %v1061
      %v1066 = vadd.f32 %v1050, %v1057
      %v1067 = vadd.f32 %v1051, %v1061
      %v1068 = vadd.f32 %v1052, %v1057
      %v1069 = vadd.f32 %v1053, %v1061
      %v1070 = vlaneseq
      %v1071 = vshrl.u32 %v1070, 7
      %v1072 = vadd.s32 %v1071, 8
      %v1073 = vadd.s32 %v1071, 16
      %v1074 = vadd.s32 %v1071, 24
      %v1075 = vadd.s32 %v1071, 32
      %v1076 = vadd.s32 %v1071, 40
      %v1077 = vadd.s32 %v1071, 48
      %v1078 = vadd.s32 %v1071, 56
      %v1079 = vadd.s32 %v1071, 64
      %v1080 = vadd.s32 %v1071, 72
      %v1081 = vadd.s32 %v1071, 80
      %v1082 = vadd.s32 %v1071, 88
      %v1083 = vadd.s32 %v1071, 96
      %v1084 = vadd.s32 %v1071, 104
      %v1085 = vadd.s32 %v1071, 112
      %v1086 = vadd.s32 %v1071, 120
      %v1087 = vlaneseq
      %v1088 = vand.u32 %v1087, 127
      %v1089 = vadd.s32 %v1088, 128
      %v1090 = vshra.s32 %v1071, 5
      %v1091 = vshra.s32 %v1072, 5
      %v1092 = vshra.s32 %v1073, 5
      %v1093 = vshra.s32 %v1074, 5
      %v1094 = vshra.s32 %v1075, 5
      %v1095 = vshra.s32 %v1076, 5
      %v1096 = vshra.s32 %v1077, 5
      %v1097 = vshra.s32 %v1078, 5
      %v1098 = vshra.s32 %v1079, 5
      %v1099 = vshra.s32 %v1080, 5
      %v1100 = vshra.s32 %v1081, 5
      %v1101 = vshra.s32 %v1082, 5
      %v1102 = vshra.s32 %v1083, 5
      %v1103 = vshra.s32 %v1084, 5
      %v1104 = vshra.s32 %v1085, 5
      %v1105 = vshra.s32 %v1086, 5
      %v1106 = vshra.s32 %v1088, 6
      %v1107 = vshra.s32 %v1089, 6
      %vm1108 = vcmp.eq.s32.totalorder %v1090, %v1106
      %vm1109 = vcmp.eq.s32.totalorder %v1090, %v1107
      %vm1110 = vcmp.eq.s32.totalorder %v1091, %v1106
      %vm1111 = vcmp.eq.s32.totalorder %v1091, %v1107
      %vm1112 = vcmp.eq.s32.totalorder %v1092, %v1106
      %vm1113 = vcmp.eq.s32.totalorder %v1092, %v1107
      %vm1114 = vcmp.eq.s32.totalorder %v1093, %v1106
      %vm1115 = vcmp.eq.s32.totalorder %v1093, %v1107
      %vm1116 = vcmp.eq.s32.totalorder %v1094, %v1106
      %vm1117 = vcmp.eq.s32.totalorder %v1094, %v1107
      %vm1118 = vcmp.eq.s32.totalorder %v1095, %v1106
      %vm1119 = vcmp.eq.s32.totalorder %v1095, %v1107
      %vm1120 = vcmp.eq.s32.totalorder %v1096, %v1106
      %vm1121 = vcmp.eq.s32.totalorder %v1096, %v1107
      %vm1122 = vcmp.eq.s32.totalorder %v1097, %v1106
      %vm1123 = vcmp.eq.s32.totalorder %v1097, %v1107
      %vm1124 = vcmp.eq.s32.totalorder %v1098, %v1106
      %vm1125 = vcmp.eq.s32.totalorder %v1098, %v1107
      %vm1126 = vcmp.eq.s32.totalorder %v1099, %v1106
      %vm1127 = vcmp.eq.s32.totalorder %v1099, %v1107
      %vm1128 = vcmp.eq.s32.totalorder %v1100, %v1106
      %vm1129 = vcmp.eq.s32.totalorder %v1100, %v1107
      %vm1130 = vcmp.eq.s32.totalorder %v1101, %v1106
      %vm1131 = vcmp.eq.s32.totalorder %v1101, %v1107
      %vm1132 = vcmp.eq.s32.totalorder %v1102, %v1106
      %vm1133 = vcmp.eq.s32.totalorder %v1102, %v1107
      %vm1134 = vcmp.eq.s32.totalorder %v1103, %v1106
      %vm1135 = vcmp.eq.s32.totalorder %v1103, %v1107
      %vm1136 = vcmp.eq.s32.totalorder %v1104, %v1106
      %vm1137 = vcmp.eq.s32.totalorder %v1104, %v1107
      %vm1138 = vcmp.eq.s32.totalorder %v1105, %v1106
      %vm1139 = vcmp.eq.s32.totalorder %v1105, %v1107
      %v1140 = vsel %vm1108, 1.0, 0.0
      %v1141 = vsel %vm1109, 1.0, 0.0
      %v1142 = vsel %vm1110, 1.0, 0.0
      %v1143 = vsel %vm1111, 1.0, 0.0
      %v1144 = vsel %vm1112, 1.0, 0.0
      %v1145 = vsel %vm1113, 1.0, 0.0
      %v1146 = vsel %vm1114, 1.0, 0.0
      %v1147 = vsel %vm1115, 1.0, 0.0
      %v1148 = vsel %vm1116, 1.0, 0.0
      %v1149 = vsel %vm1117, 1.0, 0.0
      %v1150 = vsel %vm1118, 1.0, 0.0
      %v1151 = vsel %vm1119, 1.0, 0.0
      %v1152 = vsel %vm1120, 1.0, 0.0
      %v1153 = vsel %vm1121, 1.0, 0.0
      %v1154 = vsel %vm1122, 1.0, 0.0
      %v1155 = vsel %vm1123, 1.0, 0.0
      %v1156 = vsel %vm1124, 1.0, 0.0
      %v1157 = vsel %vm1125, 1.0, 0.0
      %v1158 = vsel %vm1126, 1.0, 0.0
      %v1159 = vsel %vm1127, 1.0, 0.0
      %v1160 = vsel %vm1128, 1.0, 0.0
      %v1161 = vsel %vm1129, 1.0, 0.0
      %v1162 = vsel %vm1130, 1.0, 0.0
      %v1163 = vsel %vm1131, 1.0, 0.0
      %v1164 = vsel %vm1132, 1.0, 0.0
      %v1165 = vsel %vm1133, 1.0, 0.0
      %v1166 = vsel %vm1134, 1.0, 0.0
      %v1167 = vsel %vm1135, 1.0, 0.0
      %v1168 = vsel %vm1136, 1.0, 0.0
      %v1169 = vsel %vm1137, 1.0, 0.0
      %v1170 = vsel %vm1138, 1.0, 0.0
      %v1171 = vsel %vm1139, 1.0, 0.0
      %v1172 = vshra.s32 %v1088, 5
      %vm1173 = vcmp.eq.s32.totalorder %v1090, %v1172
      %vm1174 = vcmp.eq.s32.totalorder %v1091, %v1172
      %vm1175 = vcmp.eq.s32.totalorder %v1092, %v1172
      %vm1176 = vcmp.eq.s32.totalorder %v1093, %v1172
      %vm1177 = vcmp.eq.s32.totalorder %v1094, %v1172
      %vm1178 = vcmp.eq.s32.totalorder %v1095, %v1172
      %vm1179 = vcmp.eq.s32.totalorder %v1096, %v1172
      %vm1180 = vcmp.eq.s32.totalorder %v1097, %v1172
      %vm1181 = vcmp.eq.s32.totalorder %v1098, %v1172
      %vm1182 = vcmp.eq.s32.totalorder %v1099, %v1172
      %vm1183 = vcmp.eq.s32.totalorder %v1100, %v1172
      %vm1184 = vcmp.eq.s32.totalorder %v1101, %v1172
      %vm1185 = vcmp.eq.s32.totalorder %v1102, %v1172
      %vm1186 = vcmp.eq.s32.totalorder %v1103, %v1172
      %vm1187 = vcmp.eq.s32.totalorder %v1104, %v1172
      %vm1188 = vcmp.eq.s32.totalorder %v1105, %v1172
      %v1189 = vsel %vm1173, 1.0, 0.0
      %v1190 = vsel %vm1174, 1.0, 0.0
      %v1191 = vsel %vm1175, 1.0, 0.0
      %v1192 = vsel %vm1176, 1.0, 0.0
      %v1193 = vsel %vm1177, 1.0, 0.0
      %v1194 = vsel %vm1178, 1.0, 0.0
      %v1195 = vsel %vm1179, 1.0, 0.0
      %v1196 = vsel %vm1180, 1.0, 0.0
      %v1197 = vsel %vm1181, 1.0, 0.0
      %v1198 = vsel %vm1182, 1.0, 0.0
      %v1199 = vsel %vm1183, 1.0, 0.0
      %v1200 = vsel %vm1184, 1.0, 0.0
      %v1201 = vsel %vm1185, 1.0, 0.0
      %v1202 = vsel %vm1186, 1.0, 0.0
      %v1203 = vsel %vm1187, 1.0, 0.0
      %v1204 = vsel %vm1188, 1.0, 0.0
      %v1205 = vpack.c.bf16 %v1190, %v1189
      %v1206 = vpack.c.bf16 %v1192, %v1191
      %v1207 = vpack.c.bf16 %v1194, %v1193
      %v1208 = vpack.c.bf16 %v1196, %v1195
      %v1209 = vpack.c.bf16 %v1198, %v1197
      %v1210 = vpack.c.bf16 %v1200, %v1199
      %v1211 = vpack.c.bf16 %v1202, %v1201
      %v1212 = vpack.c.bf16 %v1204, %v1203
      %v1213 = vshra.s32 %v1071, 2
      %v1214 = vshra.s32 %v1072, 2
      %v1215 = vshra.s32 %v1073, 2
      %v1216 = vshra.s32 %v1074, 2
      %v1217 = vand.u32 %v1088, 31
      %v1218 = vshra.s32 %v1217, 2
      %vm1219 = vcmp.eq.s32.totalorder %v1213, %v1218
      %vm1220 = vcmp.eq.s32.totalorder %v1214, %v1218
      %vm1221 = vcmp.eq.s32.totalorder %v1215, %v1218
      %vm1222 = vcmp.eq.s32.totalorder %v1216, %v1218
      %v1223 = vsel %vm1219, 0.0, -1e+09
      %v1224 = vsel %vm1220, 0.0, -1e+09
      %v1225 = vsel %vm1221, 0.0, -1e+09
      %v1226 = vsel %vm1222, 0.0, -1e+09
      %v1227 = vld [vmem:[%s12] sm:$0xff]
      %v1228 = vld [vmem:[%s12 + $0x8] sm:$0xff]
      %v1229 = vld [vmem:[%s12 + $0x10] sm:$0xff]
      %v1230 = vld [vmem:[%s12 + $0x18] sm:$0xff]
      %v1231 = vld [vmem:[%s12 + $0x20] sm:$0xff]
      %v1232 = vld [vmem:[%s12 + $0x28] sm:$0xff]
      %v1233 = vld [vmem:[%s8] sm:$0xff]
      %v1234 = vld [vmem:[%s8 + $0x8] sm:$0xff]
      %v1235 = vld [vmem:[%s8 + $0x10] sm:$0xff]
      %v1236 = vld [vmem:[%s8 + $0x18] sm:$0xff]
      %v1237 = vld [vmem:[%s8 + $0x20] sm:$0xff]
      %v1238 = vld [vmem:[%s8 + $0x28] sm:$0xff]
      %v1239 = vld [vmem:[%s8 + $0x30] sm:$0xff]
      %v1240 = vld [vmem:[%s8 + $0x38] sm:$0xff]
      %v1241 = vld [vmem:[%s8 + $0x40] sm:$0xff]
      %v1242 = vld [vmem:[%s8 + $0x48] sm:$0xff]
      %v1243 = vld [vmem:[%s8 + $0x50] sm:$0xff]
      %v1244 = vld [vmem:[%s8 + $0x58] sm:$0xff]
      %v1245 = vld [vmem:[%s8 + $0x60] sm:$0xff]
      %v1246 = vld [vmem:[%s8 + $0x68] sm:$0xff]
      %v1247 = vld [vmem:[%s8 + $0x70] sm:$0xff]
      %v1248 = vld [vmem:[%s8 + $0x78] sm:$0xff]
      %v1249 = vld [vmem:[%s8 + $0x80] sm:$0xff]
      %v1250 = vld [vmem:[%s8 + $0x88] sm:$0xff]
      %v1251 = vld [vmem:[%s8 + $0x90] sm:$0xff]
      %v1252 = vld [vmem:[%s8 + $0x98] sm:$0xff]
      %v1253 = vld [vmem:[%s8 + $0xa0] sm:$0xff]
      %v1254 = vld [vmem:[%s8 + $0xa8] sm:$0xff]
      %v1255 = vld [vmem:[%s8 + $0xb0] sm:$0xff]
      %v1256 = vld [vmem:[%s8 + $0xb8] sm:$0xff]
      %v1257 = vld [vmem:[%s8 + $0xc0] sm:$0xff]
      %v1258 = vld [vmem:[%s8 + $0xc8] sm:$0xff]
      %v1259 = vld [vmem:[%s8 + $0xd0] sm:$0xff]
      %v1260 = vld [vmem:[%s8 + $0xd8] sm:$0xff]
      %v1261 = vld [vmem:[%s8 + $0xe0] sm:$0xff]
      %v1262 = vld [vmem:[%s8 + $0xe8] sm:$0xff]
      %v1263 = vld [vmem:[%s8 + $0xf0] sm:$0xff]
      %v1264 = vld [vmem:[%s8 + $0xf8] sm:$0xff]
      %v1265 = vld [vmem:[%s8 + $0x100] sm:$0xff]
      %v1266 = vld [vmem:[%s8 + $0x108] sm:$0xff]
      %v1267 = vld [vmem:[%s8 + $0x110] sm:$0xff]
      %v1268 = vld [vmem:[%s8 + $0x118] sm:$0xff]
      %v1269 = vld [vmem:[%s8 + $0x120] sm:$0xff]
      %v1270 = vld [vmem:[%s8 + $0x128] sm:$0xff]
      %v1271 = vld [vmem:[%s8 + $0x130] sm:$0xff]
      %v1272 = vld [vmem:[%s8 + $0x138] sm:$0xff]
      %v1273 = vld [vmem:[%s8 + $0x140] sm:$0xff]
      %v1274 = vld [vmem:[%s8 + $0x148] sm:$0xff]
      %v1275 = vld [vmem:[%s8 + $0x150] sm:$0xff]
      %v1276 = vld [vmem:[%s8 + $0x158] sm:$0xff]
      %v1277 = vld [vmem:[%s8 + $0x160] sm:$0xff]
      %v1278 = vld [vmem:[%s8 + $0x168] sm:$0xff]
      %v1279 = vld [vmem:[%s8 + $0x170] sm:$0xff]
      %v1280 = vld [vmem:[%s8 + $0x178] sm:$0xff]
      %v1281 = vld [vmem:[%s8 + $0x180] sm:$0xff]
      %v1282 = vld [vmem:[%s8 + $0x188] sm:$0xff]
      %v1283 = vld [vmem:[%s8 + $0x190] sm:$0xff]
      %v1284 = vld [vmem:[%s8 + $0x198] sm:$0xff]
      %v1285 = vld [vmem:[%s8 + $0x1a0] sm:$0xff]
      %v1286 = vld [vmem:[%s8 + $0x1a8] sm:$0xff]
      %v1287 = vld [vmem:[%s8 + $0x1b0] sm:$0xff]
      %v1288 = vld [vmem:[%s8 + $0x1b8] sm:$0xff]
      %v1289 = vld [vmem:[%s8 + $0x1c0] sm:$0xff]
      %v1290 = vld [vmem:[%s8 + $0x1c8] sm:$0xff]
      %v1291 = vld [vmem:[%s8 + $0x1d0] sm:$0xff]
      %v1292 = vld [vmem:[%s8 + $0x1d8] sm:$0xff]
      %v1293 = vld [vmem:[%s8 + $0x1e0] sm:$0xff]
      %v1294 = vld [vmem:[%s8 + $0x1e8] sm:$0xff]
      %v1295 = vld [vmem:[%s8 + $0x1f0] sm:$0xff]
      %v1296 = vld [vmem:[%s8 + $0x1f8] sm:$0xff]
      %v1297 = vld [vmem:[%s8 + $0x200] sm:$0xff]
      %v1298 = vld [vmem:[%s8 + $0x208] sm:$0xff]
      %v1299 = vld [vmem:[%s8 + $0x210] sm:$0xff]
      %v1300 = vld [vmem:[%s8 + $0x218] sm:$0xff]
      %v1301 = vld [vmem:[%s8 + $0x220] sm:$0xff]
      %v1302 = vld [vmem:[%s8 + $0x228] sm:$0xff]
      %v1303 = vld [vmem:[%s8 + $0x230] sm:$0xff]
      %v1304 = vld [vmem:[%s8 + $0x238] sm:$0xff]
      %v1305 = vld [vmem:[%s8 + $0x240] sm:$0xff]
      %v1306 = vld [vmem:[%s8 + $0x248] sm:$0xff]
      %v1307 = vld [vmem:[%s8 + $0x250] sm:$0xff]
      %v1308 = vld [vmem:[%s8 + $0x258] sm:$0xff]
      %v1309 = vld [vmem:[%s8 + $0x260] sm:$0xff]
      %v1310 = vld [vmem:[%s8 + $0x268] sm:$0xff]
      %v1311 = vld [vmem:[%s8 + $0x270] sm:$0xff]
      %v1312 = vld [vmem:[%s8 + $0x278] sm:$0xff]
      %v1313 = vld [vmem:[%s8 + $0x280] sm:$0xff]
      %v1314 = vld [vmem:[%s8 + $0x288] sm:$0xff]
      %v1315 = vld [vmem:[%s8 + $0x290] sm:$0xff]
      %v1316 = vld [vmem:[%s8 + $0x298] sm:$0xff]
      %v1317 = vld [vmem:[%s8 + $0x2a0] sm:$0xff]
      %v1318 = vld [vmem:[%s8 + $0x2a8] sm:$0xff]
      %v1319 = vld [vmem:[%s8 + $0x2b0] sm:$0xff]
      %v1320 = vld [vmem:[%s8 + $0x2b8] sm:$0xff]
      %v1321 = vld [vmem:[%s8 + $0x2c0] sm:$0xff]
      %v1322 = vld [vmem:[%s8 + $0x2c8] sm:$0xff]
      %v1323 = vld [vmem:[%s8 + $0x2d0] sm:$0xff]
      %v1324 = vld [vmem:[%s8 + $0x2d8] sm:$0xff]
      %v1325 = vld [vmem:[%s8 + $0x2e0] sm:$0xff]
      %v1326 = vld [vmem:[%s8 + $0x2e8] sm:$0xff]
      %v1327 = vld [vmem:[%s8 + $0x2f0] sm:$0xff]
      %v1328 = vld [vmem:[%s8 + $0x2f8] sm:$0xff]
      %v1329 = vpack.c.bf16 %v1064, %v1062
      %v1330 = vpack.c.bf16 %v1065, %v1063
      %v1331 = vpack.c.bf16 %v1068, %v1066
      %v1332 = vpack.c.bf16 %v1069, %v1067
      %v1333 = vlaneseq
      %v1334 = vshrl.u32 %v1333, 7
      %v1335 = vsub.s32 0, %v1334
      %v1336 = vrot.slane %v1227, %v1335
      %v1337 = vlaneseq
      %v1338 = vshrl.u32 %v1337, 7
      %v1339 = vsub.s32 0, %v1338
      %v1340 = vrot.slane %v1228, %v1339
      %v1341 = vlaneseq
      %v1342 = vshrl.u32 %v1341, 7
      %v1343 = vsub.s32 0, %v1342
      %v1344 = vrot.slane %v1229, %v1343
      %v1345 = vlaneseq
      %v1346 = vshrl.u32 %v1345, 7
      %v1347 = vsub.s32 0, %v1346
      %v1348 = vrot.slane %v1230, %v1347
      %v1349 = vlaneseq
      %v1350 = vshrl.u32 %v1349, 7
      %v1351 = vsub.s32 0, %v1350
      %v1352 = vrot.slane %v1231, %v1351
      %v1353 = vlaneseq
      %v1354 = vshrl.u32 %v1353, 7
      %v1355 = vsub.s32 0, %v1354
      %v1356 = vrot.slane %v1232, %v1355
      %v1453 = vunpack.c.l.b16 %v1233
      %v1454 = vunpack.c.h.b16 %v1233
      %v1455 = vunpack.c.l.b16 %v1234
      %v1456 = vunpack.c.h.b16 %v1234
      %v1457 = vunpack.c.l.b16 %v1235
      %v1458 = vunpack.c.h.b16 %v1235
      %v1459 = vunpack.c.l.b16 %v1236
      %v1460 = vunpack.c.h.b16 %v1236
      %v1461 = vunpack.c.l.b16 %v1237
      %v1462 = vunpack.c.h.b16 %v1237
      %v1463 = vunpack.c.l.b16 %v1238
      %v1464 = vunpack.c.h.b16 %v1238
      %v1465 = vunpack.c.l.b16 %v1239
      %v1466 = vunpack.c.h.b16 %v1239
      %v1467 = vunpack.c.l.b16 %v1240
      %v1468 = vunpack.c.h.b16 %v1240
      %v1469 = vunpack.c.l.b16 %v1241
      %v1470 = vunpack.c.h.b16 %v1241
      %v1471 = vunpack.c.l.b16 %v1242
      %v1472 = vunpack.c.h.b16 %v1242
      %v1473 = vunpack.c.l.b16 %v1243
      %v1474 = vunpack.c.h.b16 %v1243
      %v1475 = vunpack.c.l.b16 %v1244
      %v1476 = vunpack.c.h.b16 %v1244
      %v1477 = vunpack.c.l.b16 %v1245
      %v1478 = vunpack.c.h.b16 %v1245
      %v1479 = vunpack.c.l.b16 %v1246
      %v1480 = vunpack.c.h.b16 %v1246
      %v1481 = vunpack.c.l.b16 %v1247
      %v1482 = vunpack.c.h.b16 %v1247
      %v1483 = vunpack.c.l.b16 %v1248
      %v1484 = vunpack.c.h.b16 %v1248
      %v1485 = vunpack.c.l.b16 %v1249
      %v1486 = vunpack.c.h.b16 %v1249
      %v1487 = vunpack.c.l.b16 %v1250
      %v1488 = vunpack.c.h.b16 %v1250
      %v1489 = vunpack.c.l.b16 %v1251
      %v1490 = vunpack.c.h.b16 %v1251
      %v1491 = vunpack.c.l.b16 %v1252
      %v1492 = vunpack.c.h.b16 %v1252
      %v1493 = vunpack.c.l.b16 %v1253
      %v1494 = vunpack.c.h.b16 %v1253
      %v1495 = vunpack.c.l.b16 %v1254
      %v1496 = vunpack.c.h.b16 %v1254
      %v1497 = vunpack.c.l.b16 %v1255
      %v1498 = vunpack.c.h.b16 %v1255
      %v1499 = vunpack.c.l.b16 %v1256
      %v1500 = vunpack.c.h.b16 %v1256
      %v1501 = vunpack.c.l.b16 %v1257
      %v1502 = vunpack.c.h.b16 %v1257
      %v1503 = vunpack.c.l.b16 %v1258
      %v1504 = vunpack.c.h.b16 %v1258
      %v1505 = vunpack.c.l.b16 %v1259
      %v1506 = vunpack.c.h.b16 %v1259
      %v1507 = vunpack.c.l.b16 %v1260
      %v1508 = vunpack.c.h.b16 %v1260
      %v1509 = vunpack.c.l.b16 %v1261
      %v1510 = vunpack.c.h.b16 %v1261
      %v1511 = vunpack.c.l.b16 %v1262
      %v1512 = vunpack.c.h.b16 %v1262
      %v1513 = vunpack.c.l.b16 %v1263
      %v1514 = vunpack.c.h.b16 %v1263
      %v1515 = vunpack.c.l.b16 %v1264
      %v1516 = vunpack.c.h.b16 %v1264
      %v1517 = vunpack.c.l.b16 %v1265
      %v1518 = vunpack.c.h.b16 %v1265
      %v1519 = vunpack.c.l.b16 %v1266
      %v1520 = vunpack.c.h.b16 %v1266
      %v1521 = vunpack.c.l.b16 %v1267
      %v1522 = vunpack.c.h.b16 %v1267
      %v1523 = vunpack.c.l.b16 %v1268
      %v1524 = vunpack.c.h.b16 %v1268
      %v1525 = vunpack.c.l.b16 %v1269
      %v1526 = vunpack.c.h.b16 %v1269
      %v1527 = vunpack.c.l.b16 %v1270
      %v1528 = vunpack.c.h.b16 %v1270
      %v1529 = vunpack.c.l.b16 %v1271
      %v1530 = vunpack.c.h.b16 %v1271
      %v1531 = vunpack.c.l.b16 %v1272
      %v1532 = vunpack.c.h.b16 %v1272
      %v1533 = vunpack.c.l.b16 %v1273
      %v1534 = vunpack.c.h.b16 %v1273
      %v1535 = vunpack.c.l.b16 %v1274
      %v1536 = vunpack.c.h.b16 %v1274
      %v1537 = vunpack.c.l.b16 %v1275
      %v1538 = vunpack.c.h.b16 %v1275
      %v1539 = vunpack.c.l.b16 %v1276
      %v1540 = vunpack.c.h.b16 %v1276
      %v1541 = vunpack.c.l.b16 %v1277
      %v1542 = vunpack.c.h.b16 %v1277
      %v1543 = vunpack.c.l.b16 %v1278
      %v1544 = vunpack.c.h.b16 %v1278
      %v1545 = vunpack.c.l.b16 %v1279
      %v1546 = vunpack.c.h.b16 %v1279
      %v1547 = vunpack.c.l.b16 %v1280
      %v1548 = vunpack.c.h.b16 %v1280
      %v1549 = vunpack.c.l.b16 %v1281
      %v1550 = vunpack.c.h.b16 %v1281
      %v1551 = vunpack.c.l.b16 %v1282
      %v1552 = vunpack.c.h.b16 %v1282
      %v1553 = vunpack.c.l.b16 %v1283
      %v1554 = vunpack.c.h.b16 %v1283
      %v1555 = vunpack.c.l.b16 %v1284
      %v1556 = vunpack.c.h.b16 %v1284
      %v1557 = vunpack.c.l.b16 %v1285
      %v1558 = vunpack.c.h.b16 %v1285
      %v1559 = vunpack.c.l.b16 %v1286
      %v1560 = vunpack.c.h.b16 %v1286
      %v1561 = vunpack.c.l.b16 %v1287
      %v1562 = vunpack.c.h.b16 %v1287
      %v1563 = vunpack.c.l.b16 %v1288
      %v1564 = vunpack.c.h.b16 %v1288
      %v1565 = vunpack.c.l.b16 %v1289
      %v1566 = vunpack.c.h.b16 %v1289
      %v1567 = vunpack.c.l.b16 %v1290
      %v1568 = vunpack.c.h.b16 %v1290
      %v1569 = vunpack.c.l.b16 %v1291
      %v1570 = vunpack.c.h.b16 %v1291
      %v1571 = vunpack.c.l.b16 %v1292
      %v1572 = vunpack.c.h.b16 %v1292
      %v1573 = vunpack.c.l.b16 %v1293
      %v1574 = vunpack.c.h.b16 %v1293
      %v1575 = vunpack.c.l.b16 %v1294
      %v1576 = vunpack.c.h.b16 %v1294
      %v1577 = vunpack.c.l.b16 %v1295
      %v1578 = vunpack.c.h.b16 %v1295
      %v1579 = vunpack.c.l.b16 %v1296
      %v1580 = vunpack.c.h.b16 %v1296
      %v1581 = vunpack.c.l.b16 %v1297
      %v1582 = vunpack.c.h.b16 %v1297
      %v1583 = vunpack.c.l.b16 %v1298
      %v1584 = vunpack.c.h.b16 %v1298
      %v1585 = vunpack.c.l.b16 %v1299
      %v1586 = vunpack.c.h.b16 %v1299
      %v1587 = vunpack.c.l.b16 %v1300
      %v1588 = vunpack.c.h.b16 %v1300
      %v1589 = vunpack.c.l.b16 %v1301
      %v1590 = vunpack.c.h.b16 %v1301
      %v1591 = vunpack.c.l.b16 %v1302
      %v1592 = vunpack.c.h.b16 %v1302
      %v1593 = vunpack.c.l.b16 %v1303
      %v1594 = vunpack.c.h.b16 %v1303
      %v1595 = vunpack.c.l.b16 %v1304
      %v1596 = vunpack.c.h.b16 %v1304
      %v1597 = vunpack.c.l.b16 %v1305
      %v1598 = vunpack.c.h.b16 %v1305
      %v1599 = vunpack.c.l.b16 %v1306
      %v1600 = vunpack.c.h.b16 %v1306
      %v1601 = vunpack.c.l.b16 %v1307
      %v1602 = vunpack.c.h.b16 %v1307
      %v1603 = vunpack.c.l.b16 %v1308
      %v1604 = vunpack.c.h.b16 %v1308
      %v1605 = vunpack.c.l.b16 %v1309
      %v1606 = vunpack.c.h.b16 %v1309
      %v1607 = vunpack.c.l.b16 %v1310
      %v1608 = vunpack.c.h.b16 %v1310
      %v1609 = vunpack.c.l.b16 %v1311
      %v1610 = vunpack.c.h.b16 %v1311
      %v1611 = vunpack.c.l.b16 %v1312
      %v1612 = vunpack.c.h.b16 %v1312
      %v1613 = vunpack.c.l.b16 %v1313
      %v1614 = vunpack.c.h.b16 %v1313
      %v1615 = vunpack.c.l.b16 %v1314
      %v1616 = vunpack.c.h.b16 %v1314
      %v1617 = vunpack.c.l.b16 %v1315
      %v1618 = vunpack.c.h.b16 %v1315
      %v1619 = vunpack.c.l.b16 %v1316
      %v1620 = vunpack.c.h.b16 %v1316
      %v1621 = vunpack.c.l.b16 %v1317
      %v1622 = vunpack.c.h.b16 %v1317
      %v1623 = vunpack.c.l.b16 %v1318
      %v1624 = vunpack.c.h.b16 %v1318
      %v1625 = vunpack.c.l.b16 %v1319
      %v1626 = vunpack.c.h.b16 %v1319
      %v1627 = vunpack.c.l.b16 %v1320
      %v1628 = vunpack.c.h.b16 %v1320
      %v1629 = vunpack.c.l.b16 %v1321
      %v1630 = vunpack.c.h.b16 %v1321
      %v1631 = vunpack.c.l.b16 %v1322
      %v1632 = vunpack.c.h.b16 %v1322
      %v1633 = vunpack.c.l.b16 %v1323
      %v1634 = vunpack.c.h.b16 %v1323
      %v1635 = vunpack.c.l.b16 %v1324
      %v1636 = vunpack.c.h.b16 %v1324
      %v1637 = vunpack.c.l.b16 %v1325
      %v1638 = vunpack.c.h.b16 %v1325
      %v1639 = vunpack.c.l.b16 %v1326
      %v1640 = vunpack.c.h.b16 %v1326
      %v1641 = vunpack.c.l.b16 %v1327
      %v1642 = vunpack.c.h.b16 %v1327
      %v1643 = vunpack.c.l.b16 %v1328
      %v1644 = vunpack.c.h.b16 %v1328
      %v1645 = vpack.c.b16 %v1459, %v1453
      %v1646 = vpack.c.b16 %v1460, %v1454
      %v1647 = vpack.c.b16 %v1461, %v1455
      %v1648 = vpack.c.b16 %v1462, %v1456
      %v1649 = vpack.c.b16 %v1463, %v1457
      %v1650 = vpack.c.b16 %v1464, %v1458
      %v1651 = vpack.c.b16 %v1471, %v1465
      %v1652 = vpack.c.b16 %v1472, %v1466
      %v1653 = vpack.c.b16 %v1473, %v1467
      %v1654 = vpack.c.b16 %v1474, %v1468
      %v1655 = vpack.c.b16 %v1475, %v1469
      %v1656 = vpack.c.b16 %v1476, %v1470
      %v1657 = vpack.c.b16 %v1483, %v1477
      %v1658 = vpack.c.b16 %v1484, %v1478
      %v1659 = vpack.c.b16 %v1485, %v1479
      %v1660 = vpack.c.b16 %v1486, %v1480
      %v1661 = vpack.c.b16 %v1487, %v1481
      %v1662 = vpack.c.b16 %v1488, %v1482
      %v1663 = vpack.c.b16 %v1495, %v1489
      %v1664 = vpack.c.b16 %v1496, %v1490
      %v1665 = vpack.c.b16 %v1497, %v1491
      %v1666 = vpack.c.b16 %v1498, %v1492
      %v1667 = vpack.c.b16 %v1499, %v1493
      %v1668 = vpack.c.b16 %v1500, %v1494
      %v1669 = vpack.c.b16 %v1507, %v1501
      %v1670 = vpack.c.b16 %v1508, %v1502
      %v1671 = vpack.c.b16 %v1509, %v1503
      %v1672 = vpack.c.b16 %v1510, %v1504
      %v1673 = vpack.c.b16 %v1511, %v1505
      %v1674 = vpack.c.b16 %v1512, %v1506
      %v1675 = vpack.c.b16 %v1519, %v1513
      %v1676 = vpack.c.b16 %v1520, %v1514
      %v1677 = vpack.c.b16 %v1521, %v1515
      %v1678 = vpack.c.b16 %v1522, %v1516
      %v1679 = vpack.c.b16 %v1523, %v1517
      %v1680 = vpack.c.b16 %v1524, %v1518
      %v1681 = vpack.c.b16 %v1531, %v1525
      %v1682 = vpack.c.b16 %v1532, %v1526
      %v1683 = vpack.c.b16 %v1533, %v1527
      %v1684 = vpack.c.b16 %v1534, %v1528
      %v1685 = vpack.c.b16 %v1535, %v1529
      %v1686 = vpack.c.b16 %v1536, %v1530
      %v1687 = vpack.c.b16 %v1543, %v1537
      %v1688 = vpack.c.b16 %v1544, %v1538
      %v1689 = vpack.c.b16 %v1545, %v1539
      %v1690 = vpack.c.b16 %v1546, %v1540
      %v1691 = vpack.c.b16 %v1547, %v1541
      %v1692 = vpack.c.b16 %v1548, %v1542
      %v1693 = vpack.c.b16 %v1555, %v1549
      %v1694 = vpack.c.b16 %v1556, %v1550
      %v1695 = vpack.c.b16 %v1557, %v1551
      %v1696 = vpack.c.b16 %v1558, %v1552
      %v1697 = vpack.c.b16 %v1559, %v1553
      %v1698 = vpack.c.b16 %v1560, %v1554
      %v1699 = vpack.c.b16 %v1567, %v1561
      %v1700 = vpack.c.b16 %v1568, %v1562
      %v1701 = vpack.c.b16 %v1569, %v1563
      %v1702 = vpack.c.b16 %v1570, %v1564
      %v1703 = vpack.c.b16 %v1571, %v1565
      %v1704 = vpack.c.b16 %v1572, %v1566
      %v1705 = vpack.c.b16 %v1579, %v1573
      %v1706 = vpack.c.b16 %v1580, %v1574
      %v1707 = vpack.c.b16 %v1581, %v1575
      %v1708 = vpack.c.b16 %v1582, %v1576
      %v1709 = vpack.c.b16 %v1583, %v1577
      %v1710 = vpack.c.b16 %v1584, %v1578
      %v1711 = vpack.c.b16 %v1591, %v1585
      %v1712 = vpack.c.b16 %v1592, %v1586
      %v1713 = vpack.c.b16 %v1593, %v1587
      %v1714 = vpack.c.b16 %v1594, %v1588
      %v1715 = vpack.c.b16 %v1595, %v1589
      %v1716 = vpack.c.b16 %v1596, %v1590
      %v1717 = vpack.c.b16 %v1603, %v1597
      %v1718 = vpack.c.b16 %v1604, %v1598
      %v1719 = vpack.c.b16 %v1605, %v1599
      %v1720 = vpack.c.b16 %v1606, %v1600
      %v1721 = vpack.c.b16 %v1607, %v1601
      %v1722 = vpack.c.b16 %v1608, %v1602
      %v1723 = vpack.c.b16 %v1615, %v1609
      %v1724 = vpack.c.b16 %v1616, %v1610
      %v1725 = vpack.c.b16 %v1617, %v1611
      %v1726 = vpack.c.b16 %v1618, %v1612
      %v1727 = vpack.c.b16 %v1619, %v1613
      %v1728 = vpack.c.b16 %v1620, %v1614
      %v1729 = vpack.c.b16 %v1627, %v1621
      %v1730 = vpack.c.b16 %v1628, %v1622
      %v1731 = vpack.c.b16 %v1629, %v1623
      %v1732 = vpack.c.b16 %v1630, %v1624
      %v1733 = vpack.c.b16 %v1631, %v1625
      %v1734 = vpack.c.b16 %v1632, %v1626
      %v1735 = vpack.c.b16 %v1639, %v1633
      %v1736 = vpack.c.b16 %v1640, %v1634
      %v1737 = vpack.c.b16 %v1641, %v1635
      %v1738 = vpack.c.b16 %v1642, %v1636
      %v1739 = vpack.c.b16 %v1643, %v1637
      %v1740 = vpack.c.b16 %v1644, %v1638
      %1837 = vmatprep.subr.bf16.mxu0 %v1646
      %1838 = vmatpush1.bf16.msra.mxu0 %v1645
      %1839 = vmatprep.subr.bf16.mxu0 %v1652
      %1840 = vmatpush1.bf16.msra.mxu0 %v1651
      %1841 = vmatprep.subr.bf16.mxu0 %v1658
      %1842 = vmatpush1.bf16.msra.mxu0 %v1657
      %1843 = vmatprep.subr.bf16.mxu0 %v1664
      %1844 = vmatpush1.bf16.msra.mxu0 %v1663
      %1845 = vmatprep.subr.bf16.mxu0 %v1670
      %1846 = vmatpush1.bf16.msra.mxu0 %v1669
      %1847 = vmatprep.subr.bf16.mxu0 %v1676
      %1848 = vmatpush1.bf16.msra.mxu0 %v1675
      %1849 = vmatprep.subr.bf16.mxu0 %v1682
      %1850 = vmatpush1.bf16.msra.mxu0 %v1681
      %1851 = vmatprep.subr.bf16.mxu0 %v1688
      %1852 = vmatpush1.bf16.msra.mxu0 %v1687
      %1853 = vmatprep.subr.bf16.mxu0 %v1694
      %1854 = vmatpush1.bf16.msra.mxu0 %v1693
      %1855 = vmatprep.subr.bf16.mxu0 %v1700
      %1856 = vmatpush1.bf16.msra.mxu0 %v1699
      %1857 = vmatprep.subr.bf16.mxu0 %v1706
      %1858 = vmatpush1.bf16.msra.mxu0 %v1705
      %1859 = vmatprep.subr.bf16.mxu0 %v1712
      %1860 = vmatpush1.bf16.msra.mxu0 %v1711
      %1861 = vmatprep.subr.bf16.mxu0 %v1718
      %1862 = vmatpush1.bf16.msra.mxu0 %v1717
      %1863 = vmatprep.subr.bf16.mxu0 %v1724
      %1864 = vmatpush1.bf16.msra.mxu0 %v1723
      %1865 = vmatprep.subr.bf16.mxu0 %v1730
      %1866 = vmatpush1.bf16.msra.mxu0 %v1729
      %1867 = vmatprep.subr.bf16.mxu0 %v1736
      %1868 = vmatpush1.bf16.msra.mxu0 %v1735
      %1869 = vmatprep.mubr.bf16.mxu0 %v1330
      %1870 = vmatmul.mubr.bf16.gmra.mrb[0].mxu0 %v1329
      %v1871 = vpop.f32.mrb[0].mxu0
      %v1872 = vadd.f32 %v1336, %v1871
      %v1873 = vpop.f32.mrb[0].mxu0
      %v1874 = vadd.f32 %v1340, %v1873
      %v1875 = vpop.f32.mrb[0].mxu0
      %v1876 = vadd.f32 %v1336, %v1875
      %v1877 = vpop.f32.mrb[0].mxu0
      %v1878 = vadd.f32 %v1340, %v1877
      %1879 = vmatprep.mubr.bf16.mxu0 %v1332
      %1880 = vmatmul.mubr.bf16.gmra.mrb[0].mxu0 %v1331
      %v1881 = vpop.f32.mrb[0].mxu0
      %v1882 = vadd.f32 %v1336, %v1881
      %v1883 = vpop.f32.mrb[0].mxu0
      %v1884 = vadd.f32 %v1340, %v1883
      %v1885 = vpop.f32.mrb[0].mxu0
      %v1886 = vadd.f32 %v1336, %v1885
      %v1887 = vpop.f32.mrb[0].mxu0
      %v1888 = vadd.f32 %v1340, %v1887
      %1889 = vdwg.mxu0
      %1890 = vmatprep.subr.bf16.mxu0 %v1648
      %1891 = vmatpush1.bf16.msra.mxu0 %v1647
      %1892 = vmatprep.subr.bf16.mxu0 %v1654
      %1893 = vmatpush1.bf16.msra.mxu0 %v1653
      %1894 = vmatprep.subr.bf16.mxu0 %v1660
      %1895 = vmatpush1.bf16.msra.mxu0 %v1659
      %1896 = vmatprep.subr.bf16.mxu0 %v1666
      %1897 = vmatpush1.bf16.msra.mxu0 %v1665
      %1898 = vmatprep.subr.bf16.mxu0 %v1672
      %1899 = vmatpush1.bf16.msra.mxu0 %v1671
      %1900 = vmatprep.subr.bf16.mxu0 %v1678
      %1901 = vmatpush1.bf16.msra.mxu0 %v1677
      %1902 = vmatprep.subr.bf16.mxu0 %v1684
      %1903 = vmatpush1.bf16.msra.mxu0 %v1683
      %1904 = vmatprep.subr.bf16.mxu0 %v1690
      %1905 = vmatpush1.bf16.msra.mxu0 %v1689
      %1906 = vmatprep.subr.bf16.mxu0 %v1696
      %1907 = vmatpush1.bf16.msra.mxu0 %v1695
      %1908 = vmatprep.subr.bf16.mxu0 %v1702
      %1909 = vmatpush1.bf16.msra.mxu0 %v1701
      %1910 = vmatprep.subr.bf16.mxu0 %v1708
      %1911 = vmatpush1.bf16.msra.mxu0 %v1707
      %1912 = vmatprep.subr.bf16.mxu0 %v1714
      %1913 = vmatpush1.bf16.msra.mxu0 %v1713
      %1914 = vmatprep.subr.bf16.mxu0 %v1720
      %1915 = vmatpush1.bf16.msra.mxu0 %v1719
      %1916 = vmatprep.subr.bf16.mxu0 %v1726
      %1917 = vmatpush1.bf16.msra.mxu0 %v1725
      %1918 = vmatprep.subr.bf16.mxu0 %v1732
      %1919 = vmatpush1.bf16.msra.mxu0 %v1731
      %1920 = vmatprep.subr.bf16.mxu0 %v1738
      %1921 = vmatpush1.bf16.msra.mxu0 %v1737
      %1922 = vmatprep.mubr.bf16.mxu0 %v1330
      %1923 = vmatmul.mubr.bf16.gmra.mrb[0].mxu0 %v1329
      %v1924 = vpop.f32.mrb[0].mxu0
      %v1925 = vadd.f32 %v1344, %v1924
      %v1926 = vpop.f32.mrb[0].mxu0
      %v1927 = vadd.f32 %v1348, %v1926
      %v1928 = vpop.f32.mrb[0].mxu0
      %v1929 = vadd.f32 %v1344, %v1928
      %v1930 = vpop.f32.mrb[0].mxu0
      %v1931 = vadd.f32 %v1348, %v1930
      %1932 = vmatprep.mubr.bf16.mxu0 %v1332
      %1933 = vmatmul.mubr.bf16.gmra.mrb[0].mxu0 %v1331
      %v1934 = vpop.f32.mrb[0].mxu0
      %v1935 = vadd.f32 %v1344, %v1934
      %v1936 = vpop.f32.mrb[0].mxu0
      %v1937 = vadd.f32 %v1348, %v1936
      %v1938 = vpop.f32.mrb[0].mxu0
      %v1939 = vadd.f32 %v1344, %v1938
      %v1940 = vpop.f32.mrb[0].mxu0
      %v1941 = vadd.f32 %v1348, %v1940
      %1942 = vdwg.mxu0
      %1943 = vmatprep.subr.bf16.mxu0 %v1650
      %1944 = vmatpush1.bf16.msra.mxu0 %v1649
      %1945 = vmatprep.subr.bf16.mxu0 %v1656
      %1946 = vmatpush1.bf16.msra.mxu0 %v1655
      %1947 = vmatprep.subr.bf16.mxu0 %v1662
      %1948 = vmatpush1.bf16.msra.mxu0 %v1661
      %1949 = vmatprep.subr.bf16.mxu0 %v1668
      %1950 = vmatpush1.bf16.msra.mxu0 %v1667
      %1951 = vmatprep.subr.bf16.mxu0 %v1674
      %1952 = vmatpush1.bf16.msra.mxu0 %v1673
      %1953 = vmatprep.subr.bf16.mxu0 %v1680
      %1954 = vmatpush1.bf16.msra.mxu0 %v1679
      %1955 = vmatprep.subr.bf16.mxu0 %v1686
      %1956 = vmatpush1.bf16.msra.mxu0 %v1685
      %1957 = vmatprep.subr.bf16.mxu0 %v1692
      %1958 = vmatpush1.bf16.msra.mxu0 %v1691
      %1959 = vmatprep.subr.bf16.mxu0 %v1698
      %1960 = vmatpush1.bf16.msra.mxu0 %v1697
      %1961 = vmatprep.subr.bf16.mxu0 %v1704
      %1962 = vmatpush1.bf16.msra.mxu0 %v1703
      %1963 = vmatprep.subr.bf16.mxu0 %v1710
      %1964 = vmatpush1.bf16.msra.mxu0 %v1709
      %1965 = vmatprep.subr.bf16.mxu0 %v1716
      %1966 = vmatpush1.bf16.msra.mxu0 %v1715
      %1967 = vmatprep.subr.bf16.mxu0 %v1722
      %1968 = vmatpush1.bf16.msra.mxu0 %v1721
      %1969 = vmatprep.subr.bf16.mxu0 %v1728
      %1970 = vmatpush1.bf16.msra.mxu0 %v1727
      %1971 = vmatprep.subr.bf16.mxu0 %v1734
      %1972 = vmatpush1.bf16.msra.mxu0 %v1733
      %1973 = vmatprep.subr.bf16.mxu0 %v1740
      %1974 = vmatpush1.bf16.msra.mxu0 %v1739
      %1975 = vmatprep.mubr.bf16.mxu0 %v1330
      %1976 = vmatmul.mubr.bf16.gmra.mrb[0].mxu0 %v1329
      %v1977 = vpop.f32.mrb[0].mxu0
      %v1978 = vadd.f32 %v1352, %v1977
      %v1979 = vpop.f32.mrb[0].mxu0
      %v1980 = vadd.f32 %v1356, %v1979
      %v1981 = vpop.f32.mrb[0].mxu0
      %v1982 = vadd.f32 %v1352, %v1981
      %v1983 = vpop.f32.mrb[0].mxu0
      %v1984 = vadd.f32 %v1356, %v1983
      %1985 = vmatprep.mubr.bf16.mxu0 %v1332
      %1986 = vmatmul.mubr.bf16.gmra.mrb[0].mxu0 %v1331
      %v1987 = vpop.f32.mrb[0].mxu0
      %v1988 = vadd.f32 %v1352, %v1987
      %v1989 = vpop.f32.mrb[0].mxu0
      %v1990 = vadd.f32 %v1356, %v1989
      %v1991 = vpop.f32.mrb[0].mxu0
      %v1992 = vadd.f32 %v1352, %v1991
      %v1993 = vpop.f32.mrb[0].mxu0
      %v1994 = vadd.f32 %v1356, %v1993
      %1995 = vdwg.mxu0
      %v1996 = vmul.f32 %v1925, %v1140
      %v1997 = vmul.f32 %v1927, %v1141
      %v1998 = vmul.f32 %v1929, %v1142
      %v1999 = vmul.f32 %v1931, %v1143
      %v2000 = vmul.f32 %v1935, %v1144
      %v2001 = vmul.f32 %v1937, %v1145
      %v2002 = vmul.f32 %v1939, %v1146
      %v2003 = vmul.f32 %v1941, %v1147
      %v2004 = vmul.f32 %v1925, %v1148
      %v2005 = vmul.f32 %v1927, %v1149
      %v2006 = vmul.f32 %v1929, %v1150
      %v2007 = vmul.f32 %v1931, %v1151
      %v2008 = vmul.f32 %v1935, %v1152
      %v2009 = vmul.f32 %v1937, %v1153
      %v2010 = vmul.f32 %v1939, %v1154
      %v2011 = vmul.f32 %v1941, %v1155
      %v2012 = vmul.f32 %v1925, %v1156
      %v2013 = vmul.f32 %v1927, %v1157
      %v2014 = vmul.f32 %v1929, %v1158
      %v2015 = vmul.f32 %v1931, %v1159
      %v2016 = vmul.f32 %v1935, %v1160
      %v2017 = vmul.f32 %v1937, %v1161
      %v2018 = vmul.f32 %v1939, %v1162
      %v2019 = vmul.f32 %v1941, %v1163
      %v2020 = vmul.f32 %v1925, %v1164
      %v2021 = vmul.f32 %v1927, %v1165
      %v2022 = vmul.f32 %v1929, %v1166
      %v2023 = vmul.f32 %v1931, %v1167
      %v2024 = vmul.f32 %v1935, %v1168
      %v2025 = vmul.f32 %v1937, %v1169
      %v2026 = vmul.f32 %v1939, %v1170
      %v2027 = vmul.f32 %v1941, %v1171
      %v2028 = vmul.f32 %v1978, %v1140
      %v2029 = vmul.f32 %v1980, %v1141
      %v2030 = vmul.f32 %v1982, %v1142
      %v2031 = vmul.f32 %v1984, %v1143
      %v2032 = vmul.f32 %v1988, %v1144
      %v2033 = vmul.f32 %v1990, %v1145
      %v2034 = vmul.f32 %v1992, %v1146
      %v2035 = vmul.f32 %v1994, %v1147
      %v2036 = vmul.f32 %v1978, %v1148
      %v2037 = vmul.f32 %v1980, %v1149
      %v2038 = vmul.f32 %v1982, %v1150
      %v2039 = vmul.f32 %v1984, %v1151
      %v2040 = vmul.f32 %v1988, %v1152
      %v2041 = vmul.f32 %v1990, %v1153
      %v2042 = vmul.f32 %v1992, %v1154
      %v2043 = vmul.f32 %v1994, %v1155
      %v2044 = vmul.f32 %v1978, %v1156
      %v2045 = vmul.f32 %v1980, %v1157
      %v2046 = vmul.f32 %v1982, %v1158
      %v2047 = vmul.f32 %v1984, %v1159
      %v2048 = vmul.f32 %v1988, %v1160
      %v2049 = vmul.f32 %v1990, %v1161
      %v2050 = vmul.f32 %v1992, %v1162
      %v2051 = vmul.f32 %v1994, %v1163
      %v2052 = vmul.f32 %v1978, %v1164
      %v2053 = vmul.f32 %v1980, %v1165
      %v2054 = vmul.f32 %v1982, %v1166
      %v2055 = vmul.f32 %v1984, %v1167
      %v2056 = vmul.f32 %v1988, %v1168
      %v2057 = vmul.f32 %v1990, %v1169
      %v2058 = vmul.f32 %v1992, %v1170
      %v2059 = vmul.f32 %v1994, %v1171
      %v2060 = vpack.c.bf16 %v1876, %v1872
      %v2061 = vpack.c.bf16 %v1878, %v1874
      %v2062 = vpack.c.bf16 %v1886, %v1882
      %v2063 = vpack.c.bf16 %v1888, %v1884
      %v2064 = vpack.c.bf16 %v1998, %v1996
      %v2065 = vpack.c.bf16 %v1999, %v1997
      %v2066 = vpack.c.bf16 %v2002, %v2000
      %v2067 = vpack.c.bf16 %v2003, %v2001
      %v2068 = vpack.c.bf16 %v2006, %v2004
      %v2069 = vpack.c.bf16 %v2007, %v2005
      %v2070 = vpack.c.bf16 %v2010, %v2008
      %v2071 = vpack.c.bf16 %v2011, %v2009
      %v2072 = vpack.c.bf16 %v2014, %v2012
      %v2073 = vpack.c.bf16 %v2015, %v2013
      %v2074 = vpack.c.bf16 %v2018, %v2016
      %v2075 = vpack.c.bf16 %v2019, %v2017
      %v2076 = vpack.c.bf16 %v2022, %v2020
      %v2077 = vpack.c.bf16 %v2023, %v2021
      %v2078 = vpack.c.bf16 %v2026, %v2024
      %v2079 = vpack.c.bf16 %v2027, %v2025
      %2080 = vmatprep.subr.bf16.mxu0 %v2065
      %2081 = vmatpush1.bf16.xpose.msra.mxu0 %v2064
      %2082 = vmatprep.subr.bf16.mxu0 %v2067
      %2083 = vmatpush1.bf16.xpose.msra.mxu0 %v2066
      %2084 = vmatprep.subr.bf16.mxu0 %v2069
      %2085 = vmatpush1.bf16.xpose.msra.mxu0 %v2068
      %2086 = vmatprep.subr.bf16.mxu0 %v2071
      %2087 = vmatpush1.bf16.xpose.msra.mxu0 %v2070
      %2088 = vmatprep.subr.bf16.mxu0 %v2073
      %2089 = vmatpush1.bf16.xpose.msra.mxu0 %v2072
      %2090 = vmatprep.subr.bf16.mxu0 %v2075
      %2091 = vmatpush1.bf16.xpose.msra.mxu0 %v2074
      %2092 = vmatprep.subr.bf16.mxu0 %v2077
      %2093 = vmatpush1.bf16.xpose.msra.mxu0 %v2076
      %2094 = vmatprep.subr.bf16.mxu0 %v2079
      %2095 = vmatpush1.bf16.xpose.msra.mxu0 %v2078
      %2096 = vmatprep.subr.bf16.mxu0 0
      %2097 = vmatpush1.bf16.xpose.msra.mxu0 0
      %2098 = vmatprep.subr.bf16.mxu0 0
      %2099 = vmatpush1.bf16.xpose.msra.mxu0 0
      %2100 = vmatprep.subr.bf16.mxu0 0
      %2101 = vmatpush1.bf16.xpose.msra.mxu0 0
      %2102 = vmatprep.subr.bf16.mxu0 0
      %2103 = vmatpush1.bf16.xpose.msra.mxu0 0
      %2104 = vmatprep.subr.bf16.mxu0 0
      %2105 = vmatpush1.bf16.xpose.msra.mxu0 0
      %2106 = vmatprep.subr.bf16.mxu0 0
      %2107 = vmatpush1.bf16.xpose.msra.mxu0 0
      %2108 = vmatprep.subr.bf16.mxu0 0
      %2109 = vmatpush1.bf16.xpose.msra.mxu0 0
      %2110 = vmatprep.subr.bf16.mxu0 0
      %2111 = vmatpush1.bf16.xpose.msra.mxu0 0
      %2112 = vmatprep.mubr.bf16.mxu0 %v2061
      %2113 = vmatmul.mubr.bf16.gmra.mrb[0].mxu0 %v2060
      %v2114 = vpop.f32.mrb[0].mxu0
      %v2115 = vadd.f32 0.0, %v2114
      %v2116 = vpop.f32.mrb[0].mxu0
      %v2117 = vpop.f32.mrb[0].mxu0
      %v2118 = vadd.f32 0.0, %v2117
      %v2119 = vpop.f32.mrb[0].mxu0
      %2120 = vmatprep.mubr.bf16.mxu0 %v2063
      %2121 = vmatmul.mubr.bf16.gmra.mrb[0].mxu0 %v2062
      %v2122 = vpop.f32.mrb[0].mxu0
      %v2123 = vadd.f32 0.0, %v2122
      %v2124 = vpop.f32.mrb[0].mxu0
      %v2125 = vpop.f32.mrb[0].mxu0
      %v2126 = vadd.f32 0.0, %v2125
      %v2127 = vpop.f32.mrb[0].mxu0
      %2128 = vdwg.mxu0
      %v2129 = vmul.f32 %v2115, 0.125
      %v2130 = vmul.f32 %v2118, 0.125
      %v2131 = vmul.f32 %v2123, 0.125
      %v2132 = vmul.f32 %v2126, 0.125
      %v2133 = vadd.f32 %v2129, %v1223
      %v2134 = vadd.f32 %v2130, %v1224
      %v2135 = vadd.f32 %v2131, %v1225
      %v2136 = vadd.f32 %v2132, %v1226
      %2137 = vmax.xlane.f32.xlu0 %v2133
      %v2138 = vpop.xlane.xlu0 %2137
      %2139 = vmax.xlane.f32.xlu0 %v2134
      %v2140 = vpop.xlane.xlu0 %2139
      %2141 = vmax.xlane.f32.xlu0 %v2135
      %v2142 = vpop.xlane.xlu0 %2141
      %2143 = vmax.xlane.f32.xlu0 %v2136
      %v2144 = vpop.xlane.xlu0 %2143
      %v2145 = vsub.f32 %v2133, %v2138
      %v2146 = vsub.f32 %v2134, %v2140
      %v2147 = vsub.f32 %v2135, %v2142
      %v2148 = vsub.f32 %v2136, %v2144
      %v2149 = vmul.f32 %v2145, 1.442695
      %v2150 = vpow.pop %v2149
      %v2151 = vmul.f32 %v2146, 1.442695
      %v2152 = vpow.pop %v2151
      %v2153 = vmul.f32 %v2147, 1.442695
      %v2154 = vpow.pop %v2153
      %v2155 = vmul.f32 %v2148, 1.442695
      %v2156 = vpow.pop %v2155
      %v2157 = vpack.c.bf16 %v2152, %v2150
      %v2158 = vpack.c.bf16 %v2156, %v2154
      %2159 = vmatprep.subr.bf16.mxu0 0
      %2160 = vmatpush1.bf16.msra.mxu0 %v1205
      %2161 = vmatprep.subr.bf16.mxu0 0
      %2162 = vmatpush1.bf16.msra.mxu0 %v1206
      %2163 = vmatprep.subr.bf16.mxu0 0
      %2164 = vmatpush1.bf16.msra.mxu0 %v1207
      %2165 = vmatprep.subr.bf16.mxu0 0
      %2166 = vmatpush1.bf16.msra.mxu0 %v1208
      %2167 = vmatprep.subr.bf16.mxu0 0
      %2168 = vmatpush1.bf16.msra.mxu0 %v1209
      %2169 = vmatprep.subr.bf16.mxu0 0
      %2170 = vmatpush1.bf16.msra.mxu0 %v1210
      %2171 = vmatprep.subr.bf16.mxu0 0
      %2172 = vmatpush1.bf16.msra.mxu0 %v1211
      %2173 = vmatprep.subr.bf16.mxu0 0
      %2174 = vmatpush1.bf16.msra.mxu0 %v1212
      %2175 = vmatprep.subr.bf16.mxu0 0
      %2176 = vmatpush1.bf16.msra.mxu0 0
      %2177 = vmatprep.subr.bf16.mxu0 0
      %2178 = vmatpush1.bf16.msra.mxu0 0
      %2179 = vmatprep.subr.bf16.mxu0 0
      %2180 = vmatpush1.bf16.msra.mxu0 0
      %2181 = vmatprep.subr.bf16.mxu0 0
      %2182 = vmatpush1.bf16.msra.mxu0 0
      %2183 = vmatprep.subr.bf16.mxu0 0
      %2184 = vmatpush1.bf16.msra.mxu0 0
      %2185 = vmatprep.subr.bf16.mxu0 0
      %2186 = vmatpush1.bf16.msra.mxu0 0
      %2187 = vmatprep.subr.bf16.mxu0 0
      %2188 = vmatpush1.bf16.msra.mxu0 0
      %2189 = vmatprep.subr.bf16.mxu0 0
      %2190 = vmatpush1.bf16.msra.mxu0 0
      %2191 = vmatprep.mubr.bf16.mxu0 0
      %2192 = vmatmul.mubr.bf16.gmra.mrb[0].mxu0 %v2157
      %v2193 = vpop.f32.mrb[0].mxu0
      %v2194 = vadd.f32 0.0, %v2193
      %v2195 = vpop.f32.mrb[0].mxu0
      %v2196 = vpop.f32.mrb[0].mxu0
      %v2197 = vadd.f32 0.0, %v2196
      %v2198 = vpop.f32.mrb[0].mxu0
      %2199 = vmatprep.mubr.bf16.mxu0 0
      %2200 = vmatmul.mubr.bf16.gmra.mrb[0].mxu0 %v2158
      %v2201 = vpop.f32.mrb[0].mxu0
      %v2202 = vadd.f32 0.0, %v2201
      %v2203 = vpop.f32.mrb[0].mxu0
      %v2204 = vpop.f32.mrb[0].mxu0
      %v2205 = vadd.f32 0.0, %v2204
      %v2206 = vpop.f32.mrb[0].mxu0
      %2207 = vdwg.mxu0
      %v2208 = vmax.f32 %v2194, 1e-30
      %v2209 = vmax.f32 %v2197, 1e-30
      %v2210 = vmax.f32 %v2202, 1e-30
      %v2211 = vmax.f32 %v2205, 1e-30
      %v2212 = vrcp.pop %v2208
      %v2213 = vrcp.pop %v2209
      %v2214 = vrcp.pop %v2210
      %v2215 = vrcp.pop %v2211
      %v2216 = vmul.f32 %v2150, %v2212
      %v2217 = vmul.f32 %v2152, %v2213
      %v2218 = vmul.f32 %v2154, %v2214
      %v2219 = vmul.f32 %v2156, %v2215
      %v2220 = vpack.c.bf16 %v2217, %v2216
      %v2221 = vpack.c.bf16 %v2219, %v2218
      %v2222 = vpack.c.bf16 %v2030, %v2028
      %v2223 = vpack.c.bf16 %v2031, %v2029
      %v2224 = vpack.c.bf16 %v2034, %v2032
      %v2225 = vpack.c.bf16 %v2035, %v2033
      %v2226 = vpack.c.bf16 %v2038, %v2036
      %v2227 = vpack.c.bf16 %v2039, %v2037
      %v2228 = vpack.c.bf16 %v2042, %v2040
      %v2229 = vpack.c.bf16 %v2043, %v2041
      %v2230 = vpack.c.bf16 %v2046, %v2044
      %v2231 = vpack.c.bf16 %v2047, %v2045
      %v2232 = vpack.c.bf16 %v2050, %v2048
      %v2233 = vpack.c.bf16 %v2051, %v2049
      %v2234 = vpack.c.bf16 %v2054, %v2052
      %v2235 = vpack.c.bf16 %v2055, %v2053
      %v2236 = vpack.c.bf16 %v2058, %v2056
      %v2237 = vpack.c.bf16 %v2059, %v2057
      %2238 = vmatprep.subr.bf16.mxu0 %v2223
      %2239 = vmatpush1.bf16.msra.mxu0 %v2222
      %2240 = vmatprep.subr.bf16.mxu0 %v2225
      %2241 = vmatpush1.bf16.msra.mxu0 %v2224
      %2242 = vmatprep.subr.bf16.mxu0 %v2227
      %2243 = vmatpush1.bf16.msra.mxu0 %v2226
      %2244 = vmatprep.subr.bf16.mxu0 %v2229
      %2245 = vmatpush1.bf16.msra.mxu0 %v2228
      %2246 = vmatprep.subr.bf16.mxu0 %v2231
      %2247 = vmatpush1.bf16.msra.mxu0 %v2230
      %2248 = vmatprep.subr.bf16.mxu0 %v2233
      %2249 = vmatpush1.bf16.msra.mxu0 %v2232
      %2250 = vmatprep.subr.bf16.mxu0 %v2235
      %2251 = vmatpush1.bf16.msra.mxu0 %v2234
      %2252 = vmatprep.subr.bf16.mxu0 %v2237
      %2253 = vmatpush1.bf16.msra.mxu0 %v2236
      %2254 = vmatprep.subr.bf16.mxu0 0
      %2255 = vmatpush1.bf16.msra.mxu0 0
      %2256 = vmatprep.subr.bf16.mxu0 0
      %2257 = vmatpush1.bf16.msra.mxu0 0
      %2258 = vmatprep.subr.bf16.mxu0 0
      %2259 = vmatpush1.bf16.msra.mxu0 0
      %2260 = vmatprep.subr.bf16.mxu0 0
      %2261 = vmatpush1.bf16.msra.mxu0 0
      %2262 = vmatprep.subr.bf16.mxu0 0
      %2263 = vmatpush1.bf16.msra.mxu0 0
      %2264 = vmatprep.subr.bf16.mxu0 0
      %2265 = vmatpush1.bf16.msra.mxu0 0
      %2266 = vmatprep.subr.bf16.mxu0 0
      %2267 = vmatpush1.bf16.msra.mxu0 0
      %2268 = vmatprep.subr.bf16.mxu0 0
      %2269 = vmatpush1.bf16.msra.mxu0 0
      %2270 = vmatprep.mubr.bf16.mxu0 0
      %2271 = vmatmul.mubr.bf16.gmra.mrb[0].mxu0 %v2220
      %v2272 = vpop.f32.mrb[0].mxu0
      %v2273 = vadd.f32 0.0, %v2272
      %v2274 = vpop.f32.mrb[0].mxu0
      %v2275 = vadd.f32 0.0, %v2274
      %v2276 = vpop.f32.mrb[0].mxu0
      %v2277 = vadd.f32 0.0, %v2276
      %v2278 = vpop.f32.mrb[0].mxu0
      %v2279 = vadd.f32 0.0, %v2278
      %2280 = vmatprep.mubr.bf16.mxu0 0
      %2281 = vmatmul.mubr.bf16.gmra.mrb[0].mxu0 %v2221
      %v2282 = vpop.f32.mrb[0].mxu0
      %v2283 = vadd.f32 0.0, %v2282
      %v2284 = vpop.f32.mrb[0].mxu0
      %v2285 = vadd.f32 0.0, %v2284
      %v2286 = vpop.f32.mrb[0].mxu0
      %v2287 = vadd.f32 0.0, %v2286
      %v2288 = vpop.f32.mrb[0].mxu0
      %v2289 = vadd.f32 0.0, %v2288
      %2290 = vdwg.mxu0
      %v2291 = vld [vmem:[%s9] sm:$0xff]
      %v2292 = vld [vmem:[%s9 + $0x8] sm:$0xff]
      %v2293 = vld [vmem:[%s9 + $0x10] sm:$0xff]
      %v2294 = vld [vmem:[%s9 + $0x18] sm:$0xff]
      %v2295 = vld [vmem:[%s9 + $0x20] sm:$0xff]
      %v2296 = vld [vmem:[%s9 + $0x28] sm:$0xff]
      %v2297 = vld [vmem:[%s9 + $0x30] sm:$0xff]
      %v2298 = vld [vmem:[%s9 + $0x38] sm:$0xff]
      %v2299 = vld [vmem:[%s9 + $0x40] sm:$0xff]
      %v2300 = vld [vmem:[%s9 + $0x48] sm:$0xff]
      %v2301 = vld [vmem:[%s9 + $0x50] sm:$0xff]
      %v2302 = vld [vmem:[%s9 + $0x58] sm:$0xff]
      %v2303 = vld [vmem:[%s9 + $0x60] sm:$0xff]
      %v2304 = vld [vmem:[%s9 + $0x68] sm:$0xff]
      %v2305 = vld [vmem:[%s9 + $0x70] sm:$0xff]
      %v2306 = vld [vmem:[%s9 + $0x78] sm:$0xff]
      %v2307 = vld [vmem:[%s9 + $0x80] sm:$0xff]
      %v2308 = vld [vmem:[%s9 + $0x88] sm:$0xff]
      %v2309 = vld [vmem:[%s9 + $0x90] sm:$0xff]
      %v2310 = vld [vmem:[%s9 + $0x98] sm:$0xff]
      %v2311 = vld [vmem:[%s9 + $0xa0] sm:$0xff]
      %v2312 = vld [vmem:[%s9 + $0xa8] sm:$0xff]
      %v2313 = vld [vmem:[%s9 + $0xb0] sm:$0xff]
      %v2314 = vld [vmem:[%s9 + $0xb8] sm:$0xff]
      %v2315 = vld [vmem:[%s9 + $0xc0] sm:$0xff]
      %v2316 = vld [vmem:[%s9 + $0xc8] sm:$0xff]
      %v2317 = vld [vmem:[%s9 + $0xd0] sm:$0xff]
      %v2318 = vld [vmem:[%s9 + $0xd8] sm:$0xff]
      %v2319 = vld [vmem:[%s9 + $0xe0] sm:$0xff]
      %v2320 = vld [vmem:[%s9 + $0xe8] sm:$0xff]
      %v2321 = vld [vmem:[%s9 + $0xf0] sm:$0xff]
      %v2322 = vld [vmem:[%s9 + $0xf8] sm:$0xff]
      %v2323 = vpack.c.bf16 %v2277, %v2273
      %v2324 = vpack.c.bf16 %v2279, %v2275
      %v2325 = vpack.c.bf16 %v2287, %v2283
      %v2326 = vpack.c.bf16 %v2289, %v2285
      %v2327 = vlaneseq
      %v2328 = vshrl.u32 %v2327, 7
      %v2329 = vsub.s32 1, %v2328
      %v2330 = vrot.slane %v1227, %v2329
      %v2331 = vlaneseq
      %v2332 = vshrl.u32 %v2331, 7
      %v2333 = vsub.s32 1, %v2332
      %v2334 = vrot.slane %v1228, %v2333
      %v2367 = vunpack.c.l.b16 %v2291
      %v2368 = vunpack.c.h.b16 %v2291
      %v2369 = vunpack.c.l.b16 %v2292
      %v2370 = vunpack.c.h.b16 %v2292
      %v2371 = vunpack.c.l.b16 %v2293
      %v2372 = vunpack.c.h.b16 %v2293
      %v2373 = vunpack.c.l.b16 %v2294
      %v2374 = vunpack.c.h.b16 %v2294
      %v2375 = vunpack.c.l.b16 %v2295
      %v2376 = vunpack.c.h.b16 %v2295
      %v2377 = vunpack.c.l.b16 %v2296
      %v2378 = vunpack.c.h.b16 %v2296
      %v2379 = vunpack.c.l.b16 %v2297
      %v2380 = vunpack.c.h.b16 %v2297
      %v2381 = vunpack.c.l.b16 %v2298
      %v2382 = vunpack.c.h.b16 %v2298
      %v2383 = vunpack.c.l.b16 %v2299
      %v2384 = vunpack.c.h.b16 %v2299
      %v2385 = vunpack.c.l.b16 %v2300
      %v2386 = vunpack.c.h.b16 %v2300
      %v2387 = vunpack.c.l.b16 %v2301
      %v2388 = vunpack.c.h.b16 %v2301
      %v2389 = vunpack.c.l.b16 %v2302
      %v2390 = vunpack.c.h.b16 %v2302
      %v2391 = vunpack.c.l.b16 %v2303
      %v2392 = vunpack.c.h.b16 %v2303
      %v2393 = vunpack.c.l.b16 %v2304
      %v2394 = vunpack.c.h.b16 %v2304
      %v2395 = vunpack.c.l.b16 %v2305
      %v2396 = vunpack.c.h.b16 %v2305
      %v2397 = vunpack.c.l.b16 %v2306
      %v2398 = vunpack.c.h.b16 %v2306
      %v2399 = vunpack.c.l.b16 %v2307
      %v2400 = vunpack.c.h.b16 %v2307
      %v2401 = vunpack.c.l.b16 %v2308
      %v2402 = vunpack.c.h.b16 %v2308
      %v2403 = vunpack.c.l.b16 %v2309
      %v2404 = vunpack.c.h.b16 %v2309
      %v2405 = vunpack.c.l.b16 %v2310
      %v2406 = vunpack.c.h.b16 %v2310
      %v2407 = vunpack.c.l.b16 %v2311
      %v2408 = vunpack.c.h.b16 %v2311
      %v2409 = vunpack.c.l.b16 %v2312
      %v2410 = vunpack.c.h.b16 %v2312
      %v2411 = vunpack.c.l.b16 %v2313
      %v2412 = vunpack.c.h.b16 %v2313
      %v2413 = vunpack.c.l.b16 %v2314
      %v2414 = vunpack.c.h.b16 %v2314
      %v2415 = vunpack.c.l.b16 %v2315
      %v2416 = vunpack.c.h.b16 %v2315
      %v2417 = vunpack.c.l.b16 %v2316
      %v2418 = vunpack.c.h.b16 %v2316
      %v2419 = vunpack.c.l.b16 %v2317
      %v2420 = vunpack.c.h.b16 %v2317
      %v2421 = vunpack.c.l.b16 %v2318
      %v2422 = vunpack.c.h.b16 %v2318
      %v2423 = vunpack.c.l.b16 %v2319
      %v2424 = vunpack.c.h.b16 %v2319
      %v2425 = vunpack.c.l.b16 %v2320
      %v2426 = vunpack.c.h.b16 %v2320
      %v2427 = vunpack.c.l.b16 %v2321
      %v2428 = vunpack.c.h.b16 %v2321
      %v2429 = vunpack.c.l.b16 %v2322
      %v2430 = vunpack.c.h.b16 %v2322
      %v2431 = vpack.c.b16 %v2369, %v2367
      %v2432 = vpack.c.b16 %v2370, %v2368
      %v2433 = vpack.c.b16 %v2373, %v2371
      %v2434 = vpack.c.b16 %v2374, %v2372
      %v2435 = vpack.c.b16 %v2377, %v2375
      %v2436 = vpack.c.b16 %v2378, %v2376
      %v2437 = vpack.c.b16 %v2381, %v2379
      %v2438 = vpack.c.b16 %v2382, %v2380
      %v2439 = vpack.c.b16 %v2385, %v2383
      %v2440 = vpack.c.b16 %v2386, %v2384
      %v2441 = vpack.c.b16 %v2389, %v2387
      %v2442 = vpack.c.b16 %v2390, %v2388
      %v2443 = vpack.c.b16 %v2393, %v2391
      %v2444 = vpack.c.b16 %v2394, %v2392
      %v2445 = vpack.c.b16 %v2397, %v2395
      %v2446 = vpack.c.b16 %v2398, %v2396
      %v2447 = vpack.c.b16 %v2401, %v2399
      %v2448 = vpack.c.b16 %v2402, %v2400
      %v2449 = vpack.c.b16 %v2405, %v2403
      %v2450 = vpack.c.b16 %v2406, %v2404
      %v2451 = vpack.c.b16 %v2409, %v2407
      %v2452 = vpack.c.b16 %v2410, %v2408
      %v2453 = vpack.c.b16 %v2413, %v2411
      %v2454 = vpack.c.b16 %v2414, %v2412
      %v2455 = vpack.c.b16 %v2417, %v2415
      %v2456 = vpack.c.b16 %v2418, %v2416
      %v2457 = vpack.c.b16 %v2421, %v2419
      %v2458 = vpack.c.b16 %v2422, %v2420
      %v2459 = vpack.c.b16 %v2425, %v2423
      %v2460 = vpack.c.b16 %v2426, %v2424
      %v2461 = vpack.c.b16 %v2429, %v2427
      %v2462 = vpack.c.b16 %v2430, %v2428
      %2495 = vmatprep.subr.bf16.mxu0 %v2432
      %2496 = vmatpush1.bf16.msra.mxu0 %v2431
      %2497 = vmatprep.subr.bf16.mxu0 %v2434
      %2498 = vmatpush1.bf16.msra.mxu0 %v2433
      %2499 = vmatprep.subr.bf16.mxu0 %v2436
      %2500 = vmatpush1.bf16.msra.mxu0 %v2435
      %2501 = vmatprep.subr.bf16.mxu0 %v2438
      %2502 = vmatpush1.bf16.msra.mxu0 %v2437
      %2503 = vmatprep.subr.bf16.mxu0 %v2440
      %2504 = vmatpush1.bf16.msra.mxu0 %v2439
      %2505 = vmatprep.subr.bf16.mxu0 %v2442
      %2506 = vmatpush1.bf16.msra.mxu0 %v2441
      %2507 = vmatprep.subr.bf16.mxu0 %v2444
      %2508 = vmatpush1.bf16.msra.mxu0 %v2443
      %2509 = vmatprep.subr.bf16.mxu0 %v2446
      %2510 = vmatpush1.bf16.msra.mxu0 %v2445
      %2511 = vmatprep.subr.bf16.mxu0 %v2448
      %2512 = vmatpush1.bf16.msra.mxu0 %v2447
      %2513 = vmatprep.subr.bf16.mxu0 %v2450
      %2514 = vmatpush1.bf16.msra.mxu0 %v2449
      %2515 = vmatprep.subr.bf16.mxu0 %v2452
      %2516 = vmatpush1.bf16.msra.mxu0 %v2451
      %2517 = vmatprep.subr.bf16.mxu0 %v2454
      %2518 = vmatpush1.bf16.msra.mxu0 %v2453
      %2519 = vmatprep.subr.bf16.mxu0 %v2456
      %2520 = vmatpush1.bf16.msra.mxu0 %v2455
      %2521 = vmatprep.subr.bf16.mxu0 %v2458
      %2522 = vmatpush1.bf16.msra.mxu0 %v2457
      %2523 = vmatprep.subr.bf16.mxu0 %v2460
      %2524 = vmatpush1.bf16.msra.mxu0 %v2459
      %2525 = vmatprep.subr.bf16.mxu0 %v2462
      %2526 = vmatpush1.bf16.msra.mxu0 %v2461
      %2527 = vmatprep.mubr.bf16.mxu0 %v2324
      %2528 = vmatmul.mubr.bf16.gmra.mrb[0].mxu0 %v2323
      %v2529 = vpop.f32.mrb[0].mxu0
      %v2530 = vadd.f32 %v2330, %v2529
      %v2531 = vpop.f32.mrb[0].mxu0
      %v2532 = vadd.f32 %v2334, %v2531
      %v2533 = vpop.f32.mrb[0].mxu0
      %v2534 = vadd.f32 %v2330, %v2533
      %v2535 = vpop.f32.mrb[0].mxu0
      %v2536 = vadd.f32 %v2334, %v2535
      %2537 = vmatprep.mubr.bf16.mxu0 %v2326
      %2538 = vmatmul.mubr.bf16.gmra.mrb[0].mxu0 %v2325
      %v2539 = vpop.f32.mrb[0].mxu0
      %v2540 = vadd.f32 %v2330, %v2539
      %v2541 = vpop.f32.mrb[0].mxu0
      %v2542 = vadd.f32 %v2334, %v2541
      %v2543 = vpop.f32.mrb[0].mxu0
      %v2544 = vadd.f32 %v2330, %v2543
      %v2545 = vpop.f32.mrb[0].mxu0
      %v2546 = vadd.f32 %v2334, %v2545
      %2547 = vdwg.mxu0
      %v2548 = vadd.f32 %v1062, %v2530
      %v2549 = vadd.f32 %v1063, %v2532
      %v2550 = vadd.f32 %v1064, %v2534
      %v2551 = vadd.f32 %v1065, %v2536
      %v2552 = vadd.f32 %v1066, %v2540
      %v2553 = vadd.f32 %v1067, %v2542
      %v2554 = vadd.f32 %v1068, %v2544
      %v2555 = vadd.f32 %v1069, %v2546
      %v2556 = vadd.f32 %v2548, %v2549
      %2557 = vadd.xlane.f32.xlu0 %v2556
      %v2558 = vpop.xlane.xlu0 %2557
      %v2559 = vadd.f32 %v2550, %v2551
      %2560 = vadd.xlane.f32.xlu0 %v2559
      %v2561 = vpop.xlane.xlu0 %2560
      %v2562 = vadd.f32 %v2552, %v2553
      %2563 = vadd.xlane.f32.xlu0 %v2562
      %v2564 = vpop.xlane.xlu0 %2563
      %v2565 = vadd.f32 %v2554, %v2555
      %2566 = vadd.xlane.f32.xlu0 %v2565
      %v2567 = vpop.xlane.xlu0 %2566
      %v2568 = vrcp.pop 256.0
      %v2569 = vmul.f32 %v2558, %v2568
      %v2570 = vmul.f32 %v2561, %v2568
      %v2571 = vmul.f32 %v2564, %v2568
      %v2572 = vmul.f32 %v2567, %v2568
      %v2573 = vmul.f32 %v2548, %v2548
      %v2574 = vmul.f32 %v2549, %v2549
      %v2575 = vmul.f32 %v2550, %v2550
      %v2576 = vmul.f32 %v2551, %v2551
      %v2577 = vmul.f32 %v2552, %v2552
      %v2578 = vmul.f32 %v2553, %v2553
      %v2579 = vmul.f32 %v2554, %v2554
      %v2580 = vmul.f32 %v2555, %v2555
      %v2581 = vadd.f32 %v2573, %v2574
      %2582 = vadd.xlane.f32.xlu0 %v2581
      %v2583 = vpop.xlane.xlu0 %2582
      %v2584 = vadd.f32 %v2575, %v2576
      %2585 = vadd.xlane.f32.xlu0 %v2584
      %v2586 = vpop.xlane.xlu0 %2585
      %v2587 = vadd.f32 %v2577, %v2578
      %2588 = vadd.xlane.f32.xlu0 %v2587
      %v2589 = vpop.xlane.xlu0 %2588
      %v2590 = vadd.f32 %v2579, %v2580
      %2591 = vadd.xlane.f32.xlu0 %v2590
      %v2592 = vpop.xlane.xlu0 %2591
      %v2593 = vmul.f32 %v2583, %v2568
      %v2594 = vmul.f32 %v2586, %v2568
      %v2595 = vmul.f32 %v2589, %v2568
      %v2596 = vmul.f32 %v2592, %v2568
      %v2597 = vmul.f32 %v2569, %v2569
      %v2598 = vmul.f32 %v2570, %v2570
      %v2599 = vmul.f32 %v2571, %v2571
      %v2600 = vmul.f32 %v2572, %v2572
      %v2601 = vsub.f32 %v2593, %v2597
      %v2602 = vsub.f32 %v2594, %v2598
      %v2603 = vsub.f32 %v2595, %v2599
      %v2604 = vsub.f32 %v2596, %v2600
      %v2605 = vadd.f32 %v2601, 1e-05
      %v2606 = vadd.f32 %v2602, 1e-05
      %v2607 = vadd.f32 %v2603, 1e-05
      %v2608 = vadd.f32 %v2604, 1e-05
      %v2609 = vrsqrt.pop %v2605
      %v2610 = vrsqrt.pop %v2606
      %v2611 = vrsqrt.pop %v2607
      %v2612 = vrsqrt.pop %v2608
      %v2613 = vsub.f32 %v2548, %v2569
      %v2614 = vsub.f32 %v2549, %v2569
      %v2615 = vsub.f32 %v2550, %v2570
      %v2616 = vsub.f32 %v2551, %v2570
      %v2617 = vsub.f32 %v2552, %v2571
      %v2618 = vsub.f32 %v2553, %v2571
      %v2619 = vsub.f32 %v2554, %v2572
      %v2620 = vsub.f32 %v2555, %v2572
      %v2621 = vmul.f32 %v2613, %v2609
      %v2622 = vmul.f32 %v2614, %v2609
      %v2623 = vmul.f32 %v2615, %v2610
      %v2624 = vmul.f32 %v2616, %v2610
      %v2625 = vmul.f32 %v2617, %v2611
      %v2626 = vmul.f32 %v2618, %v2611
      %v2627 = vmul.f32 %v2619, %v2612
      %v2628 = vmul.f32 %v2620, %v2612
      %v2629 = vlaneseq
      %v2630 = vshrl.u32 %v2629, 7
      %v2631 = vsub.s32 2, %v2630
      %v2632 = vrot.slane %v1227, %v2631
      %v2633 = vlaneseq
      %v2634 = vshrl.u32 %v2633, 7
      %v2635 = vsub.s32 2, %v2634
      %v2636 = vrot.slane %v1228, %v2635
      %v2637 = vmul.f32 %v2621, %v2632
      %v2638 = vmul.f32 %v2622, %v2636
      %v2639 = vmul.f32 %v2623, %v2632
      %v2640 = vmul.f32 %v2624, %v2636
      %v2641 = vmul.f32 %v2625, %v2632
      %v2642 = vmul.f32 %v2626, %v2636
      %v2643 = vmul.f32 %v2627, %v2632
      %v2644 = vmul.f32 %v2628, %v2636
      %v2645 = vlaneseq
      %v2646 = vshrl.u32 %v2645, 7
      %v2647 = vsub.s32 3, %v2646
      %v2648 = vrot.slane %v1227, %v2647
      %v2649 = vlaneseq
      %v2650 = vshrl.u32 %v2649, 7
      %v2651 = vsub.s32 3, %v2650
      %v2652 = vrot.slane %v1228, %v2651
      %v2653 = vadd.f32 %v2637, %v2648
      %v2654 = vadd.f32 %v2638, %v2652
      %v2655 = vadd.f32 %v2639, %v2648
      %v2656 = vadd.f32 %v2640, %v2652
      %v2657 = vadd.f32 %v2641, %v2648
      %v2658 = vadd.f32 %v2642, %v2652
      %v2659 = vadd.f32 %v2643, %v2648
      %v2660 = vadd.f32 %v2644, %v2652
      %v2661 = vld [vmem:[%s10] sm:$0xf]
      %v2662 = vld [vmem:[%s10 + $0x4] sm:$0xf]
      %v2663 = vld [vmem:[%s10 + $0x8] sm:$0xf]
      %v2664 = vld [vmem:[%s10 + $0xc] sm:$0xf]
      %v2665 = vld [vmem:[%s10 + $0x10] sm:$0xf]
      %v2666 = vld [vmem:[%s10 + $0x14] sm:$0xf]
      %v2667 = vld [vmem:[%s10 + $0x18] sm:$0xf]
      %v2668 = vld [vmem:[%s10 + $0x1c] sm:$0xf]
      %v2669 = vld [vmem:[%s10 + $0x20] sm:$0xf]
      %v2670 = vld [vmem:[%s10 + $0x24] sm:$0xf]
      %v2671 = vld [vmem:[%s10 + $0x28] sm:$0xf]
      %v2672 = vld [vmem:[%s10 + $0x2c] sm:$0xf]
      %v2673 = vld [vmem:[%s10 + $0x30] sm:$0xf]
      %v2674 = vld [vmem:[%s10 + $0x34] sm:$0xf]
      %v2675 = vld [vmem:[%s10 + $0x38] sm:$0xf]
      %v2676 = vld [vmem:[%s10 + $0x3c] sm:$0xf]
      %v2677 = vld [vmem:[%s10 + $0x40] sm:$0xf]
      %v2678 = vld [vmem:[%s10 + $0x44] sm:$0xf]
      %v2679 = vld [vmem:[%s10 + $0x48] sm:$0xf]
      %v2680 = vld [vmem:[%s10 + $0x4c] sm:$0xf]
      %v2681 = vld [vmem:[%s10 + $0x50] sm:$0xf]
      %v2682 = vld [vmem:[%s10 + $0x54] sm:$0xf]
      %v2683 = vld [vmem:[%s10 + $0x58] sm:$0xf]
      %v2684 = vld [vmem:[%s10 + $0x5c] sm:$0xf]
      %v2685 = vld [vmem:[%s10 + $0x60] sm:$0xf]
      %v2686 = vld [vmem:[%s10 + $0x64] sm:$0xf]
      %v2687 = vld [vmem:[%s10 + $0x68] sm:$0xf]
      %v2688 = vld [vmem:[%s10 + $0x6c] sm:$0xf]
      %v2689 = vld [vmem:[%s10 + $0x70] sm:$0xf]
      %v2690 = vld [vmem:[%s10 + $0x74] sm:$0xf]
      %v2691 = vld [vmem:[%s10 + $0x78] sm:$0xf]
      %v2692 = vld [vmem:[%s10 + $0x7c] sm:$0xf]
      %v2693 = vpack.c.bf16 %v2655, %v2653
      %v2694 = vpack.c.bf16 %v2656, %v2654
      %v2695 = vpack.c.bf16 %v2659, %v2657
      %v2696 = vpack.c.bf16 %v2660, %v2658
      %v2697 = vlaneseq
      %v2698 = vshrl.u32 %v2697, 7
      %v2699 = vsub.s32 4, %v2698
      %v2700 = vrot.slane %v1227, %v2699
      %v2733 = vunpack.c.l.b16 %v2661
      %v2734 = vunpack.c.l.b16 %v2662
      %v2735 = vunpack.c.l.b16 %v2663
      %v2736 = vunpack.c.l.b16 %v2664
      %v2737 = vunpack.c.l.b16 %v2665
      %v2738 = vunpack.c.l.b16 %v2666
      %v2739 = vunpack.c.l.b16 %v2667
      %v2740 = vunpack.c.l.b16 %v2668
      %v2741 = vunpack.c.l.b16 %v2669
      %v2742 = vunpack.c.l.b16 %v2670
      %v2743 = vunpack.c.l.b16 %v2671
      %v2744 = vunpack.c.l.b16 %v2672
      %v2745 = vunpack.c.l.b16 %v2673
      %v2746 = vunpack.c.l.b16 %v2674
      %v2747 = vunpack.c.l.b16 %v2675
      %v2748 = vunpack.c.l.b16 %v2676
      %v2749 = vunpack.c.l.b16 %v2677
      %v2750 = vunpack.c.l.b16 %v2678
      %v2751 = vunpack.c.l.b16 %v2679
      %v2752 = vunpack.c.l.b16 %v2680
      %v2753 = vunpack.c.l.b16 %v2681
      %v2754 = vunpack.c.l.b16 %v2682
      %v2755 = vunpack.c.l.b16 %v2683
      %v2756 = vunpack.c.l.b16 %v2684
      %v2757 = vunpack.c.l.b16 %v2685
      %v2758 = vunpack.c.l.b16 %v2686
      %v2759 = vunpack.c.l.b16 %v2687
      %v2760 = vunpack.c.l.b16 %v2688
      %v2761 = vunpack.c.l.b16 %v2689
      %v2762 = vunpack.c.l.b16 %v2690
      %v2763 = vunpack.c.l.b16 %v2691
      %v2764 = vunpack.c.l.b16 %v2692
      %v2765 = vpack.c.b16 %v2734, %v2733
      %v2766 = vpack.c.b16 %v2736, %v2735
      %v2767 = vpack.c.b16 %v2738, %v2737
      %v2768 = vpack.c.b16 %v2740, %v2739
      %v2769 = vpack.c.b16 %v2742, %v2741
      %v2770 = vpack.c.b16 %v2744, %v2743
      %v2771 = vpack.c.b16 %v2746, %v2745
      %v2772 = vpack.c.b16 %v2748, %v2747
      %v2773 = vpack.c.b16 %v2750, %v2749
      %v2774 = vpack.c.b16 %v2752, %v2751
      %v2775 = vpack.c.b16 %v2754, %v2753
      %v2776 = vpack.c.b16 %v2756, %v2755
      %v2777 = vpack.c.b16 %v2758, %v2757
      %v2778 = vpack.c.b16 %v2760, %v2759
      %v2779 = vpack.c.b16 %v2762, %v2761
      %v2780 = vpack.c.b16 %v2764, %v2763
      %2797 = vmatprep.subr.bf16.mxu0 0
      %2798 = vmatpush1.bf16.msra.mxu0 %v2765
      %2799 = vmatprep.subr.bf16.mxu0 0
      %2800 = vmatpush1.bf16.msra.mxu0 %v2766
      %2801 = vmatprep.subr.bf16.mxu0 0
      %2802 = vmatpush1.bf16.msra.mxu0 %v2767
      %2803 = vmatprep.subr.bf16.mxu0 0
      %2804 = vmatpush1.bf16.msra.mxu0 %v2768
      %2805 = vmatprep.subr.bf16.mxu0 0
      %2806 = vmatpush1.bf16.msra.mxu0 %v2769
      %2807 = vmatprep.subr.bf16.mxu0 0
      %2808 = vmatpush1.bf16.msra.mxu0 %v2770
      %2809 = vmatprep.subr.bf16.mxu0 0
      %2810 = vmatpush1.bf16.msra.mxu0 %v2771
      %2811 = vmatprep.subr.bf16.mxu0 0
      %2812 = vmatpush1.bf16.msra.mxu0 %v2772
      %2813 = vmatprep.subr.bf16.mxu0 0
      %2814 = vmatpush1.bf16.msra.mxu0 %v2773
      %2815 = vmatprep.subr.bf16.mxu0 0
      %2816 = vmatpush1.bf16.msra.mxu0 %v2774
      %2817 = vmatprep.subr.bf16.mxu0 0
      %2818 = vmatpush1.bf16.msra.mxu0 %v2775
      %2819 = vmatprep.subr.bf16.mxu0 0
      %2820 = vmatpush1.bf16.msra.mxu0 %v2776
      %2821 = vmatprep.subr.bf16.mxu0 0
      %2822 = vmatpush1.bf16.msra.mxu0 %v2777
      %2823 = vmatprep.subr.bf16.mxu0 0
      %2824 = vmatpush1.bf16.msra.mxu0 %v2778
      %2825 = vmatprep.subr.bf16.mxu0 0
      %2826 = vmatpush1.bf16.msra.mxu0 %v2779
      %2827 = vmatprep.subr.bf16.mxu0 0
      %2828 = vmatpush1.bf16.msra.mxu0 %v2780
      %2829 = vmatprep.mubr.bf16.mxu0 %v2694
      %2830 = vmatmul.mubr.bf16.gmra.mrb[0].mxu0 %v2693
      %v2831 = vpop.f32.mrb[0].mxu0
      %v2832 = vadd.f32 %v2700, %v2831
      %v2833 = vpop.f32.mrb[0].mxu0
      %v2834 = vpop.f32.mrb[0].mxu0
      %v2835 = vadd.f32 %v2700, %v2834
      %v2836 = vpop.f32.mrb[0].mxu0
      %2837 = vmatprep.mubr.bf16.mxu0 %v2696
      %2838 = vmatmul.mubr.bf16.gmra.mrb[0].mxu0 %v2695
      %v2839 = vpop.f32.mrb[0].mxu0
      %v2840 = vadd.f32 %v2700, %v2839
      %v2841 = vpop.f32.mrb[0].mxu0
      %v2842 = vpop.f32.mrb[0].mxu0
      %v2843 = vadd.f32 %v2700, %v2842
      %v2844 = vpop.f32.mrb[0].mxu0
      %2845 = vdwg.mxu0
      %v2846 = vmax.f32 %v2832, 0.0
      %v2847 = vmax.f32 %v2835, 0.0
      %v2848 = vmax.f32 %v2840, 0.0
      %v2849 = vmax.f32 %v2843, 0.0
      %v2850 = vld [vmem:[%s11] sm:$0xff]
      %v2851 = vld [vmem:[%s11 + $0x8] sm:$0xff]
      %v2852 = vld [vmem:[%s11 + $0x10] sm:$0xff]
      %v2853 = vld [vmem:[%s11 + $0x18] sm:$0xff]
      %v2854 = vld [vmem:[%s11 + $0x20] sm:$0xff]
      %v2855 = vld [vmem:[%s11 + $0x28] sm:$0xff]
      %v2856 = vld [vmem:[%s11 + $0x30] sm:$0xff]
      %v2857 = vld [vmem:[%s11 + $0x38] sm:$0xff]
      %v2858 = vpack.c.bf16 %v2847, %v2846
      %v2859 = vpack.c.bf16 %v2849, %v2848
      %v2860 = vlaneseq
      %v2861 = vshrl.u32 %v2860, 7
      %v2862 = vsub.s32 5, %v2861
      %v2863 = vrot.slane %v1227, %v2862
      %v2864 = vlaneseq
      %v2865 = vshrl.u32 %v2864, 7
      %v2866 = vsub.s32 5, %v2865
      %v2867 = vrot.slane %v1228, %v2866
      %v2876 = vunpack.c.l.b16 %v2850
      %v2877 = vunpack.c.h.b16 %v2850
      %v2878 = vunpack.c.l.b16 %v2851
      %v2879 = vunpack.c.h.b16 %v2851
      %v2880 = vunpack.c.l.b16 %v2852
      %v2881 = vunpack.c.h.b16 %v2852
      %v2882 = vunpack.c.l.b16 %v2853
      %v2883 = vunpack.c.h.b16 %v2853
      %v2884 = vunpack.c.l.b16 %v2854
      %v2885 = vunpack.c.h.b16 %v2854
      %v2886 = vunpack.c.l.b16 %v2855
      %v2887 = vunpack.c.h.b16 %v2855
      %v2888 = vunpack.c.l.b16 %v2856
      %v2889 = vunpack.c.h.b16 %v2856
      %v2890 = vunpack.c.l.b16 %v2857
      %v2891 = vunpack.c.h.b16 %v2857
      %v2892 = vpack.c.b16 %v2878, %v2876
      %v2893 = vpack.c.b16 %v2879, %v2877
      %v2894 = vpack.c.b16 %v2882, %v2880
      %v2895 = vpack.c.b16 %v2883, %v2881
      %v2896 = vpack.c.b16 %v2886, %v2884
      %v2897 = vpack.c.b16 %v2887, %v2885
      %v2898 = vpack.c.b16 %v2890, %v2888
      %v2899 = vpack.c.b16 %v2891, %v2889
      %vm2908 = vcmask 523264
      %v2910 = vsel %vm2908, %v2858, 0
      %v2913 = vsel %vm2908, %v2859, 0
      %2915 = vmatprep.subr.bf16.mxu0 %v2893
      %2916 = vmatpush1.bf16.msra.mxu0 %v2892
      %2917 = vmatprep.subr.bf16.mxu0 %v2895
      %2918 = vmatpush1.bf16.msra.mxu0 %v2894
      %2919 = vmatprep.subr.bf16.mxu0 %v2897
      %2920 = vmatpush1.bf16.msra.mxu0 %v2896
      %2921 = vmatprep.subr.bf16.mxu0 %v2899
      %2922 = vmatpush1.bf16.msra.mxu0 %v2898
      %2923 = vmatprep.subr.bf16.mxu0 0
      %2924 = vmatpush1.bf16.msra.mxu0 0
      %2925 = vmatprep.subr.bf16.mxu0 0
      %2926 = vmatpush1.bf16.msra.mxu0 0
      %2927 = vmatprep.subr.bf16.mxu0 0
      %2928 = vmatpush1.bf16.msra.mxu0 0
      %2929 = vmatprep.subr.bf16.mxu0 0
      %2930 = vmatpush1.bf16.msra.mxu0 0
      %2931 = vmatprep.subr.bf16.mxu0 0
      %2932 = vmatpush1.bf16.msra.mxu0 0
      %2933 = vmatprep.subr.bf16.mxu0 0
      %2934 = vmatpush1.bf16.msra.mxu0 0
      %2935 = vmatprep.subr.bf16.mxu0 0
      %2936 = vmatpush1.bf16.msra.mxu0 0
      %2937 = vmatprep.subr.bf16.mxu0 0
      %2938 = vmatpush1.bf16.msra.mxu0 0
      %2939 = vmatprep.subr.bf16.mxu0 0
      %2940 = vmatpush1.bf16.msra.mxu0 0
      %2941 = vmatprep.subr.bf16.mxu0 0
      %2942 = vmatpush1.bf16.msra.mxu0 0
      %2943 = vmatprep.subr.bf16.mxu0 0
      %2944 = vmatpush1.bf16.msra.mxu0 0
      %2945 = vmatprep.subr.bf16.mxu0 0
      %2946 = vmatpush1.bf16.msra.mxu0 0
      %2947 = vmatprep.mubr.bf16.mxu0 0
      %2948 = vmatmul.mubr.bf16.gmra.mrb[0].mxu0 %v2910
      %v2949 = vpop.f32.mrb[0].mxu0
      %v2950 = vadd.f32 %v2863, %v2949
      %v2951 = vpop.f32.mrb[0].mxu0
      %v2952 = vadd.f32 %v2867, %v2951
      %v2953 = vpop.f32.mrb[0].mxu0
      %v2954 = vadd.f32 %v2863, %v2953
      %v2955 = vpop.f32.mrb[0].mxu0
      %v2956 = vadd.f32 %v2867, %v2955
      %2957 = vmatprep.mubr.bf16.mxu0 0
      %2958 = vmatmul.mubr.bf16.gmra.mrb[0].mxu0 %v2913
      %v2959 = vpop.f32.mrb[0].mxu0
      %v2960 = vadd.f32 %v2863, %v2959
      %v2961 = vpop.f32.mrb[0].mxu0
      %v2962 = vadd.f32 %v2867, %v2961
      %v2963 = vpop.f32.mrb[0].mxu0
      %v2964 = vadd.f32 %v2863, %v2963
      %v2965 = vpop.f32.mrb[0].mxu0
      %v2966 = vadd.f32 %v2867, %v2965
      %2967 = vdwg.mxu0
      %v2968 = vadd.f32 %v2653, %v2950
      %v2969 = vadd.f32 %v2654, %v2952
      %v2970 = vadd.f32 %v2655, %v2954
      %v2971 = vadd.f32 %v2656, %v2956
      %v2972 = vadd.f32 %v2657, %v2960
      %v2973 = vadd.f32 %v2658, %v2962
      %v2974 = vadd.f32 %v2659, %v2964
      %v2975 = vadd.f32 %v2660, %v2966
      %v2976 = vadd.f32 %v2968, %v2969
      %2977 = vadd.xlane.f32.xlu0 %v2976
      %v2978 = vpop.xlane.xlu0 %2977
      %v2979 = vadd.f32 %v2970, %v2971
      %2980 = vadd.xlane.f32.xlu0 %v2979
      %v2981 = vpop.xlane.xlu0 %2980
      %v2982 = vadd.f32 %v2972, %v2973
      %2983 = vadd.xlane.f32.xlu0 %v2982
      %v2984 = vpop.xlane.xlu0 %2983
      %v2985 = vadd.f32 %v2974, %v2975
      %2986 = vadd.xlane.f32.xlu0 %v2985
      %v2987 = vpop.xlane.xlu0 %2986
      %v2988 = vmul.f32 %v2978, %v2568
      %v2989 = vmul.f32 %v2981, %v2568
      %v2990 = vmul.f32 %v2984, %v2568
      %v2991 = vmul.f32 %v2987, %v2568
      %v2992 = vmul.f32 %v2968, %v2968
      %v2993 = vmul.f32 %v2969, %v2969
      %v2994 = vmul.f32 %v2970, %v2970
      %v2995 = vmul.f32 %v2971, %v2971
      %v2996 = vmul.f32 %v2972, %v2972
      %v2997 = vmul.f32 %v2973, %v2973
      %v2998 = vmul.f32 %v2974, %v2974
      %v2999 = vmul.f32 %v2975, %v2975
      %v3000 = vadd.f32 %v2992, %v2993
      %3001 = vadd.xlane.f32.xlu0 %v3000
      %v3002 = vpop.xlane.xlu0 %3001
      %v3003 = vadd.f32 %v2994, %v2995
      %3004 = vadd.xlane.f32.xlu0 %v3003
      %v3005 = vpop.xlane.xlu0 %3004
      %v3006 = vadd.f32 %v2996, %v2997
      %3007 = vadd.xlane.f32.xlu0 %v3006
      %v3008 = vpop.xlane.xlu0 %3007
      %v3009 = vadd.f32 %v2998, %v2999
      %3010 = vadd.xlane.f32.xlu0 %v3009
      %v3011 = vpop.xlane.xlu0 %3010
      %v3012 = vmul.f32 %v3002, %v2568
      %v3013 = vmul.f32 %v3005, %v2568
      %v3014 = vmul.f32 %v3008, %v2568
      %v3015 = vmul.f32 %v3011, %v2568
      %v3016 = vmul.f32 %v2988, %v2988
      %v3017 = vmul.f32 %v2989, %v2989
      %v3018 = vmul.f32 %v2990, %v2990
      %v3019 = vmul.f32 %v2991, %v2991
      %v3020 = vsub.f32 %v3012, %v3016
      %v3021 = vsub.f32 %v3013, %v3017
      %v3022 = vsub.f32 %v3014, %v3018
      %v3023 = vsub.f32 %v3015, %v3019
      %v3024 = vadd.f32 %v3020, 1e-05
      %v3025 = vadd.f32 %v3021, 1e-05
      %v3026 = vadd.f32 %v3022, 1e-05
      %v3027 = vadd.f32 %v3023, 1e-05
      %v3028 = vrsqrt.pop %v3024
      %v3029 = vrsqrt.pop %v3025
      %v3030 = vrsqrt.pop %v3026
      %v3031 = vrsqrt.pop %v3027
      %v3032 = vsub.f32 %v2968, %v2988
      %v3033 = vsub.f32 %v2969, %v2988
      %v3034 = vsub.f32 %v2970, %v2989
      %v3035 = vsub.f32 %v2971, %v2989
      %v3036 = vsub.f32 %v2972, %v2990
      %v3037 = vsub.f32 %v2973, %v2990
      %v3038 = vsub.f32 %v2974, %v2991
      %v3039 = vsub.f32 %v2975, %v2991
      %v3040 = vmul.f32 %v3032, %v3028
      %v3041 = vmul.f32 %v3033, %v3028
      %v3042 = vmul.f32 %v3034, %v3029
      %v3043 = vmul.f32 %v3035, %v3029
      %v3044 = vmul.f32 %v3036, %v3030
      %v3045 = vmul.f32 %v3037, %v3030
      %v3046 = vmul.f32 %v3038, %v3031
      %v3047 = vmul.f32 %v3039, %v3031
      %v3048 = vlaneseq
      %v3049 = vshrl.u32 %v3048, 7
      %v3050 = vsub.s32 6, %v3049
      %v3051 = vrot.slane %v1227, %v3050
      %v3052 = vlaneseq
      %v3053 = vshrl.u32 %v3052, 7
      %v3054 = vsub.s32 6, %v3053
      %v3055 = vrot.slane %v1228, %v3054
      %v3056 = vmul.f32 %v3040, %v3051
      %v3057 = vmul.f32 %v3041, %v3055
      %v3058 = vmul.f32 %v3042, %v3051
      %v3059 = vmul.f32 %v3043, %v3055
      %v3060 = vmul.f32 %v3044, %v3051
      %v3061 = vmul.f32 %v3045, %v3055
      %v3062 = vmul.f32 %v3046, %v3051
      %v3063 = vmul.f32 %v3047, %v3055
      %v3064 = vlaneseq
      %v3065 = vshrl.u32 %v3064, 7
      %v3066 = vsub.s32 7, %v3065
      %v3067 = vrot.slane %v1227, %v3066
      %v3068 = vlaneseq
      %v3069 = vshrl.u32 %v3068, 7
      %v3070 = vsub.s32 7, %v3069
      %v3071 = vrot.slane %v1228, %v3070
      %v3072 = vadd.f32 %v3056, %v3067
      %v3073 = vadd.f32 %v3057, %v3071
      %v3074 = vadd.f32 %v3058, %v3067
      %v3075 = vadd.f32 %v3059, %v3071
      %v3076 = vadd.f32 %v3060, %v3067
      %v3077 = vadd.f32 %v3061, %v3071
      %v3078 = vadd.f32 %v3062, %v3067
      %v3079 = vadd.f32 %v3063, %v3071
      %s3080 = scalar_lea.vmem %s12, 48
      %v3081 = vld [vmem:[%s3080] sm:$0xff]
      %v3082 = vld [vmem:[%s3080 + $0x8] sm:$0xff]
      %v3083 = vld [vmem:[%s3080 + $0x10] sm:$0xff]
      %v3084 = vld [vmem:[%s3080 + $0x18] sm:$0xff]
      %v3085 = vld [vmem:[%s3080 + $0x20] sm:$0xff]
      %v3086 = vld [vmem:[%s3080 + $0x28] sm:$0xff]
      %s3087 = scalar_lea.vmem %s8, 768
      %v3088 = vld [vmem:[%s3087] sm:$0xff]
      %v3089 = vld [vmem:[%s3087 + $0x8] sm:$0xff]
      %v3090 = vld [vmem:[%s3087 + $0x10] sm:$0xff]
      %v3091 = vld [vmem:[%s3087 + $0x18] sm:$0xff]
      %v3092 = vld [vmem:[%s3087 + $0x20] sm:$0xff]
      %v3093 = vld [vmem:[%s3087 + $0x28] sm:$0xff]
      %v3094 = vld [vmem:[%s3087 + $0x30] sm:$0xff]
      %v3095 = vld [vmem:[%s3087 + $0x38] sm:$0xff]
      %v3096 = vld [vmem:[%s3087 + $0x40] sm:$0xff]
      %v3097 = vld [vmem:[%s3087 + $0x48] sm:$0xff]
      %v3098 = vld [vmem:[%s3087 + $0x50] sm:$0xff]
      %v3099 = vld [vmem:[%s3087 + $0x58] sm:$0xff]
      %v3100 = vld [vmem:[%s3087 + $0x60] sm:$0xff]
      %v3101 = vld [vmem:[%s3087 + $0x68] sm:$0xff]
      %v3102 = vld [vmem:[%s3087 + $0x70] sm:$0xff]
      %v3103 = vld [vmem:[%s3087 + $0x78] sm:$0xff]
      %v3104 = vld [vmem:[%s3087 + $0x80] sm:$0xff]
      %v3105 = vld [vmem:[%s3087 + $0x88] sm:$0xff]
      %v3106 = vld [vmem:[%s3087 + $0x90] sm:$0xff]
      %v3107 = vld [vmem:[%s3087 + $0x98] sm:$0xff]
      %v3108 = vld [vmem:[%s3087 + $0xa0] sm:$0xff]
      %v3109 = vld [vmem:[%s3087 + $0xa8] sm:$0xff]
      %v3110 = vld [vmem:[%s3087 + $0xb0] sm:$0xff]
      %v3111 = vld [vmem:[%s3087 + $0xb8] sm:$0xff]
      %v3112 = vld [vmem:[%s3087 + $0xc0] sm:$0xff]
      %v3113 = vld [vmem:[%s3087 + $0xc8] sm:$0xff]
      %v3114 = vld [vmem:[%s3087 + $0xd0] sm:$0xff]
      %v3115 = vld [vmem:[%s3087 + $0xd8] sm:$0xff]
      %v3116 = vld [vmem:[%s3087 + $0xe0] sm:$0xff]
      %v3117 = vld [vmem:[%s3087 + $0xe8] sm:$0xff]
      %v3118 = vld [vmem:[%s3087 + $0xf0] sm:$0xff]
      %v3119 = vld [vmem:[%s3087 + $0xf8] sm:$0xff]
      %v3120 = vld [vmem:[%s3087 + $0x100] sm:$0xff]
      %v3121 = vld [vmem:[%s3087 + $0x108] sm:$0xff]
      %v3122 = vld [vmem:[%s3087 + $0x110] sm:$0xff]
      %v3123 = vld [vmem:[%s3087 + $0x118] sm:$0xff]
      %v3124 = vld [vmem:[%s3087 + $0x120] sm:$0xff]
      %v3125 = vld [vmem:[%s3087 + $0x128] sm:$0xff]
      %v3126 = vld [vmem:[%s3087 + $0x130] sm:$0xff]
      %v3127 = vld [vmem:[%s3087 + $0x138] sm:$0xff]
      %v3128 = vld [vmem:[%s3087 + $0x140] sm:$0xff]
      %v3129 = vld [vmem:[%s3087 + $0x148] sm:$0xff]
      %v3130 = vld [vmem:[%s3087 + $0x150] sm:$0xff]
      %v3131 = vld [vmem:[%s3087 + $0x158] sm:$0xff]
      %v3132 = vld [vmem:[%s3087 + $0x160] sm:$0xff]
      %v3133 = vld [vmem:[%s3087 + $0x168] sm:$0xff]
      %v3134 = vld [vmem:[%s3087 + $0x170] sm:$0xff]
      %v3135 = vld [vmem:[%s3087 + $0x178] sm:$0xff]
      %v3136 = vld [vmem:[%s3087 + $0x180] sm:$0xff]
      %v3137 = vld [vmem:[%s3087 + $0x188] sm:$0xff]
      %v3138 = vld [vmem:[%s3087 + $0x190] sm:$0xff]
      %v3139 = vld [vmem:[%s3087 + $0x198] sm:$0xff]
      %v3140 = vld [vmem:[%s3087 + $0x1a0] sm:$0xff]
      %v3141 = vld [vmem:[%s3087 + $0x1a8] sm:$0xff]
      %v3142 = vld [vmem:[%s3087 + $0x1b0] sm:$0xff]
      %v3143 = vld [vmem:[%s3087 + $0x1b8] sm:$0xff]
      %v3144 = vld [vmem:[%s3087 + $0x1c0] sm:$0xff]
      %v3145 = vld [vmem:[%s3087 + $0x1c8] sm:$0xff]
      %v3146 = vld [vmem:[%s3087 + $0x1d0] sm:$0xff]
      %v3147 = vld [vmem:[%s3087 + $0x1d8] sm:$0xff]
      %v3148 = vld [vmem:[%s3087 + $0x1e0] sm:$0xff]
      %v3149 = vld [vmem:[%s3087 + $0x1e8] sm:$0xff]
      %v3150 = vld [vmem:[%s3087 + $0x1f0] sm:$0xff]
      %v3151 = vld [vmem:[%s3087 + $0x1f8] sm:$0xff]
      %v3152 = vld [vmem:[%s3087 + $0x200] sm:$0xff]
      %v3153 = vld [vmem:[%s3087 + $0x208] sm:$0xff]
      %v3154 = vld [vmem:[%s3087 + $0x210] sm:$0xff]
      %v3155 = vld [vmem:[%s3087 + $0x218] sm:$0xff]
      %v3156 = vld [vmem:[%s3087 + $0x220] sm:$0xff]
      %v3157 = vld [vmem:[%s3087 + $0x228] sm:$0xff]
      %v3158 = vld [vmem:[%s3087 + $0x230] sm:$0xff]
      %v3159 = vld [vmem:[%s3087 + $0x238] sm:$0xff]
      %v3160 = vld [vmem:[%s3087 + $0x240] sm:$0xff]
      %v3161 = vld [vmem:[%s3087 + $0x248] sm:$0xff]
      %v3162 = vld [vmem:[%s3087 + $0x250] sm:$0xff]
      %v3163 = vld [vmem:[%s3087 + $0x258] sm:$0xff]
      %v3164 = vld [vmem:[%s3087 + $0x260] sm:$0xff]
      %v3165 = vld [vmem:[%s3087 + $0x268] sm:$0xff]
      %v3166 = vld [vmem:[%s3087 + $0x270] sm:$0xff]
      %v3167 = vld [vmem:[%s3087 + $0x278] sm:$0xff]
      %v3168 = vld [vmem:[%s3087 + $0x280] sm:$0xff]
      %v3169 = vld [vmem:[%s3087 + $0x288] sm:$0xff]
      %v3170 = vld [vmem:[%s3087 + $0x290] sm:$0xff]
      %v3171 = vld [vmem:[%s3087 + $0x298] sm:$0xff]
      %v3172 = vld [vmem:[%s3087 + $0x2a0] sm:$0xff]
      %v3173 = vld [vmem:[%s3087 + $0x2a8] sm:$0xff]
      %v3174 = vld [vmem:[%s3087 + $0x2b0] sm:$0xff]
      %v3175 = vld [vmem:[%s3087 + $0x2b8] sm:$0xff]
      %v3176 = vld [vmem:[%s3087 + $0x2c0] sm:$0xff]
      %v3177 = vld [vmem:[%s3087 + $0x2c8] sm:$0xff]
      %v3178 = vld [vmem:[%s3087 + $0x2d0] sm:$0xff]
      %v3179 = vld [vmem:[%s3087 + $0x2d8] sm:$0xff]
      %v3180 = vld [vmem:[%s3087 + $0x2e0] sm:$0xff]
      %v3181 = vld [vmem:[%s3087 + $0x2e8] sm:$0xff]
      %v3182 = vld [vmem:[%s3087 + $0x2f0] sm:$0xff]
      %v3183 = vld [vmem:[%s3087 + $0x2f8] sm:$0xff]
      %v3184 = vpack.c.bf16 %v3074, %v3072
      %v3185 = vpack.c.bf16 %v3075, %v3073
      %v3186 = vpack.c.bf16 %v3078, %v3076
      %v3187 = vpack.c.bf16 %v3079, %v3077
      %v3188 = vlaneseq
      %v3189 = vshrl.u32 %v3188, 7
      %v3190 = vsub.s32 0, %v3189
      %v3191 = vrot.slane %v3081, %v3190
      %v3192 = vlaneseq
      %v3193 = vshrl.u32 %v3192, 7
      %v3194 = vsub.s32 0, %v3193
      %v3195 = vrot.slane %v3082, %v3194
      %v3196 = vlaneseq
      %v3197 = vshrl.u32 %v3196, 7
      %v3198 = vsub.s32 0, %v3197
      %v3199 = vrot.slane %v3083, %v3198
      %v3200 = vlaneseq
      %v3201 = vshrl.u32 %v3200, 7
      %v3202 = vsub.s32 0, %v3201
      %v3203 = vrot.slane %v3084, %v3202
      %v3204 = vlaneseq
      %v3205 = vshrl.u32 %v3204, 7
      %v3206 = vsub.s32 0, %v3205
      %v3207 = vrot.slane %v3085, %v3206
      %v3208 = vlaneseq
      %v3209 = vshrl.u32 %v3208, 7
      %v3210 = vsub.s32 0, %v3209
      %v3211 = vrot.slane %v3086, %v3210
      %v3308 = vunpack.c.l.b16 %v3088
      %v3309 = vunpack.c.h.b16 %v3088
      %v3310 = vunpack.c.l.b16 %v3089
      %v3311 = vunpack.c.h.b16 %v3089
      %v3312 = vunpack.c.l.b16 %v3090
      %v3313 = vunpack.c.h.b16 %v3090
      %v3314 = vunpack.c.l.b16 %v3091
      %v3315 = vunpack.c.h.b16 %v3091
      %v3316 = vunpack.c.l.b16 %v3092
      %v3317 = vunpack.c.h.b16 %v3092
      %v3318 = vunpack.c.l.b16 %v3093
      %v3319 = vunpack.c.h.b16 %v3093
      %v3320 = vunpack.c.l.b16 %v3094
      %v3321 = vunpack.c.h.b16 %v3094
      %v3322 = vunpack.c.l.b16 %v3095
      %v3323 = vunpack.c.h.b16 %v3095
      %v3324 = vunpack.c.l.b16 %v3096
      %v3325 = vunpack.c.h.b16 %v3096
      %v3326 = vunpack.c.l.b16 %v3097
      %v3327 = vunpack.c.h.b16 %v3097
      %v3328 = vunpack.c.l.b16 %v3098
      %v3329 = vunpack.c.h.b16 %v3098
      %v3330 = vunpack.c.l.b16 %v3099
      %v3331 = vunpack.c.h.b16 %v3099
      %v3332 = vunpack.c.l.b16 %v3100
      %v3333 = vunpack.c.h.b16 %v3100
      %v3334 = vunpack.c.l.b16 %v3101
      %v3335 = vunpack.c.h.b16 %v3101
      %v3336 = vunpack.c.l.b16 %v3102
      %v3337 = vunpack.c.h.b16 %v3102
      %v3338 = vunpack.c.l.b16 %v3103
      %v3339 = vunpack.c.h.b16 %v3103
      %v3340 = vunpack.c.l.b16 %v3104
      %v3341 = vunpack.c.h.b16 %v3104
      %v3342 = vunpack.c.l.b16 %v3105
      %v3343 = vunpack.c.h.b16 %v3105
      %v3344 = vunpack.c.l.b16 %v3106
      %v3345 = vunpack.c.h.b16 %v3106
      %v3346 = vunpack.c.l.b16 %v3107
      %v3347 = vunpack.c.h.b16 %v3107
      %v3348 = vunpack.c.l.b16 %v3108
      %v3349 = vunpack.c.h.b16 %v3108
      %v3350 = vunpack.c.l.b16 %v3109
      %v3351 = vunpack.c.h.b16 %v3109
      %v3352 = vunpack.c.l.b16 %v3110
      %v3353 = vunpack.c.h.b16 %v3110
      %v3354 = vunpack.c.l.b16 %v3111
      %v3355 = vunpack.c.h.b16 %v3111
      %v3356 = vunpack.c.l.b16 %v3112
      %v3357 = vunpack.c.h.b16 %v3112
      %v3358 = vunpack.c.l.b16 %v3113
      %v3359 = vunpack.c.h.b16 %v3113
      %v3360 = vunpack.c.l.b16 %v3114
      %v3361 = vunpack.c.h.b16 %v3114
      %v3362 = vunpack.c.l.b16 %v3115
      %v3363 = vunpack.c.h.b16 %v3115
      %v3364 = vunpack.c.l.b16 %v3116
      %v3365 = vunpack.c.h.b16 %v3116
      %v3366 = vunpack.c.l.b16 %v3117
      %v3367 = vunpack.c.h.b16 %v3117
      %v3368 = vunpack.c.l.b16 %v3118
      %v3369 = vunpack.c.h.b16 %v3118
      %v3370 = vunpack.c.l.b16 %v3119
      %v3371 = vunpack.c.h.b16 %v3119
      %v3372 = vunpack.c.l.b16 %v3120
      %v3373 = vunpack.c.h.b16 %v3120
      %v3374 = vunpack.c.l.b16 %v3121
      %v3375 = vunpack.c.h.b16 %v3121
      %v3376 = vunpack.c.l.b16 %v3122
      %v3377 = vunpack.c.h.b16 %v3122
      %v3378 = vunpack.c.l.b16 %v3123
      %v3379 = vunpack.c.h.b16 %v3123
      %v3380 = vunpack.c.l.b16 %v3124
      %v3381 = vunpack.c.h.b16 %v3124
      %v3382 = vunpack.c.l.b16 %v3125
      %v3383 = vunpack.c.h.b16 %v3125
      %v3384 = vunpack.c.l.b16 %v3126
      %v3385 = vunpack.c.h.b16 %v3126
      %v3386 = vunpack.c.l.b16 %v3127
      %v3387 = vunpack.c.h.b16 %v3127
      %v3388 = vunpack.c.l.b16 %v3128
      %v3389 = vunpack.c.h.b16 %v3128
      %v3390 = vunpack.c.l.b16 %v3129
      %v3391 = vunpack.c.h.b16 %v3129
      %v3392 = vunpack.c.l.b16 %v3130
      %v3393 = vunpack.c.h.b16 %v3130
      %v3394 = vunpack.c.l.b16 %v3131
      %v3395 = vunpack.c.h.b16 %v3131
      %v3396 = vunpack.c.l.b16 %v3132
      %v3397 = vunpack.c.h.b16 %v3132
      %v3398 = vunpack.c.l.b16 %v3133
      %v3399 = vunpack.c.h.b16 %v3133
      %v3400 = vunpack.c.l.b16 %v3134
      %v3401 = vunpack.c.h.b16 %v3134
      %v3402 = vunpack.c.l.b16 %v3135
      %v3403 = vunpack.c.h.b16 %v3135
      %v3404 = vunpack.c.l.b16 %v3136
      %v3405 = vunpack.c.h.b16 %v3136
      %v3406 = vunpack.c.l.b16 %v3137
      %v3407 = vunpack.c.h.b16 %v3137
      %v3408 = vunpack.c.l.b16 %v3138
      %v3409 = vunpack.c.h.b16 %v3138
      %v3410 = vunpack.c.l.b16 %v3139
      %v3411 = vunpack.c.h.b16 %v3139
      %v3412 = vunpack.c.l.b16 %v3140
      %v3413 = vunpack.c.h.b16 %v3140
      %v3414 = vunpack.c.l.b16 %v3141
      %v3415 = vunpack.c.h.b16 %v3141
      %v3416 = vunpack.c.l.b16 %v3142
      %v3417 = vunpack.c.h.b16 %v3142
      %v3418 = vunpack.c.l.b16 %v3143
      %v3419 = vunpack.c.h.b16 %v3143
      %v3420 = vunpack.c.l.b16 %v3144
      %v3421 = vunpack.c.h.b16 %v3144
      %v3422 = vunpack.c.l.b16 %v3145
      %v3423 = vunpack.c.h.b16 %v3145
      %v3424 = vunpack.c.l.b16 %v3146
      %v3425 = vunpack.c.h.b16 %v3146
      %v3426 = vunpack.c.l.b16 %v3147
      %v3427 = vunpack.c.h.b16 %v3147
      %v3428 = vunpack.c.l.b16 %v3148
      %v3429 = vunpack.c.h.b16 %v3148
      %v3430 = vunpack.c.l.b16 %v3149
      %v3431 = vunpack.c.h.b16 %v3149
      %v3432 = vunpack.c.l.b16 %v3150
      %v3433 = vunpack.c.h.b16 %v3150
      %v3434 = vunpack.c.l.b16 %v3151
      %v3435 = vunpack.c.h.b16 %v3151
      %v3436 = vunpack.c.l.b16 %v3152
      %v3437 = vunpack.c.h.b16 %v3152
      %v3438 = vunpack.c.l.b16 %v3153
      %v3439 = vunpack.c.h.b16 %v3153
      %v3440 = vunpack.c.l.b16 %v3154
      %v3441 = vunpack.c.h.b16 %v3154
      %v3442 = vunpack.c.l.b16 %v3155
      %v3443 = vunpack.c.h.b16 %v3155
      %v3444 = vunpack.c.l.b16 %v3156
      %v3445 = vunpack.c.h.b16 %v3156
      %v3446 = vunpack.c.l.b16 %v3157
      %v3447 = vunpack.c.h.b16 %v3157
      %v3448 = vunpack.c.l.b16 %v3158
      %v3449 = vunpack.c.h.b16 %v3158
      %v3450 = vunpack.c.l.b16 %v3159
      %v3451 = vunpack.c.h.b16 %v3159
      %v3452 = vunpack.c.l.b16 %v3160
      %v3453 = vunpack.c.h.b16 %v3160
      %v3454 = vunpack.c.l.b16 %v3161
      %v3455 = vunpack.c.h.b16 %v3161
      %v3456 = vunpack.c.l.b16 %v3162
      %v3457 = vunpack.c.h.b16 %v3162
      %v3458 = vunpack.c.l.b16 %v3163
      %v3459 = vunpack.c.h.b16 %v3163
      %v3460 = vunpack.c.l.b16 %v3164
      %v3461 = vunpack.c.h.b16 %v3164
      %v3462 = vunpack.c.l.b16 %v3165
      %v3463 = vunpack.c.h.b16 %v3165
      %v3464 = vunpack.c.l.b16 %v3166
      %v3465 = vunpack.c.h.b16 %v3166
      %v3466 = vunpack.c.l.b16 %v3167
      %v3467 = vunpack.c.h.b16 %v3167
      %v3468 = vunpack.c.l.b16 %v3168
      %v3469 = vunpack.c.h.b16 %v3168
      %v3470 = vunpack.c.l.b16 %v3169
      %v3471 = vunpack.c.h.b16 %v3169
      %v3472 = vunpack.c.l.b16 %v3170
      %v3473 = vunpack.c.h.b16 %v3170
      %v3474 = vunpack.c.l.b16 %v3171
      %v3475 = vunpack.c.h.b16 %v3171
      %v3476 = vunpack.c.l.b16 %v3172
      %v3477 = vunpack.c.h.b16 %v3172
      %v3478 = vunpack.c.l.b16 %v3173
      %v3479 = vunpack.c.h.b16 %v3173
      %v3480 = vunpack.c.l.b16 %v3174
      %v3481 = vunpack.c.h.b16 %v3174
      %v3482 = vunpack.c.l.b16 %v3175
      %v3483 = vunpack.c.h.b16 %v3175
      %v3484 = vunpack.c.l.b16 %v3176
      %v3485 = vunpack.c.h.b16 %v3176
      %v3486 = vunpack.c.l.b16 %v3177
      %v3487 = vunpack.c.h.b16 %v3177
      %v3488 = vunpack.c.l.b16 %v3178
      %v3489 = vunpack.c.h.b16 %v3178
      %v3490 = vunpack.c.l.b16 %v3179
      %v3491 = vunpack.c.h.b16 %v3179
      %v3492 = vunpack.c.l.b16 %v3180
      %v3493 = vunpack.c.h.b16 %v3180
      %v3494 = vunpack.c.l.b16 %v3181
      %v3495 = vunpack.c.h.b16 %v3181
      %v3496 = vunpack.c.l.b16 %v3182
      %v3497 = vunpack.c.h.b16 %v3182
      %v3498 = vunpack.c.l.b16 %v3183
      %v3499 = vunpack.c.h.b16 %v3183
      %v3500 = vpack.c.b16 %v3314, %v3308
      %v3501 = vpack.c.b16 %v3315, %v3309
      %v3502 = vpack.c.b16 %v3316, %v3310
      %v3503 = vpack.c.b16 %v3317, %v3311
      %v3504 = vpack.c.b16 %v3318, %v3312
      %v3505 = vpack.c.b16 %v3319, %v3313
      %v3506 = vpack.c.b16 %v3326, %v3320
      %v3507 = vpack.c.b16 %v3327, %v3321
      %v3508 = vpack.c.b16 %v3328, %v3322
      %v3509 = vpack.c.b16 %v3329, %v3323
      %v3510 = vpack.c.b16 %v3330, %v3324
      %v3511 = vpack.c.b16 %v3331, %v3325
      %v3512 = vpack.c.b16 %v3338, %v3332
      %v3513 = vpack.c.b16 %v3339, %v3333
      %v3514 = vpack.c.b16 %v3340, %v3334
      %v3515 = vpack.c.b16 %v3341, %v3335
      %v3516 = vpack.c.b16 %v3342, %v3336
      %v3517 = vpack.c.b16 %v3343, %v3337
      %v3518 = vpack.c.b16 %v3350, %v3344
      %v3519 = vpack.c.b16 %v3351, %v3345
      %v3520 = vpack.c.b16 %v3352, %v3346
      %v3521 = vpack.c.b16 %v3353, %v3347
      %v3522 = vpack.c.b16 %v3354, %v3348
      %v3523 = vpack.c.b16 %v3355, %v3349
      %v3524 = vpack.c.b16 %v3362, %v3356
      %v3525 = vpack.c.b16 %v3363, %v3357
      %v3526 = vpack.c.b16 %v3364, %v3358
      %v3527 = vpack.c.b16 %v3365, %v3359
      %v3528 = vpack.c.b16 %v3366, %v3360
      %v3529 = vpack.c.b16 %v3367, %v3361
      %v3530 = vpack.c.b16 %v3374, %v3368
      %v3531 = vpack.c.b16 %v3375, %v3369
      %v3532 = vpack.c.b16 %v3376, %v3370
      %v3533 = vpack.c.b16 %v3377, %v3371
      %v3534 = vpack.c.b16 %v3378, %v3372
      %v3535 = vpack.c.b16 %v3379, %v3373
      %v3536 = vpack.c.b16 %v3386, %v3380
      %v3537 = vpack.c.b16 %v3387, %v3381
      %v3538 = vpack.c.b16 %v3388, %v3382
      %v3539 = vpack.c.b16 %v3389, %v3383
      %v3540 = vpack.c.b16 %v3390, %v3384
      %v3541 = vpack.c.b16 %v3391, %v3385
      %v3542 = vpack.c.b16 %v3398, %v3392
      %v3543 = vpack.c.b16 %v3399, %v3393
      %v3544 = vpack.c.b16 %v3400, %v3394
      %v3545 = vpack.c.b16 %v3401, %v3395
      %v3546 = vpack.c.b16 %v3402, %v3396
      %v3547 = vpack.c.b16 %v3403, %v3397
      %v3548 = vpack.c.b16 %v3410, %v3404
      %v3549 = vpack.c.b16 %v3411, %v3405
      %v3550 = vpack.c.b16 %v3412, %v3406
      %v3551 = vpack.c.b16 %v3413, %v3407
      %v3552 = vpack.c.b16 %v3414, %v3408
      %v3553 = vpack.c.b16 %v3415, %v3409
      %v3554 = vpack.c.b16 %v3422, %v3416
      %v3555 = vpack.c.b16 %v3423, %v3417
      %v3556 = vpack.c.b16 %v3424, %v3418
      %v3557 = vpack.c.b16 %v3425, %v3419
      %v3558 = vpack.c.b16 %v3426, %v3420
      %v3559 = vpack.c.b16 %v3427, %v3421
      %v3560 = vpack.c.b16 %v3434, %v3428
      %v3561 = vpack.c.b16 %v3435, %v3429
      %v3562 = vpack.c.b16 %v3436, %v3430
      %v3563 = vpack.c.b16 %v3437, %v3431
      %v3564 = vpack.c.b16 %v3438, %v3432
      %v3565 = vpack.c.b16 %v3439, %v3433
      %v3566 = vpack.c.b16 %v3446, %v3440
      %v3567 = vpack.c.b16 %v3447, %v3441
      %v3568 = vpack.c.b16 %v3448, %v3442
      %v3569 = vpack.c.b16 %v3449, %v3443
      %v3570 = vpack.c.b16 %v3450, %v3444
      %v3571 = vpack.c.b16 %v3451, %v3445
      %v3572 = vpack.c.b16 %v3458, %v3452
      %v3573 = vpack.c.b16 %v3459, %v3453
      %v3574 = vpack.c.b16 %v3460, %v3454
      %v3575 = vpack.c.b16 %v3461, %v3455
      %v3576 = vpack.c.b16 %v3462, %v3456
      %v3577 = vpack.c.b16 %v3463, %v3457
      %v3578 = vpack.c.b16 %v3470, %v3464
      %v3579 = vpack.c.b16 %v3471, %v3465
      %v3580 = vpack.c.b16 %v3472, %v3466
      %v3581 = vpack.c.b16 %v3473, %v3467
      %v3582 = vpack.c.b16 %v3474, %v3468
      %v3583 = vpack.c.b16 %v3475, %v3469
      %v3584 = vpack.c.b16 %v3482, %v3476
      %v3585 = vpack.c.b16 %v3483, %v3477
      %v3586 = vpack.c.b16 %v3484, %v3478
      %v3587 = vpack.c.b16 %v3485, %v3479
      %v3588 = vpack.c.b16 %v3486, %v3480
      %v3589 = vpack.c.b16 %v3487, %v3481
      %v3590 = vpack.c.b16 %v3494, %v3488
      %v3591 = vpack.c.b16 %v3495, %v3489
      %v3592 = vpack.c.b16 %v3496, %v3490
      %v3593 = vpack.c.b16 %v3497, %v3491
      %v3594 = vpack.c.b16 %v3498, %v3492
      %v3595 = vpack.c.b16 %v3499, %v3493
      %3692 = vmatprep.subr.bf16.mxu0 %v3501
      %3693 = vmatpush1.bf16.msra.mxu0 %v3500
      %3694 = vmatprep.subr.bf16.mxu0 %v3507
      %3695 = vmatpush1.bf16.msra.mxu0 %v3506
      %3696 = vmatprep.subr.bf16.mxu0 %v3513
      %3697 = vmatpush1.bf16.msra.mxu0 %v3512
      %3698 = vmatprep.subr.bf16.mxu0 %v3519
      %3699 = vmatpush1.bf16.msra.mxu0 %v3518
      %3700 = vmatprep.subr.bf16.mxu0 %v3525
      %3701 = vmatpush1.bf16.msra.mxu0 %v3524
      %3702 = vmatprep.subr.bf16.mxu0 %v3531
      %3703 = vmatpush1.bf16.msra.mxu0 %v3530
      %3704 = vmatprep.subr.bf16.mxu0 %v3537
      %3705 = vmatpush1.bf16.msra.mxu0 %v3536
      %3706 = vmatprep.subr.bf16.mxu0 %v3543
      %3707 = vmatpush1.bf16.msra.mxu0 %v3542
      %3708 = vmatprep.subr.bf16.mxu0 %v3549
      %3709 = vmatpush1.bf16.msra.mxu0 %v3548
      %3710 = vmatprep.subr.bf16.mxu0 %v3555
      %3711 = vmatpush1.bf16.msra.mxu0 %v3554
      %3712 = vmatprep.subr.bf16.mxu0 %v3561
      %3713 = vmatpush1.bf16.msra.mxu0 %v3560
      %3714 = vmatprep.subr.bf16.mxu0 %v3567
      %3715 = vmatpush1.bf16.msra.mxu0 %v3566
      %3716 = vmatprep.subr.bf16.mxu0 %v3573
      %3717 = vmatpush1.bf16.msra.mxu0 %v3572
      %3718 = vmatprep.subr.bf16.mxu0 %v3579
      %3719 = vmatpush1.bf16.msra.mxu0 %v3578
      %3720 = vmatprep.subr.bf16.mxu0 %v3585
      %3721 = vmatpush1.bf16.msra.mxu0 %v3584
      %3722 = vmatprep.subr.bf16.mxu0 %v3591
      %3723 = vmatpush1.bf16.msra.mxu0 %v3590
      %3724 = vmatprep.mubr.bf16.mxu0 %v3185
      %3725 = vmatmul.mubr.bf16.gmra.mrb[0].mxu0 %v3184
      %v3726 = vpop.f32.mrb[0].mxu0
      %v3727 = vadd.f32 %v3191, %v3726
      %v3728 = vpop.f32.mrb[0].mxu0
      %v3729 = vadd.f32 %v3195, %v3728
      %v3730 = vpop.f32.mrb[0].mxu0
      %v3731 = vadd.f32 %v3191, %v3730
      %v3732 = vpop.f32.mrb[0].mxu0
      %v3733 = vadd.f32 %v3195, %v3732
      %3734 = vmatprep.mubr.bf16.mxu0 %v3187
      %3735 = vmatmul.mubr.bf16.gmra.mrb[0].mxu0 %v3186
      %v3736 = vpop.f32.mrb[0].mxu0
      %v3737 = vadd.f32 %v3191, %v3736
      %v3738 = vpop.f32.mrb[0].mxu0
      %v3739 = vadd.f32 %v3195, %v3738
      %v3740 = vpop.f32.mrb[0].mxu0
      %v3741 = vadd.f32 %v3191, %v3740
      %v3742 = vpop.f32.mrb[0].mxu0
      %v3743 = vadd.f32 %v3195, %v3742
      %3744 = vdwg.mxu0
      %3745 = vmatprep.subr.bf16.mxu0 %v3503
      %3746 = vmatpush1.bf16.msra.mxu0 %v3502
      %3747 = vmatprep.subr.bf16.mxu0 %v3509
      %3748 = vmatpush1.bf16.msra.mxu0 %v3508
      %3749 = vmatprep.subr.bf16.mxu0 %v3515
      %3750 = vmatpush1.bf16.msra.mxu0 %v3514
      %3751 = vmatprep.subr.bf16.mxu0 %v3521
      %3752 = vmatpush1.bf16.msra.mxu0 %v3520
      %3753 = vmatprep.subr.bf16.mxu0 %v3527
      %3754 = vmatpush1.bf16.msra.mxu0 %v3526
      %3755 = vmatprep.subr.bf16.mxu0 %v3533
      %3756 = vmatpush1.bf16.msra.mxu0 %v3532
      %3757 = vmatprep.subr.bf16.mxu0 %v3539
      %3758 = vmatpush1.bf16.msra.mxu0 %v3538
      %3759 = vmatprep.subr.bf16.mxu0 %v3545
      %3760 = vmatpush1.bf16.msra.mxu0 %v3544
      %3761 = vmatprep.subr.bf16.mxu0 %v3551
      %3762 = vmatpush1.bf16.msra.mxu0 %v3550
      %3763 = vmatprep.subr.bf16.mxu0 %v3557
      %3764 = vmatpush1.bf16.msra.mxu0 %v3556
      %3765 = vmatprep.subr.bf16.mxu0 %v3563
      %3766 = vmatpush1.bf16.msra.mxu0 %v3562
      %3767 = vmatprep.subr.bf16.mxu0 %v3569
      %3768 = vmatpush1.bf16.msra.mxu0 %v3568
      %3769 = vmatprep.subr.bf16.mxu0 %v3575
      %3770 = vmatpush1.bf16.msra.mxu0 %v3574
      %3771 = vmatprep.subr.bf16.mxu0 %v3581
      %3772 = vmatpush1.bf16.msra.mxu0 %v3580
      %3773 = vmatprep.subr.bf16.mxu0 %v3587
      %3774 = vmatpush1.bf16.msra.mxu0 %v3586
      %3775 = vmatprep.subr.bf16.mxu0 %v3593
      %3776 = vmatpush1.bf16.msra.mxu0 %v3592
      %3777 = vmatprep.mubr.bf16.mxu0 %v3185
      %3778 = vmatmul.mubr.bf16.gmra.mrb[0].mxu0 %v3184
      %v3779 = vpop.f32.mrb[0].mxu0
      %v3780 = vadd.f32 %v3199, %v3779
      %v3781 = vpop.f32.mrb[0].mxu0
      %v3782 = vadd.f32 %v3203, %v3781
      %v3783 = vpop.f32.mrb[0].mxu0
      %v3784 = vadd.f32 %v3199, %v3783
      %v3785 = vpop.f32.mrb[0].mxu0
      %v3786 = vadd.f32 %v3203, %v3785
      %3787 = vmatprep.mubr.bf16.mxu0 %v3187
      %3788 = vmatmul.mubr.bf16.gmra.mrb[0].mxu0 %v3186
      %v3789 = vpop.f32.mrb[0].mxu0
      %v3790 = vadd.f32 %v3199, %v3789
      %v3791 = vpop.f32.mrb[0].mxu0
      %v3792 = vadd.f32 %v3203, %v3791
      %v3793 = vpop.f32.mrb[0].mxu0
      %v3794 = vadd.f32 %v3199, %v3793
      %v3795 = vpop.f32.mrb[0].mxu0
      %v3796 = vadd.f32 %v3203, %v3795
      %3797 = vdwg.mxu0
      %3798 = vmatprep.subr.bf16.mxu0 %v3505
      %3799 = vmatpush1.bf16.msra.mxu0 %v3504
      %3800 = vmatprep.subr.bf16.mxu0 %v3511
      %3801 = vmatpush1.bf16.msra.mxu0 %v3510
      %3802 = vmatprep.subr.bf16.mxu0 %v3517
      %3803 = vmatpush1.bf16.msra.mxu0 %v3516
      %3804 = vmatprep.subr.bf16.mxu0 %v3523
      %3805 = vmatpush1.bf16.msra.mxu0 %v3522
      %3806 = vmatprep.subr.bf16.mxu0 %v3529
      %3807 = vmatpush1.bf16.msra.mxu0 %v3528
      %3808 = vmatprep.subr.bf16.mxu0 %v3535
      %3809 = vmatpush1.bf16.msra.mxu0 %v3534
      %3810 = vmatprep.subr.bf16.mxu0 %v3541
      %3811 = vmatpush1.bf16.msra.mxu0 %v3540
      %3812 = vmatprep.subr.bf16.mxu0 %v3547
      %3813 = vmatpush1.bf16.msra.mxu0 %v3546
      %3814 = vmatprep.subr.bf16.mxu0 %v3553
      %3815 = vmatpush1.bf16.msra.mxu0 %v3552
      %3816 = vmatprep.subr.bf16.mxu0 %v3559
      %3817 = vmatpush1.bf16.msra.mxu0 %v3558
      %3818 = vmatprep.subr.bf16.mxu0 %v3565
      %3819 = vmatpush1.bf16.msra.mxu0 %v3564
      %3820 = vmatprep.subr.bf16.mxu0 %v3571
      %3821 = vmatpush1.bf16.msra.mxu0 %v3570
      %3822 = vmatprep.subr.bf16.mxu0 %v3577
      %3823 = vmatpush1.bf16.msra.mxu0 %v3576
      %3824 = vmatprep.subr.bf16.mxu0 %v3583
      %3825 = vmatpush1.bf16.msra.mxu0 %v3582
      %3826 = vmatprep.subr.bf16.mxu0 %v3589
      %3827 = vmatpush1.bf16.msra.mxu0 %v3588
      %3828 = vmatprep.subr.bf16.mxu0 %v3595
      %3829 = vmatpush1.bf16.msra.mxu0 %v3594
      %3830 = vmatprep.mubr.bf16.mxu0 %v3185
      %3831 = vmatmul.mubr.bf16.gmra.mrb[0].mxu0 %v3184
      %v3832 = vpop.f32.mrb[0].mxu0
      %v3833 = vadd.f32 %v3207, %v3832
      %v3834 = vpop.f32.mrb[0].mxu0
      %v3835 = vadd.f32 %v3211, %v3834
      %v3836 = vpop.f32.mrb[0].mxu0
      %v3837 = vadd.f32 %v3207, %v3836
      %v3838 = vpop.f32.mrb[0].mxu0
      %v3839 = vadd.f32 %v3211, %v3838
      %3840 = vmatprep.mubr.bf16.mxu0 %v3187
      %3841 = vmatmul.mubr.bf16.gmra.mrb[0].mxu0 %v3186
      %v3842 = vpop.f32.mrb[0].mxu0
      %v3843 = vadd.f32 %v3207, %v3842
      %v3844 = vpop.f32.mrb[0].mxu0
      %v3845 = vadd.f32 %v3211, %v3844
      %v3846 = vpop.f32.mrb[0].mxu0
      %v3847 = vadd.f32 %v3207, %v3846
      %v3848 = vpop.f32.mrb[0].mxu0
      %v3849 = vadd.f32 %v3211, %v3848
      %3850 = vdwg.mxu0
      %v3851 = vmul.f32 %v3780, %v1140
      %v3852 = vmul.f32 %v3782, %v1141
      %v3853 = vmul.f32 %v3784, %v1142
      %v3854 = vmul.f32 %v3786, %v1143
      %v3855 = vmul.f32 %v3790, %v1144
      %v3856 = vmul.f32 %v3792, %v1145
      %v3857 = vmul.f32 %v3794, %v1146
      %v3858 = vmul.f32 %v3796, %v1147
      %v3859 = vmul.f32 %v3780, %v1148
      %v3860 = vmul.f32 %v3782, %v1149
      %v3861 = vmul.f32 %v3784, %v1150
      %v3862 = vmul.f32 %v3786, %v1151
      %v3863 = vmul.f32 %v3790, %v1152
      %v3864 = vmul.f32 %v3792, %v1153
      %v3865 = vmul.f32 %v3794, %v1154
      %v3866 = vmul.f32 %v3796, %v1155
      %v3867 = vmul.f32 %v3780, %v1156
      %v3868 = vmul.f32 %v3782, %v1157
      %v3869 = vmul.f32 %v3784, %v1158
      %v3870 = vmul.f32 %v3786, %v1159
      %v3871 = vmul.f32 %v3790, %v1160
      %v3872 = vmul.f32 %v3792, %v1161
      %v3873 = vmul.f32 %v3794, %v1162
      %v3874 = vmul.f32 %v3796, %v1163
      %v3875 = vmul.f32 %v3780, %v1164
      %v3876 = vmul.f32 %v3782, %v1165
      %v3877 = vmul.f32 %v3784, %v1166
      %v3878 = vmul.f32 %v3786, %v1167
      %v3879 = vmul.f32 %v3790, %v1168
      %v3880 = vmul.f32 %v3792, %v1169
      %v3881 = vmul.f32 %v3794, %v1170
      %v3882 = vmul.f32 %v3796, %v1171
      %v3883 = vmul.f32 %v3833, %v1140
      %v3884 = vmul.f32 %v3835, %v1141
      %v3885 = vmul.f32 %v3837, %v1142
      %v3886 = vmul.f32 %v3839, %v1143
      %v3887 = vmul.f32 %v3843, %v1144
      %v3888 = vmul.f32 %v3845, %v1145
      %v3889 = vmul.f32 %v3847, %v1146
      %v3890 = vmul.f32 %v3849, %v1147
      %v3891 = vmul.f32 %v3833, %v1148
      %v3892 = vmul.f32 %v3835, %v1149
      %v3893 = vmul.f32 %v3837, %v1150
      %v3894 = vmul.f32 %v3839, %v1151
      %v3895 = vmul.f32 %v3843, %v1152
      %v3896 = vmul.f32 %v3845, %v1153
      %v3897 = vmul.f32 %v3847, %v1154
      %v3898 = vmul.f32 %v3849, %v1155
      %v3899 = vmul.f32 %v3833, %v1156
      %v3900 = vmul.f32 %v3835, %v1157
      %v3901 = vmul.f32 %v3837, %v1158
      %v3902 = vmul.f32 %v3839, %v1159
      %v3903 = vmul.f32 %v3843, %v1160
      %v3904 = vmul.f32 %v3845, %v1161
      %v3905 = vmul.f32 %v3847, %v1162
      %v3906 = vmul.f32 %v3849, %v1163
      %v3907 = vmul.f32 %v3833, %v1164
      %v3908 = vmul.f32 %v3835, %v1165
      %v3909 = vmul.f32 %v3837, %v1166
      %v3910 = vmul.f32 %v3839, %v1167
      %v3911 = vmul.f32 %v3843, %v1168
      %v3912 = vmul.f32 %v3845, %v1169
      %v3913 = vmul.f32 %v3847, %v1170
      %v3914 = vmul.f32 %v3849, %v1171
      %v3915 = vpack.c.bf16 %v3731, %v3727
      %v3916 = vpack.c.bf16 %v3733, %v3729
      %v3917 = vpack.c.bf16 %v3741, %v3737
      %v3918 = vpack.c.bf16 %v3743, %v3739
      %v3919 = vpack.c.bf16 %v3853, %v3851
      %v3920 = vpack.c.bf16 %v3854, %v3852
      %v3921 = vpack.c.bf16 %v3857, %v3855
      %v3922 = vpack.c.bf16 %v3858, %v3856
      %v3923 = vpack.c.bf16 %v3861, %v3859
      %v3924 = vpack.c.bf16 %v3862, %v3860
      %v3925 = vpack.c.bf16 %v3865, %v3863
      %v3926 = vpack.c.bf16 %v3866, %v3864
      %v3927 = vpack.c.bf16 %v3869, %v3867
      %v3928 = vpack.c.bf16 %v3870, %v3868
      %v3929 = vpack.c.bf16 %v3873, %v3871
      %v3930 = vpack.c.bf16 %v3874, %v3872
      %v3931 = vpack.c.bf16 %v3877, %v3875
      %v3932 = vpack.c.bf16 %v3878, %v3876
      %v3933 = vpack.c.bf16 %v3881, %v3879
      %v3934 = vpack.c.bf16 %v3882, %v3880
      %3935 = vmatprep.subr.bf16.mxu0 %v3920
      %3936 = vmatpush1.bf16.xpose.msra.mxu0 %v3919
      %3937 = vmatprep.subr.bf16.mxu0 %v3922
      %3938 = vmatpush1.bf16.xpose.msra.mxu0 %v3921
      %3939 = vmatprep.subr.bf16.mxu0 %v3924
      %3940 = vmatpush1.bf16.xpose.msra.mxu0 %v3923
      %3941 = vmatprep.subr.bf16.mxu0 %v3926
      %3942 = vmatpush1.bf16.xpose.msra.mxu0 %v3925
      %3943 = vmatprep.subr.bf16.mxu0 %v3928
      %3944 = vmatpush1.bf16.xpose.msra.mxu0 %v3927
      %3945 = vmatprep.subr.bf16.mxu0 %v3930
      %3946 = vmatpush1.bf16.xpose.msra.mxu0 %v3929
      %3947 = vmatprep.subr.bf16.mxu0 %v3932
      %3948 = vmatpush1.bf16.xpose.msra.mxu0 %v3931
      %3949 = vmatprep.subr.bf16.mxu0 %v3934
      %3950 = vmatpush1.bf16.xpose.msra.mxu0 %v3933
      %3951 = vmatprep.subr.bf16.mxu0 0
      %3952 = vmatpush1.bf16.xpose.msra.mxu0 0
      %3953 = vmatprep.subr.bf16.mxu0 0
      %3954 = vmatpush1.bf16.xpose.msra.mxu0 0
      %3955 = vmatprep.subr.bf16.mxu0 0
      %3956 = vmatpush1.bf16.xpose.msra.mxu0 0
      %3957 = vmatprep.subr.bf16.mxu0 0
      %3958 = vmatpush1.bf16.xpose.msra.mxu0 0
      %3959 = vmatprep.subr.bf16.mxu0 0
      %3960 = vmatpush1.bf16.xpose.msra.mxu0 0
      %3961 = vmatprep.subr.bf16.mxu0 0
      %3962 = vmatpush1.bf16.xpose.msra.mxu0 0
      %3963 = vmatprep.subr.bf16.mxu0 0
      %3964 = vmatpush1.bf16.xpose.msra.mxu0 0
      %3965 = vmatprep.subr.bf16.mxu0 0
      %3966 = vmatpush1.bf16.xpose.msra.mxu0 0
      %3967 = vmatprep.mubr.bf16.mxu0 %v3916
      %3968 = vmatmul.mubr.bf16.gmra.mrb[0].mxu0 %v3915
      %v3969 = vpop.f32.mrb[0].mxu0
      %v3970 = vadd.f32 0.0, %v3969
      %v3971 = vpop.f32.mrb[0].mxu0
      %v3972 = vpop.f32.mrb[0].mxu0
      %v3973 = vadd.f32 0.0, %v3972
      %v3974 = vpop.f32.mrb[0].mxu0
      %3975 = vmatprep.mubr.bf16.mxu0 %v3918
      %3976 = vmatmul.mubr.bf16.gmra.mrb[0].mxu0 %v3917
      %v3977 = vpop.f32.mrb[0].mxu0
      %v3978 = vadd.f32 0.0, %v3977
      %v3979 = vpop.f32.mrb[0].mxu0
      %v3980 = vpop.f32.mrb[0].mxu0
      %v3981 = vadd.f32 0.0, %v3980
      %v3982 = vpop.f32.mrb[0].mxu0
      %3983 = vdwg.mxu0
      %v3984 = vmul.f32 %v3970, 0.125
      %v3985 = vmul.f32 %v3973, 0.125
      %v3986 = vmul.f32 %v3978, 0.125
      %v3987 = vmul.f32 %v3981, 0.125
      %v3988 = vadd.f32 %v3984, %v1223
      %v3989 = vadd.f32 %v3985, %v1224
      %v3990 = vadd.f32 %v3986, %v1225
      %v3991 = vadd.f32 %v3987, %v1226
      %3992 = vmax.xlane.f32.xlu0 %v3988
      %v3993 = vpop.xlane.xlu0 %3992
      %3994 = vmax.xlane.f32.xlu0 %v3989
      %v3995 = vpop.xlane.xlu0 %3994
      %3996 = vmax.xlane.f32.xlu0 %v3990
      %v3997 = vpop.xlane.xlu0 %3996
      %3998 = vmax.xlane.f32.xlu0 %v3991
      %v3999 = vpop.xlane.xlu0 %3998
      %v4000 = vsub.f32 %v3988, %v3993
      %v4001 = vsub.f32 %v3989, %v3995
      %v4002 = vsub.f32 %v3990, %v3997
      %v4003 = vsub.f32 %v3991, %v3999
      %v4004 = vmul.f32 %v4000, 1.442695
      %v4005 = vpow.pop %v4004
      %v4006 = vmul.f32 %v4001, 1.442695
      %v4007 = vpow.pop %v4006
      %v4008 = vmul.f32 %v4002, 1.442695
      %v4009 = vpow.pop %v4008
      %v4010 = vmul.f32 %v4003, 1.442695
      %v4011 = vpow.pop %v4010
      %v4012 = vpack.c.bf16 %v4007, %v4005
      %v4013 = vpack.c.bf16 %v4011, %v4009
      %4014 = vmatprep.subr.bf16.mxu0 0
      %4015 = vmatpush1.bf16.msra.mxu0 %v1205
      %4016 = vmatprep.subr.bf16.mxu0 0
      %4017 = vmatpush1.bf16.msra.mxu0 %v1206
      %4018 = vmatprep.subr.bf16.mxu0 0
      %4019 = vmatpush1.bf16.msra.mxu0 %v1207
      %4020 = vmatprep.subr.bf16.mxu0 0
      %4021 = vmatpush1.bf16.msra.mxu0 %v1208
      %4022 = vmatprep.subr.bf16.mxu0 0
      %4023 = vmatpush1.bf16.msra.mxu0 %v1209
      %4024 = vmatprep.subr.bf16.mxu0 0
      %4025 = vmatpush1.bf16.msra.mxu0 %v1210
      %4026 = vmatprep.subr.bf16.mxu0 0
      %4027 = vmatpush1.bf16.msra.mxu0 %v1211
      %4028 = vmatprep.subr.bf16.mxu0 0
      %4029 = vmatpush1.bf16.msra.mxu0 %v1212
      %4030 = vmatprep.subr.bf16.mxu0 0
      %4031 = vmatpush1.bf16.msra.mxu0 0
      %4032 = vmatprep.subr.bf16.mxu0 0
      %4033 = vmatpush1.bf16.msra.mxu0 0
      %4034 = vmatprep.subr.bf16.mxu0 0
      %4035 = vmatpush1.bf16.msra.mxu0 0
      %4036 = vmatprep.subr.bf16.mxu0 0
      %4037 = vmatpush1.bf16.msra.mxu0 0
      %4038 = vmatprep.subr.bf16.mxu0 0
      %4039 = vmatpush1.bf16.msra.mxu0 0
      %4040 = vmatprep.subr.bf16.mxu0 0
      %4041 = vmatpush1.bf16.msra.mxu0 0
      %4042 = vmatprep.subr.bf16.mxu0 0
      %4043 = vmatpush1.bf16.msra.mxu0 0
      %4044 = vmatprep.subr.bf16.mxu0 0
      %4045 = vmatpush1.bf16.msra.mxu0 0
      %4046 = vmatprep.mubr.bf16.mxu0 0
      %4047 = vmatmul.mubr.bf16.gmra.mrb[0].mxu0 %v4012
      %v4048 = vpop.f32.mrb[0].mxu0
      %v4049 = vadd.f32 0.0, %v4048
      %v4050 = vpop.f32.mrb[0].mxu0
      %v4051 = vpop.f32.mrb[0].mxu0
      %v4052 = vadd.f32 0.0, %v4051
      %v4053 = vpop.f32.mrb[0].mxu0
      %4054 = vmatprep.mubr.bf16.mxu0 0
      %4055 = vmatmul.mubr.bf16.gmra.mrb[0].mxu0 %v4013
      %v4056 = vpop.f32.mrb[0].mxu0
      %v4057 = vadd.f32 0.0, %v4056
      %v4058 = vpop.f32.mrb[0].mxu0
      %v4059 = vpop.f32.mrb[0].mxu0
      %v4060 = vadd.f32 0.0, %v4059
      %v4061 = vpop.f32.mrb[0].mxu0
      %4062 = vdwg.mxu0
      %v4063 = vmax.f32 %v4049, 1e-30
      %v4064 = vmax.f32 %v4052, 1e-30
      %v4065 = vmax.f32 %v4057, 1e-30
      %v4066 = vmax.f32 %v4060, 1e-30
      %v4067 = vrcp.pop %v4063
      %v4068 = vrcp.pop %v4064
      %v4069 = vrcp.pop %v4065
      %v4070 = vrcp.pop %v4066
      %v4071 = vmul.f32 %v4005, %v4067
      %v4072 = vmul.f32 %v4007, %v4068
      %v4073 = vmul.f32 %v4009, %v4069
      %v4074 = vmul.f32 %v4011, %v4070
      %v4075 = vpack.c.bf16 %v4072, %v4071
      %v4076 = vpack.c.bf16 %v4074, %v4073
      %v4077 = vpack.c.bf16 %v3885, %v3883
      %v4078 = vpack.c.bf16 %v3886, %v3884
      %v4079 = vpack.c.bf16 %v3889, %v3887
      %v4080 = vpack.c.bf16 %v3890, %v3888
      %v4081 = vpack.c.bf16 %v3893, %v3891
      %v4082 = vpack.c.bf16 %v3894, %v3892
      %v4083 = vpack.c.bf16 %v3897, %v3895
      %v4084 = vpack.c.bf16 %v3898, %v3896
      %v4085 = vpack.c.bf16 %v3901, %v3899
      %v4086 = vpack.c.bf16 %v3902, %v3900
      %v4087 = vpack.c.bf16 %v3905, %v3903
      %v4088 = vpack.c.bf16 %v3906, %v3904
      %v4089 = vpack.c.bf16 %v3909, %v3907
      %v4090 = vpack.c.bf16 %v3910, %v3908
      %v4091 = vpack.c.bf16 %v3913, %v3911
      %v4092 = vpack.c.bf16 %v3914, %v3912
      %4093 = vmatprep.subr.bf16.mxu0 %v4078
      %4094 = vmatpush1.bf16.msra.mxu0 %v4077
      %4095 = vmatprep.subr.bf16.mxu0 %v4080
      %4096 = vmatpush1.bf16.msra.mxu0 %v4079
      %4097 = vmatprep.subr.bf16.mxu0 %v4082
      %4098 = vmatpush1.bf16.msra.mxu0 %v4081
      %4099 = vmatprep.subr.bf16.mxu0 %v4084
      %4100 = vmatpush1.bf16.msra.mxu0 %v4083
      %4101 = vmatprep.subr.bf16.mxu0 %v4086
      %4102 = vmatpush1.bf16.msra.mxu0 %v4085
      %4103 = vmatprep.subr.bf16.mxu0 %v4088
      %4104 = vmatpush1.bf16.msra.mxu0 %v4087
      %4105 = vmatprep.subr.bf16.mxu0 %v4090
      %4106 = vmatpush1.bf16.msra.mxu0 %v4089
      %4107 = vmatprep.subr.bf16.mxu0 %v4092
      %4108 = vmatpush1.bf16.msra.mxu0 %v4091
      %4109 = vmatprep.subr.bf16.mxu0 0
      %4110 = vmatpush1.bf16.msra.mxu0 0
      %4111 = vmatprep.subr.bf16.mxu0 0
      %4112 = vmatpush1.bf16.msra.mxu0 0
      %4113 = vmatprep.subr.bf16.mxu0 0
      %4114 = vmatpush1.bf16.msra.mxu0 0
      %4115 = vmatprep.subr.bf16.mxu0 0
      %4116 = vmatpush1.bf16.msra.mxu0 0
      %4117 = vmatprep.subr.bf16.mxu0 0
      %4118 = vmatpush1.bf16.msra.mxu0 0
      %4119 = vmatprep.subr.bf16.mxu0 0
      %4120 = vmatpush1.bf16.msra.mxu0 0
      %4121 = vmatprep.subr.bf16.mxu0 0
      %4122 = vmatpush1.bf16.msra.mxu0 0
      %4123 = vmatprep.subr.bf16.mxu0 0
      %4124 = vmatpush1.bf16.msra.mxu0 0
      %4125 = vmatprep.mubr.bf16.mxu0 0
      %4126 = vmatmul.mubr.bf16.gmra.mrb[0].mxu0 %v4075
      %v4127 = vpop.f32.mrb[0].mxu0
      %v4128 = vadd.f32 0.0, %v4127
      %v4129 = vpop.f32.mrb[0].mxu0
      %v4130 = vadd.f32 0.0, %v4129
      %v4131 = vpop.f32.mrb[0].mxu0
      %v4132 = vadd.f32 0.0, %v4131
      %v4133 = vpop.f32.mrb[0].mxu0
      %v4134 = vadd.f32 0.0, %v4133
      %4135 = vmatprep.mubr.bf16.mxu0 0
      %4136 = vmatmul.mubr.bf16.gmra.mrb[0].mxu0 %v4076
      %v4137 = vpop.f32.mrb[0].mxu0
      %v4138 = vadd.f32 0.0, %v4137
      %v4139 = vpop.f32.mrb[0].mxu0
      %v4140 = vadd.f32 0.0, %v4139
      %v4141 = vpop.f32.mrb[0].mxu0
      %v4142 = vadd.f32 0.0, %v4141
      %v4143 = vpop.f32.mrb[0].mxu0
      %v4144 = vadd.f32 0.0, %v4143
      %4145 = vdwg.mxu0
      %s4146 = scalar_lea.vmem %s9, 256
      %v4147 = vld [vmem:[%s4146] sm:$0xff]
      %v4148 = vld [vmem:[%s4146 + $0x8] sm:$0xff]
      %v4149 = vld [vmem:[%s4146 + $0x10] sm:$0xff]
      %v4150 = vld [vmem:[%s4146 + $0x18] sm:$0xff]
      %v4151 = vld [vmem:[%s4146 + $0x20] sm:$0xff]
      %v4152 = vld [vmem:[%s4146 + $0x28] sm:$0xff]
      %v4153 = vld [vmem:[%s4146 + $0x30] sm:$0xff]
      %v4154 = vld [vmem:[%s4146 + $0x38] sm:$0xff]
      %v4155 = vld [vmem:[%s4146 + $0x40] sm:$0xff]
      %v4156 = vld [vmem:[%s4146 + $0x48] sm:$0xff]
      %v4157 = vld [vmem:[%s4146 + $0x50] sm:$0xff]
      %v4158 = vld [vmem:[%s4146 + $0x58] sm:$0xff]
      %v4159 = vld [vmem:[%s4146 + $0x60] sm:$0xff]
      %v4160 = vld [vmem:[%s4146 + $0x68] sm:$0xff]
      %v4161 = vld [vmem:[%s4146 + $0x70] sm:$0xff]
      %v4162 = vld [vmem:[%s4146 + $0x78] sm:$0xff]
      %v4163 = vld [vmem:[%s4146 + $0x80] sm:$0xff]
      %v4164 = vld [vmem:[%s4146 + $0x88] sm:$0xff]
      %v4165 = vld [vmem:[%s4146 + $0x90] sm:$0xff]
      %v4166 = vld [vmem:[%s4146 + $0x98] sm:$0xff]
      %v4167 = vld [vmem:[%s4146 + $0xa0] sm:$0xff]
      %v4168 = vld [vmem:[%s4146 + $0xa8] sm:$0xff]
      %v4169 = vld [vmem:[%s4146 + $0xb0] sm:$0xff]
      %v4170 = vld [vmem:[%s4146 + $0xb8] sm:$0xff]
      %v4171 = vld [vmem:[%s4146 + $0xc0] sm:$0xff]
      %v4172 = vld [vmem:[%s4146 + $0xc8] sm:$0xff]
      %v4173 = vld [vmem:[%s4146 + $0xd0] sm:$0xff]
      %v4174 = vld [vmem:[%s4146 + $0xd8] sm:$0xff]
      %v4175 = vld [vmem:[%s4146 + $0xe0] sm:$0xff]
      %v4176 = vld [vmem:[%s4146 + $0xe8] sm:$0xff]
      %v4177 = vld [vmem:[%s4146 + $0xf0] sm:$0xff]
      %v4178 = vld [vmem:[%s4146 + $0xf8] sm:$0xff]
      %v4179 = vpack.c.bf16 %v4132, %v4128
      %v4180 = vpack.c.bf16 %v4134, %v4130
      %v4181 = vpack.c.bf16 %v4142, %v4138
      %v4182 = vpack.c.bf16 %v4144, %v4140
      %v4183 = vlaneseq
      %v4184 = vshrl.u32 %v4183, 7
      %v4185 = vsub.s32 1, %v4184
      %v4186 = vrot.slane %v3081, %v4185
      %v4187 = vlaneseq
      %v4188 = vshrl.u32 %v4187, 7
      %v4189 = vsub.s32 1, %v4188
      %v4190 = vrot.slane %v3082, %v4189
      %v4223 = vunpack.c.l.b16 %v4147
      %v4224 = vunpack.c.h.b16 %v4147
      %v4225 = vunpack.c.l.b16 %v4148
      %v4226 = vunpack.c.h.b16 %v4148
      %v4227 = vunpack.c.l.b16 %v4149
      %v4228 = vunpack.c.h.b16 %v4149
      %v4229 = vunpack.c.l.b16 %v4150
      %v4230 = vunpack.c.h.b16 %v4150
      %v4231 = vunpack.c.l.b16 %v4151
      %v4232 = vunpack.c.h.b16 %v4151
      %v4233 = vunpack.c.l.b16 %v4152
      %v4234 = vunpack.c.h.b16 %v4152
      %v4235 = vunpack.c.l.b16 %v4153
      %v4236 = vunpack.c.h.b16 %v4153
      %v4237 = vunpack.c.l.b16 %v4154
      %v4238 = vunpack.c.h.b16 %v4154
      %v4239 = vunpack.c.l.b16 %v4155
      %v4240 = vunpack.c.h.b16 %v4155
      %v4241 = vunpack.c.l.b16 %v4156
      %v4242 = vunpack.c.h.b16 %v4156
      %v4243 = vunpack.c.l.b16 %v4157
      %v4244 = vunpack.c.h.b16 %v4157
      %v4245 = vunpack.c.l.b16 %v4158
      %v4246 = vunpack.c.h.b16 %v4158
      %v4247 = vunpack.c.l.b16 %v4159
      %v4248 = vunpack.c.h.b16 %v4159
      %v4249 = vunpack.c.l.b16 %v4160
      %v4250 = vunpack.c.h.b16 %v4160
      %v4251 = vunpack.c.l.b16 %v4161
      %v4252 = vunpack.c.h.b16 %v4161
      %v4253 = vunpack.c.l.b16 %v4162
      %v4254 = vunpack.c.h.b16 %v4162
      %v4255 = vunpack.c.l.b16 %v4163
      %v4256 = vunpack.c.h.b16 %v4163
      %v4257 = vunpack.c.l.b16 %v4164
      %v4258 = vunpack.c.h.b16 %v4164
      %v4259 = vunpack.c.l.b16 %v4165
      %v4260 = vunpack.c.h.b16 %v4165
      %v4261 = vunpack.c.l.b16 %v4166
      %v4262 = vunpack.c.h.b16 %v4166
      %v4263 = vunpack.c.l.b16 %v4167
      %v4264 = vunpack.c.h.b16 %v4167
      %v4265 = vunpack.c.l.b16 %v4168
      %v4266 = vunpack.c.h.b16 %v4168
      %v4267 = vunpack.c.l.b16 %v4169
      %v4268 = vunpack.c.h.b16 %v4169
      %v4269 = vunpack.c.l.b16 %v4170
      %v4270 = vunpack.c.h.b16 %v4170
      %v4271 = vunpack.c.l.b16 %v4171
      %v4272 = vunpack.c.h.b16 %v4171
      %v4273 = vunpack.c.l.b16 %v4172
      %v4274 = vunpack.c.h.b16 %v4172
      %v4275 = vunpack.c.l.b16 %v4173
      %v4276 = vunpack.c.h.b16 %v4173
      %v4277 = vunpack.c.l.b16 %v4174
      %v4278 = vunpack.c.h.b16 %v4174
      %v4279 = vunpack.c.l.b16 %v4175
      %v4280 = vunpack.c.h.b16 %v4175
      %v4281 = vunpack.c.l.b16 %v4176
      %v4282 = vunpack.c.h.b16 %v4176
      %v4283 = vunpack.c.l.b16 %v4177
      %v4284 = vunpack.c.h.b16 %v4177
      %v4285 = vunpack.c.l.b16 %v4178
      %v4286 = vunpack.c.h.b16 %v4178
      %v4287 = vpack.c.b16 %v4225, %v4223
      %v4288 = vpack.c.b16 %v4226, %v4224
      %v4289 = vpack.c.b16 %v4229, %v4227
      %v4290 = vpack.c.b16 %v4230, %v4228
      %v4291 = vpack.c.b16 %v4233, %v4231
      %v4292 = vpack.c.b16 %v4234, %v4232
      %v4293 = vpack.c.b16 %v4237, %v4235
      %v4294 = vpack.c.b16 %v4238, %v4236
      %v4295 = vpack.c.b16 %v4241, %v4239
      %v4296 = vpack.c.b16 %v4242, %v4240
      %v4297 = vpack.c.b16 %v4245, %v4243
      %v4298 = vpack.c.b16 %v4246, %v4244
      %v4299 = vpack.c.b16 %v4249, %v4247
      %v4300 = vpack.c.b16 %v4250, %v4248
      %v4301 = vpack.c.b16 %v4253, %v4251
      %v4302 = vpack.c.b16 %v4254, %v4252
      %v4303 = vpack.c.b16 %v4257, %v4255
      %v4304 = vpack.c.b16 %v4258, %v4256
      %v4305 = vpack.c.b16 %v4261, %v4259
      %v4306 = vpack.c.b16 %v4262, %v4260
      %v4307 = vpack.c.b16 %v4265, %v4263
      %v4308 = vpack.c.b16 %v4266, %v4264
      %v4309 = vpack.c.b16 %v4269, %v4267
      %v4310 = vpack.c.b16 %v4270, %v4268
      %v4311 = vpack.c.b16 %v4273, %v4271
      %v4312 = vpack.c.b16 %v4274, %v4272
      %v4313 = vpack.c.b16 %v4277, %v4275
      %v4314 = vpack.c.b16 %v4278, %v4276
      %v4315 = vpack.c.b16 %v4281, %v4279
      %v4316 = vpack.c.b16 %v4282, %v4280
      %v4317 = vpack.c.b16 %v4285, %v4283
      %v4318 = vpack.c.b16 %v4286, %v4284
      %4351 = vmatprep.subr.bf16.mxu0 %v4288
      %4352 = vmatpush1.bf16.msra.mxu0 %v4287
      %4353 = vmatprep.subr.bf16.mxu0 %v4290
      %4354 = vmatpush1.bf16.msra.mxu0 %v4289
      %4355 = vmatprep.subr.bf16.mxu0 %v4292
      %4356 = vmatpush1.bf16.msra.mxu0 %v4291
      %4357 = vmatprep.subr.bf16.mxu0 %v4294
      %4358 = vmatpush1.bf16.msra.mxu0 %v4293
      %4359 = vmatprep.subr.bf16.mxu0 %v4296
      %4360 = vmatpush1.bf16.msra.mxu0 %v4295
      %4361 = vmatprep.subr.bf16.mxu0 %v4298
      %4362 = vmatpush1.bf16.msra.mxu0 %v4297
      %4363 = vmatprep.subr.bf16.mxu0 %v4300
      %4364 = vmatpush1.bf16.msra.mxu0 %v4299
      %4365 = vmatprep.subr.bf16.mxu0 %v4302
      %4366 = vmatpush1.bf16.msra.mxu0 %v4301
      %4367 = vmatprep.subr.bf16.mxu0 %v4304
      %4368 = vmatpush1.bf16.msra.mxu0 %v4303
      %4369 = vmatprep.subr.bf16.mxu0 %v4306
      %4370 = vmatpush1.bf16.msra.mxu0 %v4305
      %4371 = vmatprep.subr.bf16.mxu0 %v4308
      %4372 = vmatpush1.bf16.msra.mxu0 %v4307
      %4373 = vmatprep.subr.bf16.mxu0 %v4310
      %4374 = vmatpush1.bf16.msra.mxu0 %v4309
      %4375 = vmatprep.subr.bf16.mxu0 %v4312
      %4376 = vmatpush1.bf16.msra.mxu0 %v4311
      %4377 = vmatprep.subr.bf16.mxu0 %v4314
      %4378 = vmatpush1.bf16.msra.mxu0 %v4313
      %4379 = vmatprep.subr.bf16.mxu0 %v4316
      %4380 = vmatpush1.bf16.msra.mxu0 %v4315
      %4381 = vmatprep.subr.bf16.mxu0 %v4318
      %4382 = vmatpush1.bf16.msra.mxu0 %v4317
      %4383 = vmatprep.mubr.bf16.mxu0 %v4180
      %4384 = vmatmul.mubr.bf16.gmra.mrb[0].mxu0 %v4179
      %v4385 = vpop.f32.mrb[0].mxu0
      %v4386 = vadd.f32 %v4186, %v4385
      %v4387 = vpop.f32.mrb[0].mxu0
      %v4388 = vadd.f32 %v4190, %v4387
      %v4389 = vpop.f32.mrb[0].mxu0
      %v4390 = vadd.f32 %v4186, %v4389
      %v4391 = vpop.f32.mrb[0].mxu0
      %v4392 = vadd.f32 %v4190, %v4391
      %4393 = vmatprep.mubr.bf16.mxu0 %v4182
      %4394 = vmatmul.mubr.bf16.gmra.mrb[0].mxu0 %v4181
      %v4395 = vpop.f32.mrb[0].mxu0
      %v4396 = vadd.f32 %v4186, %v4395
      %v4397 = vpop.f32.mrb[0].mxu0
      %v4398 = vadd.f32 %v4190, %v4397
      %v4399 = vpop.f32.mrb[0].mxu0
      %v4400 = vadd.f32 %v4186, %v4399
      %v4401 = vpop.f32.mrb[0].mxu0
      %v4402 = vadd.f32 %v4190, %v4401
      %4403 = vdwg.mxu0
      %v4404 = vadd.f32 %v3072, %v4386
      %v4405 = vadd.f32 %v3073, %v4388
      %v4406 = vadd.f32 %v3074, %v4390
      %v4407 = vadd.f32 %v3075, %v4392
      %v4408 = vadd.f32 %v3076, %v4396
      %v4409 = vadd.f32 %v3077, %v4398
      %v4410 = vadd.f32 %v3078, %v4400
      %v4411 = vadd.f32 %v3079, %v4402
      %v4412 = vadd.f32 %v4404, %v4405
      %4413 = vadd.xlane.f32.xlu0 %v4412
      %v4414 = vpop.xlane.xlu0 %4413
      %v4415 = vadd.f32 %v4406, %v4407
      %4416 = vadd.xlane.f32.xlu0 %v4415
      %v4417 = vpop.xlane.xlu0 %4416
      %v4418 = vadd.f32 %v4408, %v4409
      %4419 = vadd.xlane.f32.xlu0 %v4418
      %v4420 = vpop.xlane.xlu0 %4419
      %v4421 = vadd.f32 %v4410, %v4411
      %4422 = vadd.xlane.f32.xlu0 %v4421
      %v4423 = vpop.xlane.xlu0 %4422
      %v4424 = vmul.f32 %v4414, %v2568
      %v4425 = vmul.f32 %v4417, %v2568
      %v4426 = vmul.f32 %v4420, %v2568
      %v4427 = vmul.f32 %v4423, %v2568
      %v4428 = vmul.f32 %v4404, %v4404
      %v4429 = vmul.f32 %v4405, %v4405
      %v4430 = vmul.f32 %v4406, %v4406
      %v4431 = vmul.f32 %v4407, %v4407
      %v4432 = vmul.f32 %v4408, %v4408
      %v4433 = vmul.f32 %v4409, %v4409
      %v4434 = vmul.f32 %v4410, %v4410
      %v4435 = vmul.f32 %v4411, %v4411
      %v4436 = vadd.f32 %v4428, %v4429
      %4437 = vadd.xlane.f32.xlu0 %v4436
      %v4438 = vpop.xlane.xlu0 %4437
      %v4439 = vadd.f32 %v4430, %v4431
      %4440 = vadd.xlane.f32.xlu0 %v4439
      %v4441 = vpop.xlane.xlu0 %4440
      %v4442 = vadd.f32 %v4432, %v4433
      %4443 = vadd.xlane.f32.xlu0 %v4442
      %v4444 = vpop.xlane.xlu0 %4443
      %v4445 = vadd.f32 %v4434, %v4435
      %4446 = vadd.xlane.f32.xlu0 %v4445
      %v4447 = vpop.xlane.xlu0 %4446
      %v4448 = vmul.f32 %v4438, %v2568
      %v4449 = vmul.f32 %v4441, %v2568
      %v4450 = vmul.f32 %v4444, %v2568
      %v4451 = vmul.f32 %v4447, %v2568
      %v4452 = vmul.f32 %v4424, %v4424
      %v4453 = vmul.f32 %v4425, %v4425
      %v4454 = vmul.f32 %v4426, %v4426
      %v4455 = vmul.f32 %v4427, %v4427
      %v4456 = vsub.f32 %v4448, %v4452
      %v4457 = vsub.f32 %v4449, %v4453
      %v4458 = vsub.f32 %v4450, %v4454
      %v4459 = vsub.f32 %v4451, %v4455
      %v4460 = vadd.f32 %v4456, 1e-05
      %v4461 = vadd.f32 %v4457, 1e-05
      %v4462 = vadd.f32 %v4458, 1e-05
      %v4463 = vadd.f32 %v4459, 1e-05
      %v4464 = vrsqrt.pop %v4460
      %v4465 = vrsqrt.pop %v4461
      %v4466 = vrsqrt.pop %v4462
      %v4467 = vrsqrt.pop %v4463
      %v4468 = vsub.f32 %v4404, %v4424
      %v4469 = vsub.f32 %v4405, %v4424
      %v4470 = vsub.f32 %v4406, %v4425
      %v4471 = vsub.f32 %v4407, %v4425
      %v4472 = vsub.f32 %v4408, %v4426
      %v4473 = vsub.f32 %v4409, %v4426
      %v4474 = vsub.f32 %v4410, %v4427
      %v4475 = vsub.f32 %v4411, %v4427
      %v4476 = vmul.f32 %v4468, %v4464
      %v4477 = vmul.f32 %v4469, %v4464
      %v4478 = vmul.f32 %v4470, %v4465
      %v4479 = vmul.f32 %v4471, %v4465
      %v4480 = vmul.f32 %v4472, %v4466
      %v4481 = vmul.f32 %v4473, %v4466
      %v4482 = vmul.f32 %v4474, %v4467
      %v4483 = vmul.f32 %v4475, %v4467
      %v4484 = vlaneseq
      %v4485 = vshrl.u32 %v4484, 7
      %v4486 = vsub.s32 2, %v4485
      %v4487 = vrot.slane %v3081, %v4486
      %v4488 = vlaneseq
      %v4489 = vshrl.u32 %v4488, 7
      %v4490 = vsub.s32 2, %v4489
      %v4491 = vrot.slane %v3082, %v4490
      %v4492 = vmul.f32 %v4476, %v4487
      %v4493 = vmul.f32 %v4477, %v4491
      %v4494 = vmul.f32 %v4478, %v4487
      %v4495 = vmul.f32 %v4479, %v4491
      %v4496 = vmul.f32 %v4480, %v4487
      %v4497 = vmul.f32 %v4481, %v4491
      %v4498 = vmul.f32 %v4482, %v4487
      %v4499 = vmul.f32 %v4483, %v4491
      %v4500 = vlaneseq
      %v4501 = vshrl.u32 %v4500, 7
      %v4502 = vsub.s32 3, %v4501
      %v4503 = vrot.slane %v3081, %v4502
      %v4504 = vlaneseq
      %v4505 = vshrl.u32 %v4504, 7
      %v4506 = vsub.s32 3, %v4505
      %v4507 = vrot.slane %v3082, %v4506
      %v4508 = vadd.f32 %v4492, %v4503
      %v4509 = vadd.f32 %v4493, %v4507
      %v4510 = vadd.f32 %v4494, %v4503
      %v4511 = vadd.f32 %v4495, %v4507
      %v4512 = vadd.f32 %v4496, %v4503
      %v4513 = vadd.f32 %v4497, %v4507
      %v4514 = vadd.f32 %v4498, %v4503
      %v4515 = vadd.f32 %v4499, %v4507
      %s4516 = scalar_lea.vmem %s10, 128
      %v4517 = vld [vmem:[%s4516] sm:$0xf]
      %v4518 = vld [vmem:[%s4516 + $0x4] sm:$0xf]
      %v4519 = vld [vmem:[%s4516 + $0x8] sm:$0xf]
      %v4520 = vld [vmem:[%s4516 + $0xc] sm:$0xf]
      %v4521 = vld [vmem:[%s4516 + $0x10] sm:$0xf]
      %v4522 = vld [vmem:[%s4516 + $0x14] sm:$0xf]
      %v4523 = vld [vmem:[%s4516 + $0x18] sm:$0xf]
      %v4524 = vld [vmem:[%s4516 + $0x1c] sm:$0xf]
      %v4525 = vld [vmem:[%s4516 + $0x20] sm:$0xf]
      %v4526 = vld [vmem:[%s4516 + $0x24] sm:$0xf]
      %v4527 = vld [vmem:[%s4516 + $0x28] sm:$0xf]
      %v4528 = vld [vmem:[%s4516 + $0x2c] sm:$0xf]
      %v4529 = vld [vmem:[%s4516 + $0x30] sm:$0xf]
      %v4530 = vld [vmem:[%s4516 + $0x34] sm:$0xf]
      %v4531 = vld [vmem:[%s4516 + $0x38] sm:$0xf]
      %v4532 = vld [vmem:[%s4516 + $0x3c] sm:$0xf]
      %v4533 = vld [vmem:[%s4516 + $0x40] sm:$0xf]
      %v4534 = vld [vmem:[%s4516 + $0x44] sm:$0xf]
      %v4535 = vld [vmem:[%s4516 + $0x48] sm:$0xf]
      %v4536 = vld [vmem:[%s4516 + $0x4c] sm:$0xf]
      %v4537 = vld [vmem:[%s4516 + $0x50] sm:$0xf]
      %v4538 = vld [vmem:[%s4516 + $0x54] sm:$0xf]
      %v4539 = vld [vmem:[%s4516 + $0x58] sm:$0xf]
      %v4540 = vld [vmem:[%s4516 + $0x5c] sm:$0xf]
      %v4541 = vld [vmem:[%s4516 + $0x60] sm:$0xf]
      %v4542 = vld [vmem:[%s4516 + $0x64] sm:$0xf]
      %v4543 = vld [vmem:[%s4516 + $0x68] sm:$0xf]
      %v4544 = vld [vmem:[%s4516 + $0x6c] sm:$0xf]
      %v4545 = vld [vmem:[%s4516 + $0x70] sm:$0xf]
      %v4546 = vld [vmem:[%s4516 + $0x74] sm:$0xf]
      %v4547 = vld [vmem:[%s4516 + $0x78] sm:$0xf]
      %v4548 = vld [vmem:[%s4516 + $0x7c] sm:$0xf]
      %v4549 = vpack.c.bf16 %v4510, %v4508
      %v4550 = vpack.c.bf16 %v4511, %v4509
      %v4551 = vpack.c.bf16 %v4514, %v4512
      %v4552 = vpack.c.bf16 %v4515, %v4513
      %v4553 = vlaneseq
      %v4554 = vshrl.u32 %v4553, 7
      %v4555 = vsub.s32 4, %v4554
      %v4556 = vrot.slane %v3081, %v4555
      %v4589 = vunpack.c.l.b16 %v4517
      %v4590 = vunpack.c.l.b16 %v4518
      %v4591 = vunpack.c.l.b16 %v4519
      %v4592 = vunpack.c.l.b16 %v4520
      %v4593 = vunpack.c.l.b16 %v4521
      %v4594 = vunpack.c.l.b16 %v4522
      %v4595 = vunpack.c.l.b16 %v4523
      %v4596 = vunpack.c.l.b16 %v4524
      %v4597 = vunpack.c.l.b16 %v4525
      %v4598 = vunpack.c.l.b16 %v4526
      %v4599 = vunpack.c.l.b16 %v4527
      %v4600 = vunpack.c.l.b16 %v4528
      %v4601 = vunpack.c.l.b16 %v4529
      %v4602 = vunpack.c.l.b16 %v4530
      %v4603 = vunpack.c.l.b16 %v4531
      %v4604 = vunpack.c.l.b16 %v4532
      %v4605 = vunpack.c.l.b16 %v4533
      %v4606 = vunpack.c.l.b16 %v4534
      %v4607 = vunpack.c.l.b16 %v4535
      %v4608 = vunpack.c.l.b16 %v4536
      %v4609 = vunpack.c.l.b16 %v4537
      %v4610 = vunpack.c.l.b16 %v4538
      %v4611 = vunpack.c.l.b16 %v4539
      %v4612 = vunpack.c.l.b16 %v4540
      %v4613 = vunpack.c.l.b16 %v4541
      %v4614 = vunpack.c.l.b16 %v4542
      %v4615 = vunpack.c.l.b16 %v4543
      %v4616 = vunpack.c.l.b16 %v4544
      %v4617 = vunpack.c.l.b16 %v4545
      %v4618 = vunpack.c.l.b16 %v4546
      %v4619 = vunpack.c.l.b16 %v4547
      %v4620 = vunpack.c.l.b16 %v4548
      %v4621 = vpack.c.b16 %v4590, %v4589
      %v4622 = vpack.c.b16 %v4592, %v4591
      %v4623 = vpack.c.b16 %v4594, %v4593
      %v4624 = vpack.c.b16 %v4596, %v4595
      %v4625 = vpack.c.b16 %v4598, %v4597
      %v4626 = vpack.c.b16 %v4600, %v4599
      %v4627 = vpack.c.b16 %v4602, %v4601
      %v4628 = vpack.c.b16 %v4604, %v4603
      %v4629 = vpack.c.b16 %v4606, %v4605
      %v4630 = vpack.c.b16 %v4608, %v4607
      %v4631 = vpack.c.b16 %v4610, %v4609
      %v4632 = vpack.c.b16 %v4612, %v4611
      %v4633 = vpack.c.b16 %v4614, %v4613
      %v4634 = vpack.c.b16 %v4616, %v4615
      %v4635 = vpack.c.b16 %v4618, %v4617
      %v4636 = vpack.c.b16 %v4620, %v4619
      %4653 = vmatprep.subr.bf16.mxu0 0
      %4654 = vmatpush1.bf16.msra.mxu0 %v4621
      %4655 = vmatprep.subr.bf16.mxu0 0
      %4656 = vmatpush1.bf16.msra.mxu0 %v4622
      %4657 = vmatprep.subr.bf16.mxu0 0
      %4658 = vmatpush1.bf16.msra.mxu0 %v4623
      %4659 = vmatprep.subr.bf16.mxu0 0
      %4660 = vmatpush1.bf16.msra.mxu0 %v4624
      %4661 = vmatprep.subr.bf16.mxu0 0
      %4662 = vmatpush1.bf16.msra.mxu0 %v4625
      %4663 = vmatprep.subr.bf16.mxu0 0
      %4664 = vmatpush1.bf16.msra.mxu0 %v4626
      %4665 = vmatprep.subr.bf16.mxu0 0
      %4666 = vmatpush1.bf16.msra.mxu0 %v4627
      %4667 = vmatprep.subr.bf16.mxu0 0
      %4668 = vmatpush1.bf16.msra.mxu0 %v4628
      %4669 = vmatprep.subr.bf16.mxu0 0
      %4670 = vmatpush1.bf16.msra.mxu0 %v4629
      %4671 = vmatprep.subr.bf16.mxu0 0
      %4672 = vmatpush1.bf16.msra.mxu0 %v4630
      %4673 = vmatprep.subr.bf16.mxu0 0
      %4674 = vmatpush1.bf16.msra.mxu0 %v4631
      %4675 = vmatprep.subr.bf16.mxu0 0
      %4676 = vmatpush1.bf16.msra.mxu0 %v4632
      %4677 = vmatprep.subr.bf16.mxu0 0
      %4678 = vmatpush1.bf16.msra.mxu0 %v4633
      %4679 = vmatprep.subr.bf16.mxu0 0
      %4680 = vmatpush1.bf16.msra.mxu0 %v4634
      %4681 = vmatprep.subr.bf16.mxu0 0
      %4682 = vmatpush1.bf16.msra.mxu0 %v4635
      %4683 = vmatprep.subr.bf16.mxu0 0
      %4684 = vmatpush1.bf16.msra.mxu0 %v4636
      %4685 = vmatprep.mubr.bf16.mxu0 %v4550
      %4686 = vmatmul.mubr.bf16.gmra.mrb[0].mxu0 %v4549
      %v4687 = vpop.f32.mrb[0].mxu0
      %v4688 = vadd.f32 %v4556, %v4687
      %v4689 = vpop.f32.mrb[0].mxu0
      %v4690 = vpop.f32.mrb[0].mxu0
      %v4691 = vadd.f32 %v4556, %v4690
      %v4692 = vpop.f32.mrb[0].mxu0
      %4693 = vmatprep.mubr.bf16.mxu0 %v4552
      %4694 = vmatmul.mubr.bf16.gmra.mrb[0].mxu0 %v4551
      %v4695 = vpop.f32.mrb[0].mxu0
      %v4696 = vadd.f32 %v4556, %v4695
      %v4697 = vpop.f32.mrb[0].mxu0
      %v4698 = vpop.f32.mrb[0].mxu0
      %v4699 = vadd.f32 %v4556, %v4698
      %v4700 = vpop.f32.mrb[0].mxu0
      %4701 = vdwg.mxu0
      %v4702 = vmax.f32 %v4688, 0.0
      %v4703 = vmax.f32 %v4691, 0.0
      %v4704 = vmax.f32 %v4696, 0.0
      %v4705 = vmax.f32 %v4699, 0.0
      %s4706 = scalar_lea.vmem %s11, 64
      %v4707 = vld [vmem:[%s4706] sm:$0xff]
      %v4708 = vld [vmem:[%s4706 + $0x8] sm:$0xff]
      %v4709 = vld [vmem:[%s4706 + $0x10] sm:$0xff]
      %v4710 = vld [vmem:[%s4706 + $0x18] sm:$0xff]
      %v4711 = vld [vmem:[%s4706 + $0x20] sm:$0xff]
      %v4712 = vld [vmem:[%s4706 + $0x28] sm:$0xff]
      %v4713 = vld [vmem:[%s4706 + $0x30] sm:$0xff]
      %v4714 = vld [vmem:[%s4706 + $0x38] sm:$0xff]
      %v4715 = vpack.c.bf16 %v4703, %v4702
      %v4716 = vpack.c.bf16 %v4705, %v4704
      %v4717 = vlaneseq
      %v4718 = vshrl.u32 %v4717, 7
      %v4719 = vsub.s32 5, %v4718
      %v4720 = vrot.slane %v3081, %v4719
      %v4721 = vlaneseq
      %v4722 = vshrl.u32 %v4721, 7
      %v4723 = vsub.s32 5, %v4722
      %v4724 = vrot.slane %v3082, %v4723
      %v4733 = vunpack.c.l.b16 %v4707
      %v4734 = vunpack.c.h.b16 %v4707
      %v4735 = vunpack.c.l.b16 %v4708
      %v4736 = vunpack.c.h.b16 %v4708
      %v4737 = vunpack.c.l.b16 %v4709
      %v4738 = vunpack.c.h.b16 %v4709
      %v4739 = vunpack.c.l.b16 %v4710
      %v4740 = vunpack.c.h.b16 %v4710
      %v4741 = vunpack.c.l.b16 %v4711
      %v4742 = vunpack.c.h.b16 %v4711
      %v4743 = vunpack.c.l.b16 %v4712
      %v4744 = vunpack.c.h.b16 %v4712
      %v4745 = vunpack.c.l.b16 %v4713
      %v4746 = vunpack.c.h.b16 %v4713
      %v4747 = vunpack.c.l.b16 %v4714
      %v4748 = vunpack.c.h.b16 %v4714
      %v4749 = vpack.c.b16 %v4735, %v4733
      %v4750 = vpack.c.b16 %v4736, %v4734
      %v4751 = vpack.c.b16 %v4739, %v4737
      %v4752 = vpack.c.b16 %v4740, %v4738
      %v4753 = vpack.c.b16 %v4743, %v4741
      %v4754 = vpack.c.b16 %v4744, %v4742
      %v4755 = vpack.c.b16 %v4747, %v4745
      %v4756 = vpack.c.b16 %v4748, %v4746
      %v4766 = vsel %vm2908, %v4715, 0
      %v4769 = vsel %vm2908, %v4716, 0
      %4771 = vmatprep.subr.bf16.mxu0 %v4750
      %4772 = vmatpush1.bf16.msra.mxu0 %v4749
      %4773 = vmatprep.subr.bf16.mxu0 %v4752
      %4774 = vmatpush1.bf16.msra.mxu0 %v4751
      %4775 = vmatprep.subr.bf16.mxu0 %v4754
      %4776 = vmatpush1.bf16.msra.mxu0 %v4753
      %4777 = vmatprep.subr.bf16.mxu0 %v4756
      %4778 = vmatpush1.bf16.msra.mxu0 %v4755
      %4779 = vmatprep.subr.bf16.mxu0 0
      %4780 = vmatpush1.bf16.msra.mxu0 0
      %4781 = vmatprep.subr.bf16.mxu0 0
      %4782 = vmatpush1.bf16.msra.mxu0 0
      %4783 = vmatprep.subr.bf16.mxu0 0
      %4784 = vmatpush1.bf16.msra.mxu0 0
      %4785 = vmatprep.subr.bf16.mxu0 0
      %4786 = vmatpush1.bf16.msra.mxu0 0
      %4787 = vmatprep.subr.bf16.mxu0 0
      %4788 = vmatpush1.bf16.msra.mxu0 0
      %4789 = vmatprep.subr.bf16.mxu0 0
      %4790 = vmatpush1.bf16.msra.mxu0 0
      %4791 = vmatprep.subr.bf16.mxu0 0
      %4792 = vmatpush1.bf16.msra.mxu0 0
      %4793 = vmatprep.subr.bf16.mxu0 0
      %4794 = vmatpush1.bf16.msra.mxu0 0
      %4795 = vmatprep.subr.bf16.mxu0 0
      %4796 = vmatpush1.bf16.msra.mxu0 0
      %4797 = vmatprep.subr.bf16.mxu0 0
      %4798 = vmatpush1.bf16.msra.mxu0 0
      %4799 = vmatprep.subr.bf16.mxu0 0
      %4800 = vmatpush1.bf16.msra.mxu0 0
      %4801 = vmatprep.subr.bf16.mxu0 0
      %4802 = vmatpush1.bf16.msra.mxu0 0
      %4803 = vmatprep.mubr.bf16.mxu0 0
      %4804 = vmatmul.mubr.bf16.gmra.mrb[0].mxu0 %v4766
      %v4805 = vpop.f32.mrb[0].mxu0
      %v4806 = vadd.f32 %v4720, %v4805
      %v4807 = vpop.f32.mrb[0].mxu0
      %v4808 = vadd.f32 %v4724, %v4807
      %v4809 = vpop.f32.mrb[0].mxu0
      %v4810 = vadd.f32 %v4720, %v4809
      %v4811 = vpop.f32.mrb[0].mxu0
      %v4812 = vadd.f32 %v4724, %v4811
      %4813 = vmatprep.mubr.bf16.mxu0 0
      %4814 = vmatmul.mubr.bf16.gmra.mrb[0].mxu0 %v4769
      %v4815 = vpop.f32.mrb[0].mxu0
      %v4816 = vadd.f32 %v4720, %v4815
      %v4817 = vpop.f32.mrb[0].mxu0
      %v4818 = vadd.f32 %v4724, %v4817
      %v4819 = vpop.f32.mrb[0].mxu0
      %v4820 = vadd.f32 %v4720, %v4819
      %v4821 = vpop.f32.mrb[0].mxu0
      %v4822 = vadd.f32 %v4724, %v4821
      %4823 = vdwg.mxu0
      %v4824 = vadd.f32 %v4508, %v4806
      %v4825 = vadd.f32 %v4509, %v4808
      %v4826 = vadd.f32 %v4510, %v4810
      %v4827 = vadd.f32 %v4511, %v4812
      %v4828 = vadd.f32 %v4512, %v4816
      %v4829 = vadd.f32 %v4513, %v4818
      %v4830 = vadd.f32 %v4514, %v4820
      %v4831 = vadd.f32 %v4515, %v4822
      %v4832 = vadd.f32 %v4824, %v4825
      %4833 = vadd.xlane.f32.xlu0 %v4832
      %v4834 = vpop.xlane.xlu0 %4833
      %v4835 = vadd.f32 %v4826, %v4827
      %4836 = vadd.xlane.f32.xlu0 %v4835
      %v4837 = vpop.xlane.xlu0 %4836
      %v4838 = vadd.f32 %v4828, %v4829
      %4839 = vadd.xlane.f32.xlu0 %v4838
      %v4840 = vpop.xlane.xlu0 %4839
      %v4841 = vadd.f32 %v4830, %v4831
      %4842 = vadd.xlane.f32.xlu0 %v4841
      %v4843 = vpop.xlane.xlu0 %4842
      %v4844 = vmul.f32 %v4834, %v2568
      %v4845 = vmul.f32 %v4837, %v2568
      %v4846 = vmul.f32 %v4840, %v2568
      %v4847 = vmul.f32 %v4843, %v2568
      %v4848 = vmul.f32 %v4824, %v4824
      %v4849 = vmul.f32 %v4825, %v4825
      %v4850 = vmul.f32 %v4826, %v4826
      %v4851 = vmul.f32 %v4827, %v4827
      %v4852 = vmul.f32 %v4828, %v4828
      %v4853 = vmul.f32 %v4829, %v4829
      %v4854 = vmul.f32 %v4830, %v4830
      %v4855 = vmul.f32 %v4831, %v4831
      %v4856 = vadd.f32 %v4848, %v4849
      %4857 = vadd.xlane.f32.xlu0 %v4856
      %v4858 = vpop.xlane.xlu0 %4857
      %v4859 = vadd.f32 %v4850, %v4851
      %4860 = vadd.xlane.f32.xlu0 %v4859
      %v4861 = vpop.xlane.xlu0 %4860
      %v4862 = vadd.f32 %v4852, %v4853
      %4863 = vadd.xlane.f32.xlu0 %v4862
      %v4864 = vpop.xlane.xlu0 %4863
      %v4865 = vadd.f32 %v4854, %v4855
      %4866 = vadd.xlane.f32.xlu0 %v4865
      %v4867 = vpop.xlane.xlu0 %4866
      %v4868 = vmul.f32 %v4858, %v2568
      %v4869 = vmul.f32 %v4861, %v2568
      %v4870 = vmul.f32 %v4864, %v2568
      %v4871 = vmul.f32 %v4867, %v2568
      %v4872 = vmul.f32 %v4844, %v4844
      %v4873 = vmul.f32 %v4845, %v4845
      %v4874 = vmul.f32 %v4846, %v4846
      %v4875 = vmul.f32 %v4847, %v4847
      %v4876 = vsub.f32 %v4868, %v4872
      %v4877 = vsub.f32 %v4869, %v4873
      %v4878 = vsub.f32 %v4870, %v4874
      %v4879 = vsub.f32 %v4871, %v4875
      %v4880 = vadd.f32 %v4876, 1e-05
      %v4881 = vadd.f32 %v4877, 1e-05
      %v4882 = vadd.f32 %v4878, 1e-05
      %v4883 = vadd.f32 %v4879, 1e-05
      %v4884 = vrsqrt.pop %v4880
      %v4885 = vrsqrt.pop %v4881
      %v4886 = vrsqrt.pop %v4882
      %v4887 = vrsqrt.pop %v4883
      %v4888 = vsub.f32 %v4824, %v4844
      %v4889 = vsub.f32 %v4825, %v4844
      %v4890 = vsub.f32 %v4826, %v4845
      %v4891 = vsub.f32 %v4827, %v4845
      %v4892 = vsub.f32 %v4828, %v4846
      %v4893 = vsub.f32 %v4829, %v4846
      %v4894 = vsub.f32 %v4830, %v4847
      %v4895 = vsub.f32 %v4831, %v4847
      %v4896 = vmul.f32 %v4888, %v4884
      %v4897 = vmul.f32 %v4889, %v4884
      %v4898 = vmul.f32 %v4890, %v4885
      %v4899 = vmul.f32 %v4891, %v4885
      %v4900 = vmul.f32 %v4892, %v4886
      %v4901 = vmul.f32 %v4893, %v4886
      %v4902 = vmul.f32 %v4894, %v4887
      %v4903 = vmul.f32 %v4895, %v4887
      %v4904 = vlaneseq
      %v4905 = vshrl.u32 %v4904, 7
      %v4906 = vsub.s32 6, %v4905
      %v4907 = vrot.slane %v3081, %v4906
      %v4908 = vlaneseq
      %v4909 = vshrl.u32 %v4908, 7
      %v4910 = vsub.s32 6, %v4909
      %v4911 = vrot.slane %v3082, %v4910
      %v4912 = vmul.f32 %v4896, %v4907
      %v4913 = vmul.f32 %v4897, %v4911
      %v4914 = vmul.f32 %v4898, %v4907
      %v4915 = vmul.f32 %v4899, %v4911
      %v4916 = vmul.f32 %v4900, %v4907
      %v4917 = vmul.f32 %v4901, %v4911
      %v4918 = vmul.f32 %v4902, %v4907
      %v4919 = vmul.f32 %v4903, %v4911
      %v4920 = vlaneseq
      %v4921 = vshrl.u32 %v4920, 7
      %v4922 = vsub.s32 7, %v4921
      %v4923 = vrot.slane %v3081, %v4922
      %v4924 = vlaneseq
      %v4925 = vshrl.u32 %v4924, 7
      %v4926 = vsub.s32 7, %v4925
      %v4927 = vrot.slane %v3082, %v4926
      %v4928 = vadd.f32 %v4912, %v4923
      %v4929 = vadd.f32 %v4913, %v4927
      %v4930 = vadd.f32 %v4914, %v4923
      %v4931 = vadd.f32 %v4915, %v4927
      %v4932 = vadd.f32 %v4916, %v4923
      %v4933 = vadd.f32 %v4917, %v4927
      %v4934 = vadd.f32 %v4918, %v4923
      %v4935 = vadd.f32 %v4919, %v4927
      %v4936 = vld [vmem:[%s5] sm:$0xf]
      %v4937 = vld [vmem:[%s5 + $0x4] sm:$0xf]
      %v4938 = vld [vmem:[%s5 + $0x8] sm:$0xf]
      %v4939 = vld [vmem:[%s5 + $0xc] sm:$0xf]
      %v4940 = vld [vmem:[%s5 + $0x10] sm:$0xf]
      %v4941 = vld [vmem:[%s5 + $0x14] sm:$0xf]
      %v4942 = vld [vmem:[%s5 + $0x18] sm:$0xf]
      %v4943 = vld [vmem:[%s5 + $0x1c] sm:$0xf]
      %v4944 = vld [vmem:[%s5 + $0x20] sm:$0xf]
      %v4945 = vld [vmem:[%s5 + $0x24] sm:$0xf]
      %v4946 = vld [vmem:[%s5 + $0x28] sm:$0xf]
      %v4947 = vld [vmem:[%s5 + $0x2c] sm:$0xf]
      %v4948 = vld [vmem:[%s5 + $0x30] sm:$0xf]
      %v4949 = vld [vmem:[%s5 + $0x34] sm:$0xf]
      %v4950 = vld [vmem:[%s5 + $0x38] sm:$0xf]
      %v4951 = vld [vmem:[%s5 + $0x3c] sm:$0xf]
      %v4952 = vld [vmem:[%s5 + $0x40] sm:$0xf]
      %v4953 = vld [vmem:[%s5 + $0x44] sm:$0xf]
      %v4954 = vld [vmem:[%s5 + $0x48] sm:$0xf]
      %v4955 = vld [vmem:[%s5 + $0x4c] sm:$0xf]
      %v4956 = vld [vmem:[%s5 + $0x50] sm:$0xf]
      %v4957 = vld [vmem:[%s5 + $0x54] sm:$0xf]
      %v4958 = vld [vmem:[%s5 + $0x58] sm:$0xf]
      %v4959 = vld [vmem:[%s5 + $0x5c] sm:$0xf]
      %v4960 = vld [vmem:[%s5 + $0x60] sm:$0xf]
      %v4961 = vld [vmem:[%s5 + $0x64] sm:$0xf]
      %v4962 = vld [vmem:[%s5 + $0x68] sm:$0xf]
      %v4963 = vld [vmem:[%s5 + $0x6c] sm:$0xf]
      %v4964 = vld [vmem:[%s5 + $0x70] sm:$0xf]
      %v4965 = vld [vmem:[%s5 + $0x74] sm:$0xf]
      %v4966 = vld [vmem:[%s5 + $0x78] sm:$0xf]
      %v4967 = vld [vmem:[%s5 + $0x7c] sm:$0xf]
      %v4968 = vpack.c.bf16 %v4930, %v4928
      %v4969 = vpack.c.bf16 %v4931, %v4929
      %v4970 = vpack.c.bf16 %v4934, %v4932
      %v4971 = vpack.c.bf16 %v4935, %v4933
      %v4972 = vlaneseq
      %v4973 = vshrl.u32 %v4972, 7
      %v4974 = vsub.s32 2, %v4973
      %v4975 = vrot.slane %v475, %v4974
      %v5008 = vunpack.c.l.b16 %v4936
      %v5009 = vunpack.c.l.b16 %v4937
      %v5010 = vunpack.c.l.b16 %v4938
      %v5011 = vunpack.c.l.b16 %v4939
      %v5012 = vunpack.c.l.b16 %v4940
      %v5013 = vunpack.c.l.b16 %v4941
      %v5014 = vunpack.c.l.b16 %v4942
      %v5015 = vunpack.c.l.b16 %v4943
      %v5016 = vunpack.c.l.b16 %v4944
      %v5017 = vunpack.c.l.b16 %v4945
      %v5018 = vunpack.c.l.b16 %v4946
      %v5019 = vunpack.c.l.b16 %v4947
      %v5020 = vunpack.c.l.b16 %v4948
      %v5021 = vunpack.c.l.b16 %v4949
      %v5022 = vunpack.c.l.b16 %v4950
      %v5023 = vunpack.c.l.b16 %v4951
      %v5024 = vunpack.c.l.b16 %v4952
      %v5025 = vunpack.c.l.b16 %v4953
      %v5026 = vunpack.c.l.b16 %v4954
      %v5027 = vunpack.c.l.b16 %v4955
      %v5028 = vunpack.c.l.b16 %v4956
      %v5029 = vunpack.c.l.b16 %v4957
      %v5030 = vunpack.c.l.b16 %v4958
      %v5031 = vunpack.c.l.b16 %v4959
      %v5032 = vunpack.c.l.b16 %v4960
      %v5033 = vunpack.c.l.b16 %v4961
      %v5034 = vunpack.c.l.b16 %v4962
      %v5035 = vunpack.c.l.b16 %v4963
      %v5036 = vunpack.c.l.b16 %v4964
      %v5037 = vunpack.c.l.b16 %v4965
      %v5038 = vunpack.c.l.b16 %v4966
      %v5039 = vunpack.c.l.b16 %v4967
      %v5040 = vpack.c.b16 %v5009, %v5008
      %v5041 = vpack.c.b16 %v5011, %v5010
      %v5042 = vpack.c.b16 %v5013, %v5012
      %v5043 = vpack.c.b16 %v5015, %v5014
      %v5044 = vpack.c.b16 %v5017, %v5016
      %v5045 = vpack.c.b16 %v5019, %v5018
      %v5046 = vpack.c.b16 %v5021, %v5020
      %v5047 = vpack.c.b16 %v5023, %v5022
      %v5048 = vpack.c.b16 %v5025, %v5024
      %v5049 = vpack.c.b16 %v5027, %v5026
      %v5050 = vpack.c.b16 %v5029, %v5028
      %v5051 = vpack.c.b16 %v5031, %v5030
      %v5052 = vpack.c.b16 %v5033, %v5032
      %v5053 = vpack.c.b16 %v5035, %v5034
      %v5054 = vpack.c.b16 %v5037, %v5036
      %v5055 = vpack.c.b16 %v5039, %v5038
      %5072 = vmatprep.subr.bf16.mxu0 0
      %5073 = vmatpush1.bf16.msra.mxu0 %v5040
      %5074 = vmatprep.subr.bf16.mxu0 0
      %5075 = vmatpush1.bf16.msra.mxu0 %v5041
      %5076 = vmatprep.subr.bf16.mxu0 0
      %5077 = vmatpush1.bf16.msra.mxu0 %v5042
      %5078 = vmatprep.subr.bf16.mxu0 0
      %5079 = vmatpush1.bf16.msra.mxu0 %v5043
      %5080 = vmatprep.subr.bf16.mxu0 0
      %5081 = vmatpush1.bf16.msra.mxu0 %v5044
      %5082 = vmatprep.subr.bf16.mxu0 0
      %5083 = vmatpush1.bf16.msra.mxu0 %v5045
      %5084 = vmatprep.subr.bf16.mxu0 0
      %5085 = vmatpush1.bf16.msra.mxu0 %v5046
      %5086 = vmatprep.subr.bf16.mxu0 0
      %5087 = vmatpush1.bf16.msra.mxu0 %v5047
      %5088 = vmatprep.subr.bf16.mxu0 0
      %5089 = vmatpush1.bf16.msra.mxu0 %v5048
      %5090 = vmatprep.subr.bf16.mxu0 0
      %5091 = vmatpush1.bf16.msra.mxu0 %v5049
      %5092 = vmatprep.subr.bf16.mxu0 0
      %5093 = vmatpush1.bf16.msra.mxu0 %v5050
      %5094 = vmatprep.subr.bf16.mxu0 0
      %5095 = vmatpush1.bf16.msra.mxu0 %v5051
      %5096 = vmatprep.subr.bf16.mxu0 0
      %5097 = vmatpush1.bf16.msra.mxu0 %v5052
      %5098 = vmatprep.subr.bf16.mxu0 0
      %5099 = vmatpush1.bf16.msra.mxu0 %v5053
      %5100 = vmatprep.subr.bf16.mxu0 0
      %5101 = vmatpush1.bf16.msra.mxu0 %v5054
      %5102 = vmatprep.subr.bf16.mxu0 0
      %5103 = vmatpush1.bf16.msra.mxu0 %v5055
      %5104 = vmatprep.mubr.bf16.mxu0 %v4969
      %5105 = vmatmul.mubr.bf16.gmra.mrb[0].mxu0 %v4968
      %v5106 = vpop.f32.mrb[0].mxu0
      %v5107 = vadd.f32 %v4975, %v5106
      %v5108 = vpop.f32.mrb[0].mxu0
      %v5109 = vpop.f32.mrb[0].mxu0
      %v5110 = vadd.f32 %v4975, %v5109
      %v5111 = vpop.f32.mrb[0].mxu0
      %5112 = vmatprep.mubr.bf16.mxu0 %v4971
      %5113 = vmatmul.mubr.bf16.gmra.mrb[0].mxu0 %v4970
      %v5114 = vpop.f32.mrb[0].mxu0
      %v5115 = vadd.f32 %v4975, %v5114
      %v5116 = vpop.f32.mrb[0].mxu0
      %v5117 = vpop.f32.mrb[0].mxu0
      %v5118 = vadd.f32 %v4975, %v5117
      %v5119 = vpop.f32.mrb[0].mxu0
      %5120 = vdwg.mxu0
      %v5121 = vmul.f32 %v5107, %v901
      %v5122 = vmul.f32 %v5110, %v903
      %v5123 = vmul.f32 %v5115, %v905
      %v5124 = vmul.f32 %v5118, %v907
      %v5125 = vadd.f32 %v5121, %v767
      %v5126 = vadd.f32 %v5122, %v771
      %v5127 = vadd.f32 %v5123, %v777
      %v5128 = vadd.f32 %v5124, %v781
      %v5129 = vld [vmem:[%s6] sm:$0xf]
      %v5130 = vld [vmem:[%s6 + $0x4] sm:$0xf]
      %v5131 = vld [vmem:[%s6 + $0x8] sm:$0xf]
      %v5132 = vld [vmem:[%s6 + $0xc] sm:$0xf]
      %v5133 = vld [vmem:[%s6 + $0x10] sm:$0xf]
      %v5134 = vld [vmem:[%s6 + $0x14] sm:$0xf]
      %v5135 = vld [vmem:[%s6 + $0x18] sm:$0xf]
      %v5136 = vld [vmem:[%s6 + $0x1c] sm:$0xf]
      %v5137 = vld [vmem:[%s6 + $0x20] sm:$0xf]
      %v5138 = vld [vmem:[%s6 + $0x24] sm:$0xf]
      %v5139 = vld [vmem:[%s6 + $0x28] sm:$0xf]
      %v5140 = vld [vmem:[%s6 + $0x2c] sm:$0xf]
      %v5141 = vld [vmem:[%s6 + $0x30] sm:$0xf]
      %v5142 = vld [vmem:[%s6 + $0x34] sm:$0xf]
      %v5143 = vld [vmem:[%s6 + $0x38] sm:$0xf]
      %v5144 = vld [vmem:[%s6 + $0x3c] sm:$0xf]
      %v5145 = vpack.c.bf16 %v5126, %v5125
      %v5146 = vpack.c.bf16 %v5128, %v5127
      %v5147 = vlaneseq
      %v5148 = vshrl.u32 %v5147, 7
      %v5149 = vsub.s32 3, %v5148
      %v5150 = vrot.slane %v475, %v5149
      %v5167 = vunpack.c.l.b16 %v5129
      %v5168 = vunpack.c.l.b16 %v5130
      %v5169 = vunpack.c.l.b16 %v5131
      %v5170 = vunpack.c.l.b16 %v5132
      %v5171 = vunpack.c.l.b16 %v5133
      %v5172 = vunpack.c.l.b16 %v5134
      %v5173 = vunpack.c.l.b16 %v5135
      %v5174 = vunpack.c.l.b16 %v5136
      %v5175 = vunpack.c.l.b16 %v5137
      %v5176 = vunpack.c.l.b16 %v5138
      %v5177 = vunpack.c.l.b16 %v5139
      %v5178 = vunpack.c.l.b16 %v5140
      %v5179 = vunpack.c.l.b16 %v5141
      %v5180 = vunpack.c.l.b16 %v5142
      %v5181 = vunpack.c.l.b16 %v5143
      %v5182 = vunpack.c.l.b16 %v5144
      %v5183 = vpack.c.b16 %v5168, %v5167
      %v5184 = vpack.c.b16 %v5170, %v5169
      %v5185 = vpack.c.b16 %v5172, %v5171
      %v5186 = vpack.c.b16 %v5174, %v5173
      %v5187 = vpack.c.b16 %v5176, %v5175
      %v5188 = vpack.c.b16 %v5178, %v5177
      %v5189 = vpack.c.b16 %v5180, %v5179
      %v5190 = vpack.c.b16 %v5182, %v5181
      %5199 = vmatprep.subr.bf16.mxu0 0
      %5200 = vmatpush1.bf16.msra.mxu0 %v5183
      %5201 = vmatprep.subr.bf16.mxu0 0
      %5202 = vmatpush1.bf16.msra.mxu0 %v5184
      %5203 = vmatprep.subr.bf16.mxu0 0
      %5204 = vmatpush1.bf16.msra.mxu0 %v5185
      %5205 = vmatprep.subr.bf16.mxu0 0
      %5206 = vmatpush1.bf16.msra.mxu0 %v5186
      %5207 = vmatprep.subr.bf16.mxu0 0
      %5208 = vmatpush1.bf16.msra.mxu0 %v5187
      %5209 = vmatprep.subr.bf16.mxu0 0
      %5210 = vmatpush1.bf16.msra.mxu0 %v5188
      %5211 = vmatprep.subr.bf16.mxu0 0
      %5212 = vmatpush1.bf16.msra.mxu0 %v5189
      %5213 = vmatprep.subr.bf16.mxu0 0
      %5214 = vmatpush1.bf16.msra.mxu0 %v5190
      %5215 = vmatprep.subr.bf16.mxu0 0
      %5216 = vmatpush1.bf16.msra.mxu0 0
      %5217 = vmatprep.subr.bf16.mxu0 0
      %5218 = vmatpush1.bf16.msra.mxu0 0
      %5219 = vmatprep.subr.bf16.mxu0 0
      %5220 = vmatpush1.bf16.msra.mxu0 0
      %5221 = vmatprep.subr.bf16.mxu0 0
      %5222 = vmatpush1.bf16.msra.mxu0 0
      %5223 = vmatprep.subr.bf16.mxu0 0
      %5224 = vmatpush1.bf16.msra.mxu0 0
      %5225 = vmatprep.subr.bf16.mxu0 0
      %5226 = vmatpush1.bf16.msra.mxu0 0
      %5227 = vmatprep.subr.bf16.mxu0 0
      %5228 = vmatpush1.bf16.msra.mxu0 0
      %5229 = vmatprep.subr.bf16.mxu0 0
      %5230 = vmatpush1.bf16.msra.mxu0 0
      %5231 = vmatprep.mubr.bf16.mxu0 0
      %5232 = vmatmul.mubr.bf16.gmra.mrb[0].mxu0 %v5145
      %v5233 = vpop.f32.mrb[0].mxu0
      %v5234 = vadd.f32 %v5150, %v5233
      %v5235 = vpop.f32.mrb[0].mxu0
      %v5236 = vpop.f32.mrb[0].mxu0
      %v5237 = vadd.f32 %v5150, %v5236
      %v5238 = vpop.f32.mrb[0].mxu0
      %5239 = vmatprep.mubr.bf16.mxu0 0
      %5240 = vmatmul.mubr.bf16.gmra.mrb[0].mxu0 %v5146
      %v5241 = vpop.f32.mrb[0].mxu0
      %v5242 = vadd.f32 %v5150, %v5241
      %v5243 = vpop.f32.mrb[0].mxu0
      %v5244 = vpop.f32.mrb[0].mxu0
      %v5245 = vadd.f32 %v5150, %v5244
      %v5246 = vpop.f32.mrb[0].mxu0
      %5247 = vdwg.mxu0
      %v5248 = vmul.f32 %v5234, %v925
      %v5249 = vmul.f32 %v5237, %v927
      %v5250 = vmul.f32 %v5242, %v929
      %v5251 = vmul.f32 %v5245, %v931
      %5256 = vrot.lane.b32.xlu0 %v818, 64
      %v5257 = vpop.permute.xlu0 %5256
      %5258 = vrot.lane.b32.xlu0 %v822, 64
      %v5259 = vpop.permute.xlu0 %5258
      %5260 = vrot.lane.b32.xlu0 %v828, 64
      %v5261 = vpop.permute.xlu0 %5260
      %5262 = vrot.lane.b32.xlu0 %v832, 64
      %v5263 = vpop.permute.xlu0 %5262
      %v5268 = vadd.f32 %v5248, %v5257
      %v5269 = vadd.f32 %v5249, %v5259
      %v5270 = vadd.f32 %v5250, %v5261
      %v5271 = vadd.f32 %v5251, %v5263
      %v5272 = vld [vmem:[%s7] sm:$0xf]
      %v5273 = vld [vmem:[%s7 + $0x4] sm:$0xf]
      %v5274 = vld [vmem:[%s7 + $0x8] sm:$0xf]
      %v5275 = vld [vmem:[%s7 + $0xc] sm:$0xf]
      %v5276 = vld [vmem:[%s7 + $0x10] sm:$0xf]
      %v5277 = vld [vmem:[%s7 + $0x14] sm:$0xf]
      %v5278 = vld [vmem:[%s7 + $0x18] sm:$0xf]
      %v5279 = vld [vmem:[%s7 + $0x1c] sm:$0xf]
      %v5280 = vpack.c.bf16 %v5269, %v5268
      %v5281 = vpack.c.bf16 %v5271, %v5270
      %v5282 = vlaneseq
      %v5283 = vshrl.u32 %v5282, 7
      %v5284 = vsub.s32 4, %v5283
      %v5285 = vrot.slane %v475, %v5284
      %v5294 = vunpack.c.l.b16 %v5272
      %v5295 = vunpack.c.l.b16 %v5273
      %v5296 = vunpack.c.l.b16 %v5274
      %v5297 = vunpack.c.l.b16 %v5275
      %v5298 = vunpack.c.l.b16 %v5276
      %v5299 = vunpack.c.l.b16 %v5277
      %v5300 = vunpack.c.l.b16 %v5278
      %v5301 = vunpack.c.l.b16 %v5279
      %v5302 = vpack.c.b16 %v5295, %v5294
      %v5303 = vpack.c.b16 %v5297, %v5296
      %v5304 = vpack.c.b16 %v5299, %v5298
      %v5305 = vpack.c.b16 %v5301, %v5300
      %v5311 = vsel %vm2908, %v5280, 0
      %v5314 = vsel %vm2908, %v5281, 0
      %5316 = vmatprep.subr.bf16.mxu0 0
      %5317 = vmatpush1.bf16.msra.mxu0 %v5302
      %5318 = vmatprep.subr.bf16.mxu0 0
      %5319 = vmatpush1.bf16.msra.mxu0 %v5303
      %5320 = vmatprep.subr.bf16.mxu0 0
      %5321 = vmatpush1.bf16.msra.mxu0 %v5304
      %5322 = vmatprep.subr.bf16.mxu0 0
      %5323 = vmatpush1.bf16.msra.mxu0 %v5305
      %5324 = vmatprep.subr.bf16.mxu0 0
      %5325 = vmatpush1.bf16.msra.mxu0 0
      %5326 = vmatprep.subr.bf16.mxu0 0
      %5327 = vmatpush1.bf16.msra.mxu0 0
      %5328 = vmatprep.subr.bf16.mxu0 0
      %5329 = vmatpush1.bf16.msra.mxu0 0
      %5330 = vmatprep.subr.bf16.mxu0 0
      %5331 = vmatpush1.bf16.msra.mxu0 0
      %5332 = vmatprep.subr.bf16.mxu0 0
      %5333 = vmatpush1.bf16.msra.mxu0 0
      %5334 = vmatprep.subr.bf16.mxu0 0
      %5335 = vmatpush1.bf16.msra.mxu0 0
      %5336 = vmatprep.subr.bf16.mxu0 0
      %5337 = vmatpush1.bf16.msra.mxu0 0
      %5338 = vmatprep.subr.bf16.mxu0 0
      %5339 = vmatpush1.bf16.msra.mxu0 0
      %5340 = vmatprep.subr.bf16.mxu0 0
      %5341 = vmatpush1.bf16.msra.mxu0 0
      %5342 = vmatprep.subr.bf16.mxu0 0
      %5343 = vmatpush1.bf16.msra.mxu0 0
      %5344 = vmatprep.subr.bf16.mxu0 0
      %5345 = vmatpush1.bf16.msra.mxu0 0
      %5346 = vmatprep.subr.bf16.mxu0 0
      %5347 = vmatpush1.bf16.msra.mxu0 0
      %5348 = vmatprep.mubr.bf16.mxu0 0
      %5349 = vmatmul.mubr.bf16.gmra.mrb[0].mxu0 %v5311
      %v5350 = vpop.f32.mrb[0].mxu0
      %v5351 = vadd.f32 %v5285, %v5350
      %v5352 = vpop.f32.mrb[0].mxu0
      %v5353 = vpop.f32.mrb[0].mxu0
      %v5354 = vadd.f32 %v5285, %v5353
      %v5355 = vpop.f32.mrb[0].mxu0
      %5356 = vmatprep.mubr.bf16.mxu0 0
      %5357 = vmatmul.mubr.bf16.gmra.mrb[0].mxu0 %v5314
      %v5358 = vpop.f32.mrb[0].mxu0
      %v5359 = vadd.f32 %v5285, %v5358
      %v5360 = vpop.f32.mrb[0].mxu0
      %v5361 = vpop.f32.mrb[0].mxu0
      %v5362 = vadd.f32 %v5285, %v5361
      %v5363 = vpop.f32.mrb[0].mxu0
      %5364 = vdwg.mxu0
      %v5365 = vmul.f32 %v5351, %v949
      %v5366 = vmul.f32 %v5354, %v951
      %v5367 = vmul.f32 %v5359, %v953
      %v5368 = vmul.f32 %v5362, %v955
      %5373 = vrot.lane.b32.xlu0 %v820, 112
      %v5374 = vpop.permute.xlu0 %5373
      %5375 = vrot.lane.b32.xlu0 %v824, 112
      %v5376 = vpop.permute.xlu0 %5375
      %5377 = vrot.lane.b32.xlu0 %v830, 112
      %v5378 = vpop.permute.xlu0 %5377
      %5379 = vrot.lane.b32.xlu0 %v834, 112
      %v5380 = vpop.permute.xlu0 %5379
      %v5385 = vadd.f32 %v5365, %v5374
      %v5386 = vadd.f32 %v5366, %v5376
      %v5387 = vadd.f32 %v5367, %v5378
      %v5388 = vadd.f32 %v5368, %v5380
      %5389 = vst.msk [vmem:[%s464] sm:$0xff] %vm978, %v5385
      %5390 = vst.msk [vmem:[%s464 + $0x8] sm:$0xff] %vm978, %v5386
      %5391 = vst.msk [vmem:[%s464 + $0x10] sm:$0xff] %vm978, %v5387
      %5392 = vst.msk [vmem:[%s464 + $0x18] sm:$0xff] %vm978, %v5388
      %s5393 = smul.u32 4, %s24
      %p5394 = scmp.lt.s32.totalorder %s5393, 15
      %s5395 = scalar_select %p5394, %s5393, 15
      %s5396 = smul.addr %s5395, 8
      %s5397 = scalar_lea.vmem %s13, %s5396
      // Predicated region
      $region73: #{model_forward.1} parent=71 // pred_check
        %p5398 = pneg %p325
      $region74: #{model_forward.1} parent=71 // pred_check_branch
        %5400 = sbr.rel (%p5398) target = $region76
      $region75: #{model_forward.1} parent=71 // pred_region
        %s5401 = smul.u32 4, %s24
      $region76: #{model_forward.1} parent=71 // pred_fallthru
        _
    $region72: #{model_forward.1} parent=5 // pred_fallthru
      _
    %p5402 = scmp.le.s32.totalorder 2, %s19
    // Predicated region
    $region77: #{model_forward.1} parent=5 // pred_check
      %p5403 = pneg %p5402
    $region78: #{model_forward.1} parent=5 // pred_check_branch
      %5405 = sbr.rel (%p5403) target = $region80
    $region79: #{model_forward.1} parent=5 // pred_region
      %s5406 = ssub.s32 %s19, 2
      // Predicated region
      $region81: #{model_forward.1} parent=79 // pred_check
        %p5407 = pneg %p331
      $region82: #{model_forward.1} parent=79 // pred_check_branch
        %5409 = sbr.rel (%p5407) target = $region84
      $region83: #{model_forward.1} parent=79 // pred_region
        %s5410 = smul.u32 4, %s25
        %p5411 = scmp.lt.s32.totalorder %s5410, 15
        %s5412 = scalar_select %p5411, %s5410, 15
        %s5413 = smul.addr %s5412, 8
        %s5414 = scalar_lea.vmem %s13, %s5413
      $region84: #{model_forward.1} parent=79 // pred_fallthru
        _
    $region80: #{model_forward.1} parent=5 // pred_fallthru
      _
  $region6: #{model_forward.1} parent=0 // loop_footer
    %s23 = sadd.s32 1, %s19
  $region7: #{model_forward.1} parent=0 // loop_footer_branch
    %18 = sbr.rel target = $region3
  $region8: #{model_forward.1} parent=0 // loop_exit
    _

</llo_original>
